<compile_context>
chip_gen: v5e
topology: v5e:2x2
jax: 0.10.0
libtpu: 0.0.40
codegen_flags: <defaults>
</compile_context>

<pallas_src>
import jax
import jax.numpy as jnp
from jax import lax
from jax.experimental import pallas as pl
from jax.experimental.pallas import tpu as pltpu
import numpy as np


LANE = 128        # output channels are zero-padded to this many lanes (dense, unmasked stores)
TM_MAX = 1024     # max rows per grid step (per-step VMEM stays < ~15 MiB for conv2)
M_ALIGN = 32      # patch-row padding -> tm = M/2 is a multiple of 16 (bf16 sublane tile)

_VMEM_LIMIT = None


# ----------------------------- Pallas kernels -----------------------------

def conv_relu_pool_kernel(x_ref, w_ref, b_ref, o_ref):
    # Fused conv-as-matmul + bias + ReLU + 2x2 max-pool.
    # x_ref: (4, tm, K) bf16 -- one im2col patch slab per pooling-window offset.
    # max(relu(x_p @ W + b)) == relu(max_p(x_p @ W) + b)  (ReLU monotone, shared bias).
    w = w_ref[...]
    m = jnp.maximum(
        jnp.maximum(jnp.dot(x_ref[0], w, preferred_element_type=jnp.float32),
                    jnp.dot(x_ref[1], w, preferred_element_type=jnp.float32)),
        jnp.maximum(jnp.dot(x_ref[2], w, preferred_element_type=jnp.float32),
                    jnp.dot(x_ref[3], w, preferred_element_type=jnp.float32)))
    o_ref[...] = jnp.maximum(m + b_ref[...], 0.0).astype(o_ref.dtype)


def matmul_bias_kernel(x_ref, w_ref, b_ref, o_ref):
    # Final Linear layer: (tm, K) @ (K, Co_pad) + bias, f32 accumulation and output.
    acc = jnp.dot(x_ref[...], w_ref[...], preferred_element_type=jnp.float32)
    o_ref[...] = (acc + b_ref[...]).astype(o_ref.dtype)


# ----------------------------- pallas_call wrappers -----------------------------

def _tile_rows(m):
    # >= 2 grid steps when rows allow it (v7x has 2 TensorCores; the extra step costs ~0.35us on
    # single-TC v5e/v6e), capped at TM_MAX so per-step VMEM stays bounded for large batches.
    if m < 64 or m % 32 != 0:
        return m
    return min(m // 2, TM_MAX)


def _compiler_params():
    # VMEM limit gated per generation: 128 MiB physical on v5e/v6e -> 64 MiB scoped limit,
    # 64 MiB physical on v7x -> 32 MiB.  Per-step footprint here is well under either.
    global _VMEM_LIMIT
    if _VMEM_LIMIT is None:
        try:
            cap = pltpu.get_tpu_info().vmem_capacity_bytes
        except Exception:
            cap = 64 * 1024 * 1024
        _VMEM_LIMIT = int(max(32 * 1024 * 1024, min(cap // 2, 64 * 1024 * 1024)))
    return pltpu.CompilerParams(
        dimension_semantics=("parallel",),
        vmem_limit_bytes=_VMEM_LIMIT,
    )


def conv_relu_pool(patches, w, bias):
    # patches: (4, Mp, K) bf16 stacked pool-offset im2col slabs
    # w:       (K, Co_pad) bf16, Co_pad multiple of 128 (zero-padded columns)
    # bias:    (1, Co_pad) f32
    # returns  (Mp, Co_pad) bf16
    _, Mp, K = patches.shape
    Cop = w.shape[1]
    tm = _tile_rows(Mp)
    grid = (pl.cdiv(Mp, tm),)

    cost = pl.CostEstimate(
        flops=2 * 4 * Mp * K * Cop,
        transcendentals=0,
        bytes_accessed=4 * Mp * K * 2 + K * Cop * 2 + Cop * 4 + Mp * Cop * 2,
    )
    return pl.pallas_call(
        conv_relu_pool_kernel,
        out_shape=jax.ShapeDtypeStruct((Mp, Cop), jnp.bfloat16),
        grid=grid,
        in_specs=[pl.BlockSpec((4, tm, K), lambda i: (0, i, 0)),
                  pl.BlockSpec((K, Cop), lambda i: (0, 0)),     # resident across grid
                  pl.BlockSpec((1, Cop), lambda i: (0, 0))],    # resident across grid
        out_specs=pl.BlockSpec((tm, Cop), lambda i: (i, 0)),    # lane-dense (Cop % 128 == 0)
        compiler_params=_compiler_params(),
        cost_estimate=cost,
    )(patches, w, bias)


def linear_matmul(x, w, bias):
    # x: (M, K) bf16; w: (K, Co_pad) bf16; bias: (1, Co_pad) f32 -> (M, Co_pad) f32
    M, K = x.shape
    Cop = w.shape[1]
    tm = _tile_rows(M)
    grid = (pl.cdiv(M, tm),)

    cost = pl.CostEstimate(
        flops=2 * M * K * Cop,
        transcendentals=0,
        bytes_accessed=M * K * 2 + K * Cop * 2 + Cop * 4 + M * Cop * 4,
    )
    return pl.pallas_call(
        matmul_bias_kernel,
        out_shape=jax.ShapeDtypeStruct((M, Cop), jnp.float32),
        grid=grid,
        in_specs=[pl.BlockSpec((tm, K), lambda i: (i, 0)),
                  pl.BlockSpec((K, Cop), lambda i: (0, 0)),
                  pl.BlockSpec((1, Cop), lambda i: (0, 0))],
        out_specs=pl.BlockSpec((tm, Cop), lambda i: (i, 0)),
        compiler_params=_compiler_params(),
        cost_estimate=cost,
    )(x, w, bias)


# ----------------------------- glue (plain JAX, data movement only) -----------------------------

def im2col_pooled_stacked(x, k=5, pad=2, k_pad=None, m_align=M_ALIGN):
    # x: (N, H, W, C), H and W even.  Returns (patches, m):
    #   patches: (4, M_pad, K_pad) bf16, leading dim = pooling offset (di*2 + dj),
    #            rows = pooled output positions (n, i2, j2), feature order (kh, kw, ci)
    #            [matches w.reshape(k*k*C, Co)],
    #   m:       number of valid rows (= N * H/2 * W/2) before padding.
    # Built hierarchically: kw-gather, kh-gather, one reshape/transpose for the pool-offset split
    # (~15 XLA data-movement ops per conv layer vs ~110 for a naive 4x25-slice im2col).
    N, H, W, C = x.shape
    Ho, Wo = H // 2, W // 2
    K = k * k * C
    xp = jnp.pad(x, ((0, 0), (pad, pad), (pad, pad), (0, 0)))
    # gather along kw -> feature order (kw, ci)
    xw = jnp.concatenate([xp[:, :, kw:kw + W, :] for kw in range(k)], axis=-1)
    # gather along kh -> feature order (kh, kw, ci)
    xhw = jnp.concatenate([xw[:, kh:kh + H, :, :] for kh in range(k)], axis=-1)
    # split the 2x2 pooling offsets out as a leading dim: (di, dj, n, i2, j2, K)
    p4 = xhw.reshape(N, Ho, 2, Wo, 2, K).transpose(2, 4, 0, 1, 3, 5)
    p4 = p4.reshape(4, N * Ho * Wo, K)

    m = N * Ho * Wo
    m_pad = ((m + m_align - 1) // m_align) * m_align
    kp = K if k_pad is None else k_pad
    if m_pad != m or kp != K:
        p4 = jnp.pad(p4, ((0, 0), (0, m_pad - m), (0, kp - K)))
    return p4, m


def _pad_cols(a, cop):
    return jnp.pad(a, ((0, 0), (0, cop - a.shape[1])))


def init_params(key):
    k1, k2, k3 = jax.random.split(key, 3)
    # Canonical f32 parameters (HWIO conv weights) -- used by the pure-JAX reference.
    w1 = jax.random.normal(k1, (5, 5, 1, 16), jnp.float32) * (1.0 / np.sqrt(5 * 5 * 1))
    b1 = jnp.full((1, 16), 0.01, jnp.float32)
    w2 = jax.random.normal(k2, (5, 5, 16, 32), jnp.float32) * (1.0 / np.sqrt(5 * 5 * 16))
    b2 = jnp.full((1, 32), 0.01, jnp.float32)
    w3 = jax.random.normal(k3, (32 * 7 * 7, 10), jnp.float32) * (1.0 / np.sqrt(32 * 7 * 7))
    b3 = jnp.full((1, 10), 0.01, jnp.float32)

    p = dict(w1=w1, b1=b1, w2=w2, b2=b2, w3=w3, b3=b3)

    # Kernel-ready forms (computed once):
    #  * matrix layout with (kh, kw, ci) row order matching the im2col feature order,
    #  * conv1 contraction rows zero-padded 25 -> 32,
    #  * output columns zero-padded to 128 lanes,
    #  * bf16 MXU inputs, f32 bias.
    w1m = jnp.pad(w1.reshape(25, 16), ((0, 32 - 25), (0, 0)))
    p["w1m"] = _pad_cols(w1m, LANE).astype(jnp.bfloat16)
    p["b1p"] = _pad_cols(b1, LANE)
    p["w2m"] = _pad_cols(w2.reshape(400, 32), LANE).astype(jnp.bfloat16)
    p["b2p"] = _pad_cols(b2, LANE)
    # Linear weight rows permuted from PyTorch's NCHW flatten order (c*49 + h*7 + w) to the NHWC
    # flatten order ((h*7 + w)*32 + c), so the Linear kernel input needs no runtime transpose.
    nchw_idx = np.arange(32 * 7 * 7).reshape(32, 7, 7).transpose(1, 2, 0).reshape(-1)
    p["w3m"] = _pad_cols(w3[nchw_idx, :], LANE).astype(jnp.bfloat16)
    p["b3p"] = _pad_cols(b3, LANE)
    return p


@jax.jit
def forward(x_nchw, p):
    N = x_nchw.shape[0]
    x = jnp.transpose(x_nchw, (0, 2, 3, 1)).astype(jnp.bfloat16)   # NCHW -> NHWC (C=1), bf16

    # conv1 (1->16, 5x5, pad 2) + ReLU + maxpool2  (single fused Pallas kernel)
    p1, m1 = im2col_pooled_stacked(x, 5, 2, k_pad=32)               # (4, 416, 32) @ batch=2
    y1 = conv_relu_pool(p1, p["w1m"], p["b1p"])                     # (416, 128) bf16
    x1 = y1[:m1, :16].reshape(N, 14, 14, 16)

    # conv2 (16->32, 5x5, pad 2) + ReLU + maxpool2
    p2, m2 = im2col_pooled_stacked(x1, 5, 2)                        # (4, 128, 400) @ batch=2
    y2 = conv_relu_pool(p2, p["w2m"], p["b2p"])                     # (128, 128) bf16
    x2 = y2[:m2, :32]                                               # (N*49, 32) NHWC rows

    # Linear consumes the NHWC flatten directly (w3 rows pre-permuted at init).
    feat_nhwc = x2.reshape(N, 49 * 32)
    out = linear_matmul(feat_nhwc, p["w3m"], p["b3p"])[:, :10]      # (N, 10) f32

    # The module returns x.view(N, -1) in NCHW order; build it from the tiny pooled tensor.
    feat = jnp.transpose(x2.reshape(N, 7, 7, 32), (0, 3, 1, 2)).reshape(N, 32 * 7 * 7)
    return out, feat.astype(jnp.float32)


def forward_reference(x_nchw, p):
    # Pure-JAX f32 reference for the correctness check.
    x = jnp.transpose(x_nchw, (0, 2, 3, 1))
    dn = ("NHWC", "HWIO", "NHWC")

    y = lax.conv_general_dilated(x, p["w1"], (1, 1), [(2, 2), (2, 2)],
                                 dimension_numbers=dn) + p["b1"]
    y = jnp.maximum(y, 0.0)
    y = lax.reduce_window(y, -jnp.inf, lax.max, (1, 2, 2, 1), (1, 2, 2, 1), "VALID")

    y = lax.conv_general_dilated(y, p["w2"], (1, 1), [(2, 2), (2, 2)],
                                 dimension_numbers=dn) + p["b2"]
    y = jnp.maximum(y, 0.0)
    y = lax.reduce_window(y, -jnp.inf, lax.max, (1, 2, 2, 1), (1, 2, 2, 1), "VALID")

    feat = jnp.transpose(y, (0, 3, 1, 2)).reshape(x.shape[0], 32 * 7 * 7)
    out = feat @ p["w3"] + p["b3"]
    return out, feat


if __name__ == "__main__":
    params = init_params(jax.random.PRNGKey(42))
    # MNIST/FashionMNIST-shaped input: batch=2, 1 channel, 28x28 (NCHW, like PyTorch)
    x = jax.random.normal(jax.random.PRNGKey(0), (2, 1, 28, 28), jnp.float32)

    out, feat = forward(x, params)
    out = jax.block_until_ready(out)
    feat = jax.block_until_ready(feat)

    ref_out, ref_feat = forward_reference(x, params)
    assert out.shape == (2, 10) and feat.shape == (2, 32 * 7 * 7)
    # Tolerance accounts for bf16 MXU inputs and bf16 conv-output storage (f32 accumulation
    # in-kernel) vs the pure-f32 reference.
    np.testing.assert_allclose(np.asarray(feat), np.asarray(ref_feat), rtol=4e-2, atol=4e-2)
    np.testing.assert_allclose(np.asarray(out), np.asarray(ref_out), rtol=4e-2, atol=4e-2)

    print("KERNEL_OK")
</pallas_src>

<mosaic_0001>
module attributes {stable_mosaic.version = 11 : i64} {
  func.func @conv_relu_pool_kernel(%arg0: i32, %arg1: memref<4x208x32xbf16, #tpu.memory_space<vmem>>, %arg2: memref<32x128xbf16, #tpu.memory_space<vmem>>, %arg3: memref<1x128xf32, #tpu.memory_space<vmem>>, %arg4: memref<208x128xbf16, #tpu.memory_space<vmem>>) attributes {dimension_semantics = [#tpu.dimension_semantics<parallel>], iteration_bounds = array<i64: 2>, scalar_prefetch = 0 : i64, scratch_operands = 0 : i64, tpu.core_type = #tpu.core_type<tc>, window_params = [{transform_indices = @transform_0, window_bounds = array<i64: 4, 208, 32>}, {pipeline_mode = #tpu.pipeline_mode<synchronous>, transform_indices = @transform_1, window_bounds = array<i64: 32, 128>}, {pipeline_mode = #tpu.pipeline_mode<synchronous>, transform_indices = @transform_2, window_bounds = array<i64: 1, 128>}, {transform_indices = @transform_3, window_bounds = array<i64: 208, 128>}]} {
    %c0 = arith.constant 0 : index
    %c0_0 = arith.constant 0 : index
    %0 = vector.load %arg2[%c0, %c0_0] : memref<32x128xbf16, #tpu.memory_space<vmem>>, vector<32x128xbf16>
    %c0_1 = arith.constant 0 : index
    %c0_2 = arith.constant 0 : index
    %c0_3 = arith.constant 0 : index
    %1 = vector.load %arg1[%c0_1, %c0_2, %c0_3] : memref<4x208x32xbf16, #tpu.memory_space<vmem>>, vector<1x208x32xbf16>
    %2 = vector.shape_cast %1 : vector<1x208x32xbf16> to vector<208x32xbf16>
    %cst = arith.constant dense<0.000000e+00> : vector<208x128xf32>
    %3 = tpu.matmul %2, %0, %cst {dimension_numbers = #tpu.dot_dimension_numbers<[1], [0], [0], [1], [0, 0, 1, 1], [], []>} : vector<208x32xbf16>, vector<32x128xbf16>, vector<208x128xf32> -> vector<208x128xf32>
    %c1 = arith.constant 1 : index
    %c0_4 = arith.constant 0 : index
    %c0_5 = arith.constant 0 : index
    %4 = vector.load %arg1[%c1, %c0_4, %c0_5] : memref<4x208x32xbf16, #tpu.memory_space<vmem>>, vector<1x208x32xbf16>
    %5 = vector.shape_cast %4 : vector<1x208x32xbf16> to vector<208x32xbf16>
    %cst_6 = arith.constant dense<0.000000e+00> : vector<208x128xf32>
    %6 = tpu.matmul %5, %0, %cst_6 {dimension_numbers = #tpu.dot_dimension_numbers<[1], [0], [0], [1], [0, 0, 1, 1], [], []>} : vector<208x32xbf16>, vector<32x128xbf16>, vector<208x128xf32> -> vector<208x128xf32>
    %7 = arith.maximumf %3, %6 : vector<208x128xf32>
    %c2 = arith.constant 2 : index
    %c0_7 = arith.constant 0 : index
    %c0_8 = arith.constant 0 : index
    %8 = vector.load %arg1[%c2, %c0_7, %c0_8] : memref<4x208x32xbf16, #tpu.memory_space<vmem>>, vector<1x208x32xbf16>
    %9 = vector.shape_cast %8 : vector<1x208x32xbf16> to vector<208x32xbf16>
    %cst_9 = arith.constant dense<0.000000e+00> : vector<208x128xf32>
    %10 = tpu.matmul %9, %0, %cst_9 {dimension_numbers = #tpu.dot_dimension_numbers<[1], [0], [0], [1], [0, 0, 1, 1], [], []>} : vector<208x32xbf16>, vector<32x128xbf16>, vector<208x128xf32> -> vector<208x128xf32>
    %c3 = arith.constant 3 : index
    %c0_10 = arith.constant 0 : index
    %c0_11 = arith.constant 0 : index
    %11 = vector.load %arg1[%c3, %c0_10, %c0_11] : memref<4x208x32xbf16, #tpu.memory_space<vmem>>, vector<1x208x32xbf16>
    %12 = vector.shape_cast %11 : vector<1x208x32xbf16> to vector<208x32xbf16>
    %cst_12 = arith.constant dense<0.000000e+00> : vector<208x128xf32>
    %13 = tpu.matmul %12, %0, %cst_12 {dimension_numbers = #tpu.dot_dimension_numbers<[1], [0], [0], [1], [0, 0, 1, 1], [], []>} : vector<208x32xbf16>, vector<32x128xbf16>, vector<208x128xf32> -> vector<208x128xf32>
    %14 = arith.maximumf %10, %13 : vector<208x128xf32>
    %15 = arith.maximumf %7, %14 : vector<208x128xf32>
    %c0_13 = arith.constant 0 : index
    %c0_14 = arith.constant 0 : index
    %16 = vector.load %arg3[%c0_13, %c0_14] : memref<1x128xf32, #tpu.memory_space<vmem>>, vector<1x128xf32>
    %17 = vector.broadcast %16 : vector<1x128xf32> to vector<208x128xf32>
    %18 = arith.addf %15, %17 : vector<208x128xf32>
    %cst_15 = arith.constant 0.000000e+00 : f32
    %19 = vector.broadcast %cst_15 : f32 to vector<208x128xf32>
    %20 = arith.maximumf %18, %19 : vector<208x128xf32>
    %21 = arith.truncf %20 : vector<208x128xf32> to vector<208x128xbf16>
    %c0_16 = arith.constant 0 : index
    %c0_17 = arith.constant 0 : index
    %22 = vector.load %arg4[%c0_16, %c0_17] : memref<208x128xbf16, #tpu.memory_space<vmem>>, vector<208x128xbf16>
    tpu.vector_store %arg4[%c0_16, %c0_17], %21 {strides = array<i32>} : memref<208x128xbf16, #tpu.memory_space<vmem>>, vector<208x128xbf16>,
    return
  }
  func.func @transform_0(%arg0: i32) -> (i32, i32, i32) {
    %c0_i32 = arith.constant 0 : i32
    %c0_i32_0 = arith.constant 0 : i32
    %c0_i32_1 = arith.constant 0 : i32
    return %c0_i32, %arg0, %c0_i32_0 : i32, i32, i32
  }
  func.func @transform_1(%arg0: i32) -> (i32, i32) {
    %c0_i32 = arith.constant 0 : i32
    %c0_i32_0 = arith.constant 0 : i32
    %c0_i32_1 = arith.constant 0 : i32
    return %c0_i32, %c0_i32_0 : i32, i32
  }
  func.func @transform_2(%arg0: i32) -> (i32, i32) {
    %c0_i32 = arith.constant 0 : i32
    %c0_i32_0 = arith.constant 0 : i32
    %c0_i32_1 = arith.constant 0 : i32
    return %c0_i32, %c0_i32_0 : i32, i32
  }
  func.func @transform_3(%arg0: i32) -> (i32, i32) {
    %c0_i32 = arith.constant 0 : i32
    %c0_i32_0 = arith.constant 0 : i32
    return %arg0, %c0_i32 : i32, i32
  }
}

module attributes {stable_mosaic.version = 11 : i64} {
  func.func @conv_relu_pool_kernel(%arg0: i32, %arg1: memref<4x64x400xbf16, #tpu.memory_space<vmem>>, %arg2: memref<400x128xbf16, #tpu.memory_space<vmem>>, %arg3: memref<1x128xf32, #tpu.memory_space<vmem>>, %arg4: memref<64x128xbf16, #tpu.memory_space<vmem>>) attributes {dimension_semantics = [#tpu.dimension_semantics<parallel>], iteration_bounds = array<i64: 2>, scalar_prefetch = 0 : i64, scratch_operands = 0 : i64, tpu.core_type = #tpu.core_type<tc>, window_params = [{transform_indices = @transform_0, window_bounds = array<i64: 4, 64, 400>}, {pipeline_mode = #tpu.pipeline_mode<synchronous>, transform_indices = @transform_1, window_bounds = array<i64: 400, 128>}, {pipeline_mode = #tpu.pipeline_mode<synchronous>, transform_indices = @transform_2, window_bounds = array<i64: 1, 128>}, {transform_indices = @transform_3, window_bounds = array<i64: 64, 128>}]} {
    %c0 = arith.constant 0 : index
    %c0_0 = arith.constant 0 : index
    %0 = vector.load %arg2[%c0, %c0_0] : memref<400x128xbf16, #tpu.memory_space<vmem>>, vector<400x128xbf16>
    %c0_1 = arith.constant 0 : index
    %c0_2 = arith.constant 0 : index
    %c0_3 = arith.constant 0 : index
    %1 = vector.load %arg1[%c0_1, %c0_2, %c0_3] : memref<4x64x400xbf16, #tpu.memory_space<vmem>>, vector<1x64x400xbf16>
    %2 = vector.shape_cast %1 : vector<1x64x400xbf16> to vector<64x400xbf16>
    %cst = arith.constant dense<0.000000e+00> : vector<64x128xf32>
    %3 = tpu.matmul %2, %0, %cst {dimension_numbers = #tpu.dot_dimension_numbers<[1], [0], [0], [1], [0, 0, 1, 1], [], []>} : vector<64x400xbf16>, vector<400x128xbf16>, vector<64x128xf32> -> vector<64x128xf32>
    %c1 = arith.constant 1 : index
    %c0_4 = arith.constant 0 : index
    %c0_5 = arith.constant 0 : index
    %4 = vector.load %arg1[%c1, %c0_4, %c0_5] : memref<4x64x400xbf16, #tpu.memory_space<vmem>>, vector<1x64x400xbf16>
    %5 = vector.shape_cast %4 : vector<1x64x400xbf16> to vector<64x400xbf16>
    %cst_6 = arith.constant dense<0.000000e+00> : vector<64x128xf32>
    %6 = tpu.matmul %5, %0, %cst_6 {dimension_numbers = #tpu.dot_dimension_numbers<[1], [0], [0], [1], [0, 0, 1, 1], [], []>} : vector<64x400xbf16>, vector<400x128xbf16>, vector<64x128xf32> -> vector<64x128xf32>
    %7 = arith.maximumf %3, %6 : vector<64x128xf32>
    %c2 = arith.constant 2 : index
    %c0_7 = arith.constant 0 : index
    %c0_8 = arith.constant 0 : index
    %8 = vector.load %arg1[%c2, %c0_7, %c0_8] : memref<4x64x400xbf16, #tpu.memory_space<vmem>>, vector<1x64x400xbf16>
    %9 = vector.shape_cast %8 : vector<1x64x400xbf16> to vector<64x400xbf16>
    %cst_9 = arith.constant dense<0.000000e+00> : vector<64x128xf32>
    %10 = tpu.matmul %9, %0, %cst_9 {dimension_numbers = #tpu.dot_dimension_numbers<[1], [0], [0], [1], [0, 0, 1, 1], [], []>} : vector<64x400xbf16>, vector<400x128xbf16>, vector<64x128xf32> -> vector<64x128xf32>
    %c3 = arith.constant 3 : index
    %c0_10 = arith.constant 0 : index
    %c0_11 = arith.constant 0 : index
    %11 = vector.load %arg1[%c3, %c0_10, %c0_11] : memref<4x64x400xbf16, #tpu.memory_space<vmem>>, vector<1x64x400xbf16>
    %12 = vector.shape_cast %11 : vector<1x64x400xbf16> to vector<64x400xbf16>
    %cst_12 = arith.constant dense<0.000000e+00> : vector<64x128xf32>
    %13 = tpu.matmul %12, %0, %cst_12 {dimension_numbers = #tpu.dot_dimension_numbers<[1], [0], [0], [1], [0, 0, 1, 1], [], []>} : vector<64x400xbf16>, vector<400x128xbf16>, vector<64x128xf32> -> vector<64x128xf32>
    %14 = arith.maximumf %10, %13 : vector<64x128xf32>
    %15 = arith.maximumf %7, %14 : vector<64x128xf32>
    %c0_13 = arith.constant 0 : index
    %c0_14 = arith.constant 0 : index
    %16 = vector.load %arg3[%c0_13, %c0_14] : memref<1x128xf32, #tpu.memory_space<vmem>>, vector<1x128xf32>
    %17 = vector.broadcast %16 : vector<1x128xf32> to vector<64x128xf32>
    %18 = arith.addf %15, %17 : vector<64x128xf32>
    %cst_15 = arith.constant 0.000000e+00 : f32
    %19 = vector.broadcast %cst_15 : f32 to vector<64x128xf32>
    %20 = arith.maximumf %18, %19 : vector<64x128xf32>
    %21 = arith.truncf %20 : vector<64x128xf32> to vector<64x128xbf16>
    %c0_16 = arith.constant 0 : index
    %c0_17 = arith.constant 0 : index
    %22 = vector.load %arg4[%c0_16, %c0_17] : memref<64x128xbf16, #tpu.memory_space<vmem>>, vector<64x128xbf16>
    tpu.vector_store %arg4[%c0_16, %c0_17], %21 {strides = array<i32>} : memref<64x128xbf16, #tpu.memory_space<vmem>>, vector<64x128xbf16>,
    return
  }
  func.func @transform_0(%arg0: i32) -> (i32, i32, i32) {
    %c0_i32 = arith.constant 0 : i32
    %c0_i32_0 = arith.constant 0 : i32
    %c0_i32_1 = arith.constant 0 : i32
    return %c0_i32, %arg0, %c0_i32_0 : i32, i32, i32
  }
  func.func @transform_1(%arg0: i32) -> (i32, i32) {
    %c0_i32 = arith.constant 0 : i32
    %c0_i32_0 = arith.constant 0 : i32
    %c0_i32_1 = arith.constant 0 : i32
    return %c0_i32, %c0_i32_0 : i32, i32
  }
  func.func @transform_2(%arg0: i32) -> (i32, i32) {
    %c0_i32 = arith.constant 0 : i32
    %c0_i32_0 = arith.constant 0 : i32
    %c0_i32_1 = arith.constant 0 : i32
    return %c0_i32, %c0_i32_0 : i32, i32
  }
  func.func @transform_3(%arg0: i32) -> (i32, i32) {
    %c0_i32 = arith.constant 0 : i32
    %c0_i32_0 = arith.constant 0 : i32
    return %arg0, %c0_i32 : i32, i32
  }
}

module attributes {stable_mosaic.version = 11 : i64} {
  func.func @matmul_bias_kernel(%arg0: i32, %arg1: memref<2x1568xbf16, #tpu.memory_space<vmem>>, %arg2: memref<1568x128xbf16, #tpu.memory_space<vmem>>, %arg3: memref<1x128xf32, #tpu.memory_space<vmem>>, %arg4: memref<2x128xf32, #tpu.memory_space<vmem>>) attributes {dimension_semantics = [#tpu.dimension_semantics<parallel>], iteration_bounds = array<i64: 1>, scalar_prefetch = 0 : i64, scratch_operands = 0 : i64, tpu.core_type = #tpu.core_type<tc>, window_params = [{transform_indices = @transform_0, window_bounds = array<i64: 2, 1568>}, {pipeline_mode = #tpu.pipeline_mode<synchronous>, transform_indices = @transform_1, window_bounds = array<i64: 1568, 128>}, {pipeline_mode = #tpu.pipeline_mode<synchronous>, transform_indices = @transform_2, window_bounds = array<i64: 1, 128>}, {transform_indices = @transform_3, window_bounds = array<i64: 2, 128>}]} {
    %c0 = arith.constant 0 : index
    %c0_0 = arith.constant 0 : index
    %0 = vector.load %arg1[%c0, %c0_0] : memref<2x1568xbf16, #tpu.memory_space<vmem>>, vector<2x1568xbf16>
    %c0_1 = arith.constant 0 : index
    %c0_2 = arith.constant 0 : index
    %1 = vector.load %arg2[%c0_1, %c0_2] : memref<1568x128xbf16, #tpu.memory_space<vmem>>, vector<1568x128xbf16>
    %cst = arith.constant dense<0.000000e+00> : vector<2x128xf32>
    %2 = tpu.matmul %0, %1, %cst {dimension_numbers = #tpu.dot_dimension_numbers<[1], [0], [0], [1], [0, 0, 1, 1], [], []>} : vector<2x1568xbf16>, vector<1568x128xbf16>, vector<2x128xf32> -> vector<2x128xf32>
    %c0_3 = arith.constant 0 : index
    %c0_4 = arith.constant 0 : index
    %3 = vector.load %arg3[%c0_3, %c0_4] : memref<1x128xf32, #tpu.memory_space<vmem>>, vector<1x128xf32>
    %4 = vector.broadcast %3 : vector<1x128xf32> to vector<2x128xf32>
    %5 = arith.addf %2, %4 : vector<2x128xf32>
    %c0_5 = arith.constant 0 : index
    %c0_6 = arith.constant 0 : index
    %6 = vector.load %arg4[%c0_5, %c0_6] : memref<2x128xf32, #tpu.memory_space<vmem>>, vector<2x128xf32>
    tpu.vector_store %arg4[%c0_5, %c0_6], %5 {strides = array<i32>} : memref<2x128xf32, #tpu.memory_space<vmem>>, vector<2x128xf32>,
    return
  }
  func.func @transform_0(%arg0: i32) -> (i32, i32) {
    %c0_i32 = arith.constant 0 : i32
    %c0_i32_0 = arith.constant 0 : i32
    return %arg0, %c0_i32 : i32, i32
  }
  func.func @transform_1(%arg0: i32) -> (i32, i32) {
    %c0_i32 = arith.constant 0 : i32
    %c0_i32_0 = arith.constant 0 : i32
    %c0_i32_1 = arith.constant 0 : i32
    return %c0_i32, %c0_i32_0 : i32, i32
  }
  func.func @transform_2(%arg0: i32) -> (i32, i32) {
    %c0_i32 = arith.constant 0 : i32
    %c0_i32_0 = arith.constant 0 : i32
    %c0_i32_1 = arith.constant 0 : i32
    return %c0_i32, %c0_i32_0 : i32, i32
  }
  func.func @transform_3(%arg0: i32) -> (i32, i32) {
    %c0_i32 = arith.constant 0 : i32
    %c0_i32_0 = arith.constant 0 : i32
    return %arg0, %c0_i32 : i32, i32
  }
}

</mosaic_0001>

<llo_original>
// kernel: forward.3
$region0: #{forward.3}
  #allocation0 [shape = 'u32[]', space=smem, size = 0x4, offset = 0x4, fixed_abs, tag = 'smem constant byte address 0x4 - core index']
  #allocation1 [shape = 'u32[72,128]{1,0:T(1,128)}', space=vmem, size = 0x9000, scoped, tag = 'internal scratch']
  %s0 = inlined_call_operand.vmem [shape: bf16[4,416,32], index: 0, kind: input, shape index: {}]
  %s1 = inlined_call_operand.vmem [shape: bf16[32,128], index: 1, kind: input, shape index: {}]
  %s2 = inlined_call_operand.vmem [shape: f32[1,128], index: 2, kind: input, shape index: {}]
  %s3 = inlined_call_operand.vmem [shape: bf16[416,128], index: 3, kind: output, shape index: {}]
  %s4 = sld [smem:[#allocation0]]
  $region86: #{forward.3} parent=0
    _
  %s6 = ssub.s32 1, %s4
  %s7 = scalar_select 0, %s6, %s4
  $region1: #{forward.3} parent=0
    #allocation2 [shape = 'u8[425984]{0}', space=vmem, size = 0x68000, scoped, tag = 'input window, operand 0']
    loop: start=0, step=1, limit=4
    $region2: #{forward.3} parent=1 // loop_pre_header
      _
    $region3: #{forward.3} parent=1 // loop_header
      %s9 = sphi 0, %s13
      %p10 = scmp.ge.s32.totalorder %s9, 4
      %s19 = sphi 0, %s21
      %s22 = sphi 0, %s19
      %s23 = sphi 0, %s22
      %s39 = sphi 0, %s23
      %s43 = sphi 0, %s43
      %s45 = sphi 0, %s43
      %s46 = sphi 0, %s45
      %s60 = sphi 0, %s46
      %s64 = sphi 0, %s64
      %s66 = sphi 0, %s64
      %s67 = sphi 0, %s66
      %s81 = sphi 0, %s67
      %s87 = sphi 0, %s89
      %s90 = sphi 0, %s87
      %s91 = sphi 0, %s90
      %s107 = sphi 0, %s91
    $region4: #{forward.3} parent=1 // loop_header_branch
      %12 = sbr.rel (%p10) target = $region8
    $region5: #{forward.3} parent=1 // loop_body
      %s14 = ssub.s32 %s9, 1
      %s15 = ssub.s32 %s9, 2
      %s16 = sadd.s32 %s9, 1
      %s17 = ssub.s32 %s9, %s16
      %p18 = scmp.eq.s32.totalorder %s17, 0
      %s20 = sadd.s32 %s19, 1
      %s21 = scalar_select %p18, %s19, %s20
      %p24 = pneg %p18
      %p25 = scmp.eq.s32.totalorder %s9, 1
      %p26 = por %p24, %p25
      %p27 = scmp.ne.s32.totalorder %s19, %s22
      %p28 = scmp.eq.s32.totalorder %s9, 0
      %p29 = por %p27, %p28
      %p30 = scmp.ne.s32.totalorder %s19, %s22
      %p31 = scmp.eq.s32.totalorder %s14, 1
      %p32 = por %p30, %p31
      %p33 = scmp.ne.s32.totalorder %s22, %s23
      %p34 = scmp.eq.s32.totalorder %s14, 0
      %p35 = por %p33, %p34
      %p36 = scmp.ne.s32.totalorder %s22, %s23
      %p37 = scmp.eq.s32.totalorder %s15, 1
      %p38 = por %p36, %p37
      %p40 = scmp.ne.s32.totalorder %s23, %s39
      %p41 = scmp.eq.s32.totalorder %s15, 0
      %p42 = por %p40, %p41
      %s44 = sadd.s32 %s43, 1
      %p47 = scmp.eq.s32.totalorder %s9, 1
      %p48 = scmp.ne.s32.totalorder %s43, %s45
      %p49 = scmp.eq.s32.totalorder %s9, 0
      %p50 = por %p48, %p49
      %p51 = scmp.ne.s32.totalorder %s43, %s45
      %p52 = scmp.eq.s32.totalorder %s14, 1
      %p53 = por %p51, %p52
      %p54 = scmp.ne.s32.totalorder %s45, %s46
      %p55 = scmp.eq.s32.totalorder %s14, 0
      %p56 = por %p54, %p55
      %p57 = scmp.ne.s32.totalorder %s45, %s46
      %p58 = scmp.eq.s32.totalorder %s15, 1
      %p59 = por %p57, %p58
      %p61 = scmp.ne.s32.totalorder %s46, %s60
      %p62 = scmp.eq.s32.totalorder %s15, 0
      %p63 = por %p61, %p62
      %s65 = sadd.s32 %s64, 1
      %p68 = scmp.eq.s32.totalorder %s9, 1
      %p69 = scmp.ne.s32.totalorder %s64, %s66
      %p70 = scmp.eq.s32.totalorder %s9, 0
      %p71 = por %p69, %p70
      %p72 = scmp.ne.s32.totalorder %s64, %s66
      %p73 = scmp.eq.s32.totalorder %s14, 1
      %p74 = por %p72, %p73
      %p75 = scmp.ne.s32.totalorder %s66, %s67
      %p76 = scmp.eq.s32.totalorder %s14, 0
      %p77 = por %p75, %p76
      %p78 = scmp.ne.s32.totalorder %s66, %s67
      %p79 = scmp.eq.s32.totalorder %s15, 1
      %p80 = por %p78, %p79
      %p82 = scmp.ne.s32.totalorder %s67, %s81
      %p83 = scmp.eq.s32.totalorder %s15, 0
      %p84 = por %p82, %p83
      %s85 = ssub.s32 %s9, %s16
      %p86 = scmp.eq.s32.totalorder %s85, 0
      %s88 = sadd.s32 %s87, 1
      %s89 = scalar_select %p86, %s87, %s88
      %p92 = pneg %p86
      %p93 = scmp.eq.s32.totalorder %s9, 1
      %p94 = por %p92, %p93
      %p95 = scmp.ne.s32.totalorder %s87, %s90
      %p96 = scmp.eq.s32.totalorder %s9, 0
      %p97 = por %p95, %p96
      %p98 = scmp.ne.s32.totalorder %s87, %s90
      %p99 = scmp.eq.s32.totalorder %s14, 1
      %p100 = por %p98, %p99
      %p101 = scmp.ne.s32.totalorder %s90, %s91
      %p102 = scmp.eq.s32.totalorder %s14, 0
      %p103 = por %p101, %p102
      %p104 = scmp.ne.s32.totalorder %s90, %s91
      %p105 = scmp.eq.s32.totalorder %s15, 1
      %p106 = por %p104, %p105
      %p108 = scmp.ne.s32.totalorder %s91, %s107
      %p109 = scmp.eq.s32.totalorder %s15, 0
      %p110 = por %p108, %p109
      %p111 = scmp.le.s32.totalorder 1, %s9
      %p112 = scmp.lt.s32.totalorder %s9, 3
      %p113 = pnand %p111, %p112
      %p114 = pneg %p113
      // Predicated region
      $region9: #{forward.3} parent=5 // pred_check
        _
      $region10: #{forward.3} parent=5 // pred_check_branch
        %116 = sbr.rel (%p113) target = $region12
      $region11: #{forward.3} parent=5 // pred_region
        %s117 = ssub.s32 %s9, 1
        // Predicated region
        $region13: #{forward.3} parent=11 // pred_check
          %p118 = pneg %p56
        $region14: #{forward.3} parent=11 // pred_check_branch
          %120 = sbr.rel (%p118) target = $region16
        $region15: #{forward.3} parent=11 // pred_region
          _
        $region16: #{forward.3} parent=11 // pred_fallthru
          _
        // Predicated region
        $region17: #{forward.3} parent=11 // pred_check
          %p121 = pneg %p77
        $region18: #{forward.3} parent=11 // pred_check_branch
          %123 = sbr.rel (%p121) target = $region20
        $region19: #{forward.3} parent=11 // pred_region
          _
        $region20: #{forward.3} parent=11 // pred_fallthru
          _
      $region12: #{forward.3} parent=5 // pred_fallthru
        _
      %p124 = scmp.lt.s32.totalorder %s9, 2
      // Predicated region
      $region21: #{forward.3} parent=5 // pred_check
        %p125 = pneg %p124
      $region22: #{forward.3} parent=5 // pred_check_branch
        %127 = sbr.rel (%p125) target = $region24
      $region23: #{forward.3} parent=5 // pred_region
        // Predicated region
        $region25: #{forward.3} parent=23 // pred_check
          %p128 = pneg %p29
        $region26: #{forward.3} parent=23 // pred_check_branch
          %130 = sbr.rel (%p128) target = $region28
        $region27: #{forward.3} parent=23 // pred_region
          %s131 = sand.u32 %s19, 1
          %s132 = sand.u32 %s19, 1
          %s133 = smul.addr %s132, 416
          %s134 = scalar_lea.vmem [#allocation2], %s133
          %s135 = smul.u32 26, %s9
          %s136 = smul.addr %s135, 4
          %s137 = scalar_lea.vmem %s0, %s136
          // Predicated region
          $region29: #{forward.3} parent=27 // pred_check
            _
          $region30: #{forward.3} parent=27 // pred_check_branch
            %139 = sbr.rel (0) target = $region32
          $region31: #{forward.3} parent=27 // pred_region
            // Predicated region
            $region33: #{forward.3} parent=31 // pred_check
              _
            $region34: #{forward.3} parent=31 // pred_check_branch
              %141 = sbr.rel target = $region36
            $region35: #{forward.3} parent=31 // pred_region
              // Predicated region
              $region48: #{forward.3} parent=35 // pred_check
                _
              $region49: #{forward.3} parent=35 // pred_check_branch
                %363 = sbr.rel (0) target = $region51
              $region50: #{forward.3} parent=35 // pred_region
                loop: start=0, step=1, limit=1
                $region52: #{forward.3} parent=50 // loop_pre_header
                  _
                $region53: #{forward.3} parent=50 // loop_header
                  %s365 = sphi 0, %s369
                  %p366 = scmp.ge.s32.totalorder %s365, 1
                  %s370 = sphi %s137, %s137
                  %s371 = sphi %s134, %s134
                $region54: #{forward.3} parent=50 // loop_header_branch
                  %368 = sbr.rel (%p366) target = $region58
                $region55: #{forward.3} parent=50 // loop_body
                  _
                $region56: #{forward.3} parent=50 // loop_footer
                  %s369 = sadd.s32 1, %s365
                $region57: #{forward.3} parent=50 // loop_footer_branch
                  %364 = sbr.rel target = $region53
                $region58: #{forward.3} parent=50 // loop_exit
                  _
                %s373 = ssub.s32 16, 1
                loop: start=0, step=1, limit=1
                $region59: #{forward.3} parent=50 // loop_pre_header
                  _
                $region60: #{forward.3} parent=50 // loop_header
                  %s375 = sphi 0, %s379
                  %p376 = scmp.ge.s32.totalorder %s375, 1
                  %s380 = sphi %s137, %s137
                  %s381 = sphi %s134, %s134
                $region61: #{forward.3} parent=50 // loop_header_branch
                  %378 = sbr.rel (%p376) target = $region65
                $region62: #{forward.3} parent=50 // loop_body
                  %v382 = vld [vmem:[%s380] sm:%s373]
                  %383 = vst [vmem:[%s381] sm:%s373] %v382
                  %v384 = vld [vmem:[%s380 + $0x4] sm:%s373]
                  %385 = vst [vmem:[%s381 + $0x4] sm:%s373] %v384
                  %v386 = vld [vmem:[%s380 + $0x8] sm:%s373]
                  %387 = vst [vmem:[%s381 + $0x8] sm:%s373] %v386
                  %v388 = vld [vmem:[%s380 + $0xc] sm:%s373]
                  %389 = vst [vmem:[%s381 + $0xc] sm:%s373] %v388
                  %v390 = vld [vmem:[%s380 + $0x10] sm:%s373]
                  %391 = vst [vmem:[%s381 + $0x10] sm:%s373] %v390
                  %v392 = vld [vmem:[%s380 + $0x14] sm:%s373]
                  %393 = vst [vmem:[%s381 + $0x14] sm:%s373] %v392
                  %v394 = vld [vmem:[%s380 + $0x18] sm:%s373]
                  %395 = vst [vmem:[%s381 + $0x18] sm:%s373] %v394
                  %v396 = vld [vmem:[%s380 + $0x1c] sm:%s373]
                  %397 = vst [vmem:[%s381 + $0x1c] sm:%s373] %v396
                  %v398 = vld [vmem:[%s380 + $0x20] sm:%s373]
                  %399 = vst [vmem:[%s381 + $0x20] sm:%s373] %v398
                  %v400 = vld [vmem:[%s380 + $0x24] sm:%s373]
                  %401 = vst [vmem:[%s381 + $0x24] sm:%s373] %v400
                  %v402 = vld [vmem:[%s380 + $0x28] sm:%s373]
                  %403 = vst [vmem:[%s381 + $0x28] sm:%s373] %v402
                  %v404 = vld [vmem:[%s380 + $0x2c] sm:%s373]
                  %405 = vst [vmem:[%s381 + $0x2c] sm:%s373] %v404
                  %v406 = vld [vmem:[%s380 + $0x30] sm:%s373]
                  %407 = vst [vmem:[%s381 + $0x30] sm:%s373] %v406
                  %v408 = vld [vmem:[%s380 + $0x34] sm:%s373]
                  %409 = vst [vmem:[%s381 + $0x34] sm:%s373] %v408
                  %v410 = vld [vmem:[%s380 + $0x38] sm:%s373]
                  %411 = vst [vmem:[%s381 + $0x38] sm:%s373] %v410
                  %v412 = vld [vmem:[%s380 + $0x3c] sm:%s373]
                  %413 = vst [vmem:[%s381 + $0x3c] sm:%s373] %v412
                  %v414 = vld [vmem:[%s380 + $0x40] sm:%s373]
                  %415 = vst [vmem:[%s381 + $0x40] sm:%s373] %v414
                  %v416 = vld [vmem:[%s380 + $0x44] sm:%s373]
                  %417 = vst [vmem:[%s381 + $0x44] sm:%s373] %v416
                  %v418 = vld [vmem:[%s380 + $0x48] sm:%s373]
                  %419 = vst [vmem:[%s381 + $0x48] sm:%s373] %v418
                  %v420 = vld [vmem:[%s380 + $0x4c] sm:%s373]
                  %421 = vst [vmem:[%s381 + $0x4c] sm:%s373] %v420
                  %v422 = vld [vmem:[%s380 + $0x50] sm:%s373]
                  %423 = vst [vmem:[%s381 + $0x50] sm:%s373] %v422
                  %v424 = vld [vmem:[%s380 + $0x54] sm:%s373]
                  %425 = vst [vmem:[%s381 + $0x54] sm:%s373] %v424
                  %v426 = vld [vmem:[%s380 + $0x58] sm:%s373]
                  %427 = vst [vmem:[%s381 + $0x58] sm:%s373] %v426
                  %v428 = vld [vmem:[%s380 + $0x5c] sm:%s373]
                  %429 = vst [vmem:[%s381 + $0x5c] sm:%s373] %v428
                  %v430 = vld [vmem:[%s380 + $0x60] sm:%s373]
                  %431 = vst [vmem:[%s381 + $0x60] sm:%s373] %v430
                  %v432 = vld [vmem:[%s380 + $0x64] sm:%s373]
                  %433 = vst [vmem:[%s381 + $0x64] sm:%s373] %v432
                  %v434 = vld [vmem:[%s380 + $0xd0] sm:%s373]
                  %435 = vst [vmem:[%s381 + $0x68] sm:%s373] %v434
                  %v436 = vld [vmem:[%s380 + $0xd4] sm:%s373]
                  %437 = vst [vmem:[%s381 + $0x6c] sm:%s373] %v436
                  %v438 = vld [vmem:[%s380 + $0xd8] sm:%s373]
                  %439 = vst [vmem:[%s381 + $0x70] sm:%s373] %v438
                  %v440 = vld [vmem:[%s380 + $0xdc] sm:%s373]
                  %441 = vst [vmem:[%s381 + $0x74] sm:%s373] %v440
                  %v442 = vld [vmem:[%s380 + $0xe0] sm:%s373]
                  %443 = vst [vmem:[%s381 + $0x78] sm:%s373] %v442
                  %v444 = vld [vmem:[%s380 + $0xe4] sm:%s373]
                  %445 = vst [vmem:[%s381 + $0x7c] sm:%s373] %v444
                  %v446 = vld [vmem:[%s380 + $0xe8] sm:%s373]
                  %447 = vst [vmem:[%s381 + $0x80] sm:%s373] %v446
                  %v448 = vld [vmem:[%s380 + $0xec] sm:%s373]
                  %449 = vst [vmem:[%s381 + $0x84] sm:%s373] %v448
                  %v450 = vld [vmem:[%s380 + $0xf0] sm:%s373]
                  %451 = vst [vmem:[%s381 + $0x88] sm:%s373] %v450
                  %v452 = vld [vmem:[%s380 + $0xf4] sm:%s373]
                  %453 = vst [vmem:[%s381 + $0x8c] sm:%s373] %v452
                  %v454 = vld [vmem:[%s380 + $0xf8] sm:%s373]
                  %455 = vst [vmem:[%s381 + $0x90] sm:%s373] %v454
                  %v456 = vld [vmem:[%s380 + $0xfc] sm:%s373]
                  %457 = vst [vmem:[%s381 + $0x94] sm:%s373] %v456
                  %v458 = vld [vmem:[%s380 + $0x100] sm:%s373]
                  %459 = vst [vmem:[%s381 + $0x98] sm:%s373] %v458
                  %v460 = vld [vmem:[%s380 + $0x104] sm:%s373]
                  %461 = vst [vmem:[%s381 + $0x9c] sm:%s373] %v460
                  %v462 = vld [vmem:[%s380 + $0x108] sm:%s373]
                  %463 = vst [vmem:[%s381 + $0xa0] sm:%s373] %v462
                  %v464 = vld [vmem:[%s380 + $0x10c] sm:%s373]
                  %465 = vst [vmem:[%s381 + $0xa4] sm:%s373] %v464
                  %v466 = vld [vmem:[%s380 + $0x110] sm:%s373]
                  %467 = vst [vmem:[%s381 + $0xa8] sm:%s373] %v466
                  %v468 = vld [vmem:[%s380 + $0x114] sm:%s373]
                  %469 = vst [vmem:[%s381 + $0xac] sm:%s373] %v468
                  %v470 = vld [vmem:[%s380 + $0x118] sm:%s373]
                  %471 = vst [vmem:[%s381 + $0xb0] sm:%s373] %v470
                  %v472 = vld [vmem:[%s380 + $0x11c] sm:%s373]
                  %473 = vst [vmem:[%s381 + $0xb4] sm:%s373] %v472
                  %v474 = vld [vmem:[%s380 + $0x120] sm:%s373]
                  %475 = vst [vmem:[%s381 + $0xb8] sm:%s373] %v474
                  %v476 = vld [vmem:[%s380 + $0x124] sm:%s373]
                  %477 = vst [vmem:[%s381 + $0xbc] sm:%s373] %v476
                  %v478 = vld [vmem:[%s380 + $0x128] sm:%s373]
                  %479 = vst [vmem:[%s381 + $0xc0] sm:%s373] %v478
                  %v480 = vld [vmem:[%s380 + $0x12c] sm:%s373]
                  %481 = vst [vmem:[%s381 + $0xc4] sm:%s373] %v480
                  %v482 = vld [vmem:[%s380 + $0x130] sm:%s373]
                  %483 = vst [vmem:[%s381 + $0xc8] sm:%s373] %v482
                  %v484 = vld [vmem:[%s380 + $0x134] sm:%s373]
                  %485 = vst [vmem:[%s381 + $0xcc] sm:%s373] %v484
                  %v486 = vld [vmem:[%s380 + $0x1a0] sm:%s373]
                  %487 = vst [vmem:[%s381 + $0xd0] sm:%s373] %v486
                  %v488 = vld [vmem:[%s380 + $0x1a4] sm:%s373]
                  %489 = vst [vmem:[%s381 + $0xd4] sm:%s373] %v488
                  %v490 = vld [vmem:[%s380 + $0x1a8] sm:%s373]
                  %491 = vst [vmem:[%s381 + $0xd8] sm:%s373] %v490
                  %v492 = vld [vmem:[%s380 + $0x1ac] sm:%s373]
                  %493 = vst [vmem:[%s381 + $0xdc] sm:%s373] %v492
                  %v494 = vld [vmem:[%s380 + $0x1b0] sm:%s373]
                  %495 = vst [vmem:[%s381 + $0xe0] sm:%s373] %v494
                  %v496 = vld [vmem:[%s380 + $0x1b4] sm:%s373]
                  %497 = vst [vmem:[%s381 + $0xe4] sm:%s373] %v496
                  %v498 = vld [vmem:[%s380 + $0x1b8] sm:%s373]
                  %499 = vst [vmem:[%s381 + $0xe8] sm:%s373] %v498
                  %v500 = vld [vmem:[%s380 + $0x1bc] sm:%s373]
                  %501 = vst [vmem:[%s381 + $0xec] sm:%s373] %v500
                  %v502 = vld [vmem:[%s380 + $0x1c0] sm:%s373]
                  %503 = vst [vmem:[%s381 + $0xf0] sm:%s373] %v502
                  %v504 = vld [vmem:[%s380 + $0x1c4] sm:%s373]
                  %505 = vst [vmem:[%s381 + $0xf4] sm:%s373] %v504
                  %v506 = vld [vmem:[%s380 + $0x1c8] sm:%s373]
                  %507 = vst [vmem:[%s381 + $0xf8] sm:%s373] %v506
                  %v508 = vld [vmem:[%s380 + $0x1cc] sm:%s373]
                  %509 = vst [vmem:[%s381 + $0xfc] sm:%s373] %v508
                  %v510 = vld [vmem:[%s380 + $0x1d0] sm:%s373]
                  %511 = vst [vmem:[%s381 + $0x100] sm:%s373] %v510
                  %v512 = vld [vmem:[%s380 + $0x1d4] sm:%s373]
                  %513 = vst [vmem:[%s381 + $0x104] sm:%s373] %v512
                  %v514 = vld [vmem:[%s380 + $0x1d8] sm:%s373]
                  %515 = vst [vmem:[%s381 + $0x108] sm:%s373] %v514
                  %v516 = vld [vmem:[%s380 + $0x1dc] sm:%s373]
                  %517 = vst [vmem:[%s381 + $0x10c] sm:%s373] %v516
                  %v518 = vld [vmem:[%s380 + $0x1e0] sm:%s373]
                  %519 = vst [vmem:[%s381 + $0x110] sm:%s373] %v518
                  %v520 = vld [vmem:[%s380 + $0x1e4] sm:%s373]
                  %521 = vst [vmem:[%s381 + $0x114] sm:%s373] %v520
                  %v522 = vld [vmem:[%s380 + $0x1e8] sm:%s373]
                  %523 = vst [vmem:[%s381 + $0x118] sm:%s373] %v522
                  %v524 = vld [vmem:[%s380 + $0x1ec] sm:%s373]
                  %525 = vst [vmem:[%s381 + $0x11c] sm:%s373] %v524
                  %v526 = vld [vmem:[%s380 + $0x1f0] sm:%s373]
                  %527 = vst [vmem:[%s381 + $0x120] sm:%s373] %v526
                  %v528 = vld [vmem:[%s380 + $0x1f4] sm:%s373]
                  %529 = vst [vmem:[%s381 + $0x124] sm:%s373] %v528
                  %v530 = vld [vmem:[%s380 + $0x1f8] sm:%s373]
                  %531 = vst [vmem:[%s381 + $0x128] sm:%s373] %v530
                  %v532 = vld [vmem:[%s380 + $0x1fc] sm:%s373]
                  %533 = vst [vmem:[%s381 + $0x12c] sm:%s373] %v532
                  %v534 = vld [vmem:[%s380 + $0x200] sm:%s373]
                  %535 = vst [vmem:[%s381 + $0x130] sm:%s373] %v534
                  %v536 = vld [vmem:[%s380 + $0x204] sm:%s373]
                  %537 = vst [vmem:[%s381 + $0x134] sm:%s373] %v536
                  %v538 = vld [vmem:[%s380 + $0x270] sm:%s373]
                  %539 = vst [vmem:[%s381 + $0x138] sm:%s373] %v538
                  %v540 = vld [vmem:[%s380 + $0x274] sm:%s373]
                  %541 = vst [vmem:[%s381 + $0x13c] sm:%s373] %v540
                  %v542 = vld [vmem:[%s380 + $0x278] sm:%s373]
                  %543 = vst [vmem:[%s381 + $0x140] sm:%s373] %v542
                  %v544 = vld [vmem:[%s380 + $0x27c] sm:%s373]
                  %545 = vst [vmem:[%s381 + $0x144] sm:%s373] %v544
                  %v546 = vld [vmem:[%s380 + $0x280] sm:%s373]
                  %547 = vst [vmem:[%s381 + $0x148] sm:%s373] %v546
                  %v548 = vld [vmem:[%s380 + $0x284] sm:%s373]
                  %549 = vst [vmem:[%s381 + $0x14c] sm:%s373] %v548
                  %v550 = vld [vmem:[%s380 + $0x288] sm:%s373]
                  %551 = vst [vmem:[%s381 + $0x150] sm:%s373] %v550
                  %v552 = vld [vmem:[%s380 + $0x28c] sm:%s373]
                  %553 = vst [vmem:[%s381 + $0x154] sm:%s373] %v552
                  %v554 = vld [vmem:[%s380 + $0x290] sm:%s373]
                  %555 = vst [vmem:[%s381 + $0x158] sm:%s373] %v554
                  %v556 = vld [vmem:[%s380 + $0x294] sm:%s373]
                  %557 = vst [vmem:[%s381 + $0x15c] sm:%s373] %v556
                  %v558 = vld [vmem:[%s380 + $0x298] sm:%s373]
                  %559 = vst [vmem:[%s381 + $0x160] sm:%s373] %v558
                  %v560 = vld [vmem:[%s380 + $0x29c] sm:%s373]
                  %561 = vst [vmem:[%s381 + $0x164] sm:%s373] %v560
                  %v562 = vld [vmem:[%s380 + $0x2a0] sm:%s373]
                  %563 = vst [vmem:[%s381 + $0x168] sm:%s373] %v562
                  %v564 = vld [vmem:[%s380 + $0x2a4] sm:%s373]
                  %565 = vst [vmem:[%s381 + $0x16c] sm:%s373] %v564
                  %v566 = vld [vmem:[%s380 + $0x2a8] sm:%s373]
                  %567 = vst [vmem:[%s381 + $0x170] sm:%s373] %v566
                  %v568 = vld [vmem:[%s380 + $0x2ac] sm:%s373]
                  %569 = vst [vmem:[%s381 + $0x174] sm:%s373] %v568
                  %v570 = vld [vmem:[%s380 + $0x2b0] sm:%s373]
                  %571 = vst [vmem:[%s381 + $0x178] sm:%s373] %v570
                  %v572 = vld [vmem:[%s380 + $0x2b4] sm:%s373]
                  %573 = vst [vmem:[%s381 + $0x17c] sm:%s373] %v572
                  %v574 = vld [vmem:[%s380 + $0x2b8] sm:%s373]
                  %575 = vst [vmem:[%s381 + $0x180] sm:%s373] %v574
                  %v576 = vld [vmem:[%s380 + $0x2bc] sm:%s373]
                  %577 = vst [vmem:[%s381 + $0x184] sm:%s373] %v576
                  %v578 = vld [vmem:[%s380 + $0x2c0] sm:%s373]
                  %579 = vst [vmem:[%s381 + $0x188] sm:%s373] %v578
                  %v580 = vld [vmem:[%s380 + $0x2c4] sm:%s373]
                  %581 = vst [vmem:[%s381 + $0x18c] sm:%s373] %v580
                  %v582 = vld [vmem:[%s380 + $0x2c8] sm:%s373]
                  %583 = vst [vmem:[%s381 + $0x190] sm:%s373] %v582
                  %v584 = vld [vmem:[%s380 + $0x2cc] sm:%s373]
                  %585 = vst [vmem:[%s381 + $0x194] sm:%s373] %v584
                  %v586 = vld [vmem:[%s380 + $0x2d0] sm:%s373]
                  %587 = vst [vmem:[%s381 + $0x198] sm:%s373] %v586
                  %v588 = vld [vmem:[%s380 + $0x2d4] sm:%s373]
                  %589 = vst [vmem:[%s381 + $0x19c] sm:%s373] %v588
                $region63: #{forward.3} parent=50 // loop_footer
                  %s379 = sadd.s32 1, %s375
                $region64: #{forward.3} parent=50 // loop_footer_branch
                  %374 = sbr.rel target = $region60
                $region65: #{forward.3} parent=50 // loop_exit
                  _
              $region51: #{forward.3} parent=35 // pred_fallthru
                _
            $region36: #{forward.3} parent=31 // pred_fallthru
              _
            // Predicated region
            $region37: #{forward.3} parent=31 // pred_check
              _
            $region38: #{forward.3} parent=31 // pred_check_branch
              %143 = sbr.rel (0) target = $region40
            $region39: #{forward.3} parent=31 // pred_region
              %s145 = ssub.s32 16, 1
              loop: start=0, step=1, limit=1
              $region41: #{forward.3} parent=39 // loop_pre_header
                _
              $region42: #{forward.3} parent=39 // loop_header
                %s147 = sphi 0, %s151
                %p148 = scmp.ge.s32.totalorder %s147, 1
                %s152 = sphi %s137, %s137
                %s153 = sphi %s134, %s134
              $region43: #{forward.3} parent=39 // loop_header_branch
                %150 = sbr.rel (%p148) target = $region47
              $region44: #{forward.3} parent=39 // loop_body
                %v154 = vld [vmem:[%s152] sm:%s145]
                %155 = vst [vmem:[%s153] sm:%s145] %v154
                %v156 = vld [vmem:[%s152 + $0x4] sm:%s145]
                %157 = vst [vmem:[%s153 + $0x4] sm:%s145] %v156
                %v158 = vld [vmem:[%s152 + $0x8] sm:%s145]
                %159 = vst [vmem:[%s153 + $0x8] sm:%s145] %v158
                %v160 = vld [vmem:[%s152 + $0xc] sm:%s145]
                %161 = vst [vmem:[%s153 + $0xc] sm:%s145] %v160
                %v162 = vld [vmem:[%s152 + $0x10] sm:%s145]
                %163 = vst [vmem:[%s153 + $0x10] sm:%s145] %v162
                %v164 = vld [vmem:[%s152 + $0x14] sm:%s145]
                %165 = vst [vmem:[%s153 + $0x14] sm:%s145] %v164
                %v166 = vld [vmem:[%s152 + $0x18] sm:%s145]
                %167 = vst [vmem:[%s153 + $0x18] sm:%s145] %v166
                %v168 = vld [vmem:[%s152 + $0x1c] sm:%s145]
                %169 = vst [vmem:[%s153 + $0x1c] sm:%s145] %v168
                %v170 = vld [vmem:[%s152 + $0x20] sm:%s145]
                %171 = vst [vmem:[%s153 + $0x20] sm:%s145] %v170
                %v172 = vld [vmem:[%s152 + $0x24] sm:%s145]
                %173 = vst [vmem:[%s153 + $0x24] sm:%s145] %v172
                %v174 = vld [vmem:[%s152 + $0x28] sm:%s145]
                %175 = vst [vmem:[%s153 + $0x28] sm:%s145] %v174
                %v176 = vld [vmem:[%s152 + $0x2c] sm:%s145]
                %177 = vst [vmem:[%s153 + $0x2c] sm:%s145] %v176
                %v178 = vld [vmem:[%s152 + $0x30] sm:%s145]
                %179 = vst [vmem:[%s153 + $0x30] sm:%s145] %v178
                %v180 = vld [vmem:[%s152 + $0x34] sm:%s145]
                %181 = vst [vmem:[%s153 + $0x34] sm:%s145] %v180
                %v182 = vld [vmem:[%s152 + $0x38] sm:%s145]
                %183 = vst [vmem:[%s153 + $0x38] sm:%s145] %v182
                %v184 = vld [vmem:[%s152 + $0x3c] sm:%s145]
                %185 = vst [vmem:[%s153 + $0x3c] sm:%s145] %v184
                %v186 = vld [vmem:[%s152 + $0x40] sm:%s145]
                %187 = vst [vmem:[%s153 + $0x40] sm:%s145] %v186
                %v188 = vld [vmem:[%s152 + $0x44] sm:%s145]
                %189 = vst [vmem:[%s153 + $0x44] sm:%s145] %v188
                %v190 = vld [vmem:[%s152 + $0x48] sm:%s145]
                %191 = vst [vmem:[%s153 + $0x48] sm:%s145] %v190
                %v192 = vld [vmem:[%s152 + $0x4c] sm:%s145]
                %193 = vst [vmem:[%s153 + $0x4c] sm:%s145] %v192
                %v194 = vld [vmem:[%s152 + $0x50] sm:%s145]
                %195 = vst [vmem:[%s153 + $0x50] sm:%s145] %v194
                %v196 = vld [vmem:[%s152 + $0x54] sm:%s145]
                %197 = vst [vmem:[%s153 + $0x54] sm:%s145] %v196
                %v198 = vld [vmem:[%s152 + $0x58] sm:%s145]
                %199 = vst [vmem:[%s153 + $0x58] sm:%s145] %v198
                %v200 = vld [vmem:[%s152 + $0x5c] sm:%s145]
                %201 = vst [vmem:[%s153 + $0x5c] sm:%s145] %v200
                %v202 = vld [vmem:[%s152 + $0x60] sm:%s145]
                %203 = vst [vmem:[%s153 + $0x60] sm:%s145] %v202
                %v204 = vld [vmem:[%s152 + $0x64] sm:%s145]
                %205 = vst [vmem:[%s153 + $0x64] sm:%s145] %v204
                %v206 = vld [vmem:[%s152 + $0xd0] sm:%s145]
                %207 = vst [vmem:[%s153 + $0x68] sm:%s145] %v206
                %v208 = vld [vmem:[%s152 + $0xd4] sm:%s145]
                %209 = vst [vmem:[%s153 + $0x6c] sm:%s145] %v208
                %v210 = vld [vmem:[%s152 + $0xd8] sm:%s145]
                %211 = vst [vmem:[%s153 + $0x70] sm:%s145] %v210
                %v212 = vld [vmem:[%s152 + $0xdc] sm:%s145]
                %213 = vst [vmem:[%s153 + $0x74] sm:%s145] %v212
                %v214 = vld [vmem:[%s152 + $0xe0] sm:%s145]
                %215 = vst [vmem:[%s153 + $0x78] sm:%s145] %v214
                %v216 = vld [vmem:[%s152 + $0xe4] sm:%s145]
                %217 = vst [vmem:[%s153 + $0x7c] sm:%s145] %v216
                %v218 = vld [vmem:[%s152 + $0xe8] sm:%s145]
                %219 = vst [vmem:[%s153 + $0x80] sm:%s145] %v218
                %v220 = vld [vmem:[%s152 + $0xec] sm:%s145]
                %221 = vst [vmem:[%s153 + $0x84] sm:%s145] %v220
                %v222 = vld [vmem:[%s152 + $0xf0] sm:%s145]
                %223 = vst [vmem:[%s153 + $0x88] sm:%s145] %v222
                %v224 = vld [vmem:[%s152 + $0xf4] sm:%s145]
                %225 = vst [vmem:[%s153 + $0x8c] sm:%s145] %v224
                %v226 = vld [vmem:[%s152 + $0xf8] sm:%s145]
                %227 = vst [vmem:[%s153 + $0x90] sm:%s145] %v226
                %v228 = vld [vmem:[%s152 + $0xfc] sm:%s145]
                %229 = vst [vmem:[%s153 + $0x94] sm:%s145] %v228
                %v230 = vld [vmem:[%s152 + $0x100] sm:%s145]
                %231 = vst [vmem:[%s153 + $0x98] sm:%s145] %v230
                %v232 = vld [vmem:[%s152 + $0x104] sm:%s145]
                %233 = vst [vmem:[%s153 + $0x9c] sm:%s145] %v232
                %v234 = vld [vmem:[%s152 + $0x108] sm:%s145]
                %235 = vst [vmem:[%s153 + $0xa0] sm:%s145] %v234
                %v236 = vld [vmem:[%s152 + $0x10c] sm:%s145]
                %237 = vst [vmem:[%s153 + $0xa4] sm:%s145] %v236
                %v238 = vld [vmem:[%s152 + $0x110] sm:%s145]
                %239 = vst [vmem:[%s153 + $0xa8] sm:%s145] %v238
                %v240 = vld [vmem:[%s152 + $0x114] sm:%s145]
                %241 = vst [vmem:[%s153 + $0xac] sm:%s145] %v240
                %v242 = vld [vmem:[%s152 + $0x118] sm:%s145]
                %243 = vst [vmem:[%s153 + $0xb0] sm:%s145] %v242
                %v244 = vld [vmem:[%s152 + $0x11c] sm:%s145]
                %245 = vst [vmem:[%s153 + $0xb4] sm:%s145] %v244
                %v246 = vld [vmem:[%s152 + $0x120] sm:%s145]
                %247 = vst [vmem:[%s153 + $0xb8] sm:%s145] %v246
                %v248 = vld [vmem:[%s152 + $0x124] sm:%s145]
                %249 = vst [vmem:[%s153 + $0xbc] sm:%s145] %v248
                %v250 = vld [vmem:[%s152 + $0x128] sm:%s145]
                %251 = vst [vmem:[%s153 + $0xc0] sm:%s145] %v250
                %v252 = vld [vmem:[%s152 + $0x12c] sm:%s145]
                %253 = vst [vmem:[%s153 + $0xc4] sm:%s145] %v252
                %v254 = vld [vmem:[%s152 + $0x130] sm:%s145]
                %255 = vst [vmem:[%s153 + $0xc8] sm:%s145] %v254
                %v256 = vld [vmem:[%s152 + $0x134] sm:%s145]
                %257 = vst [vmem:[%s153 + $0xcc] sm:%s145] %v256
                %v258 = vld [vmem:[%s152 + $0x1a0] sm:%s145]
                %259 = vst [vmem:[%s153 + $0xd0] sm:%s145] %v258
                %v260 = vld [vmem:[%s152 + $0x1a4] sm:%s145]
                %261 = vst [vmem:[%s153 + $0xd4] sm:%s145] %v260
                %v262 = vld [vmem:[%s152 + $0x1a8] sm:%s145]
                %263 = vst [vmem:[%s153 + $0xd8] sm:%s145] %v262
                %v264 = vld [vmem:[%s152 + $0x1ac] sm:%s145]
                %265 = vst [vmem:[%s153 + $0xdc] sm:%s145] %v264
                %v266 = vld [vmem:[%s152 + $0x1b0] sm:%s145]
                %267 = vst [vmem:[%s153 + $0xe0] sm:%s145] %v266
                %v268 = vld [vmem:[%s152 + $0x1b4] sm:%s145]
                %269 = vst [vmem:[%s153 + $0xe4] sm:%s145] %v268
                %v270 = vld [vmem:[%s152 + $0x1b8] sm:%s145]
                %271 = vst [vmem:[%s153 + $0xe8] sm:%s145] %v270
                %v272 = vld [vmem:[%s152 + $0x1bc] sm:%s145]
                %273 = vst [vmem:[%s153 + $0xec] sm:%s145] %v272
                %v274 = vld [vmem:[%s152 + $0x1c0] sm:%s145]
                %275 = vst [vmem:[%s153 + $0xf0] sm:%s145] %v274
                %v276 = vld [vmem:[%s152 + $0x1c4] sm:%s145]
                %277 = vst [vmem:[%s153 + $0xf4] sm:%s145] %v276
                %v278 = vld [vmem:[%s152 + $0x1c8] sm:%s145]
                %279 = vst [vmem:[%s153 + $0xf8] sm:%s145] %v278
                %v280 = vld [vmem:[%s152 + $0x1cc] sm:%s145]
                %281 = vst [vmem:[%s153 + $0xfc] sm:%s145] %v280
                %v282 = vld [vmem:[%s152 + $0x1d0] sm:%s145]
                %283 = vst [vmem:[%s153 + $0x100] sm:%s145] %v282
                %v284 = vld [vmem:[%s152 + $0x1d4] sm:%s145]
                %285 = vst [vmem:[%s153 + $0x104] sm:%s145] %v284
                %v286 = vld [vmem:[%s152 + $0x1d8] sm:%s145]
                %287 = vst [vmem:[%s153 + $0x108] sm:%s145] %v286
                %v288 = vld [vmem:[%s152 + $0x1dc] sm:%s145]
                %289 = vst [vmem:[%s153 + $0x10c] sm:%s145] %v288
                %v290 = vld [vmem:[%s152 + $0x1e0] sm:%s145]
                %291 = vst [vmem:[%s153 + $0x110] sm:%s145] %v290
                %v292 = vld [vmem:[%s152 + $0x1e4] sm:%s145]
                %293 = vst [vmem:[%s153 + $0x114] sm:%s145] %v292
                %v294 = vld [vmem:[%s152 + $0x1e8] sm:%s145]
                %295 = vst [vmem:[%s153 + $0x118] sm:%s145] %v294
                %v296 = vld [vmem:[%s152 + $0x1ec] sm:%s145]
                %297 = vst [vmem:[%s153 + $0x11c] sm:%s145] %v296
                %v298 = vld [vmem:[%s152 + $0x1f0] sm:%s145]
                %299 = vst [vmem:[%s153 + $0x120] sm:%s145] %v298
                %v300 = vld [vmem:[%s152 + $0x1f4] sm:%s145]
                %301 = vst [vmem:[%s153 + $0x124] sm:%s145] %v300
                %v302 = vld [vmem:[%s152 + $0x1f8] sm:%s145]
                %303 = vst [vmem:[%s153 + $0x128] sm:%s145] %v302
                %v304 = vld [vmem:[%s152 + $0x1fc] sm:%s145]
                %305 = vst [vmem:[%s153 + $0x12c] sm:%s145] %v304
                %v306 = vld [vmem:[%s152 + $0x200] sm:%s145]
                %307 = vst [vmem:[%s153 + $0x130] sm:%s145] %v306
                %v308 = vld [vmem:[%s152 + $0x204] sm:%s145]
                %309 = vst [vmem:[%s153 + $0x134] sm:%s145] %v308
                %v310 = vld [vmem:[%s152 + $0x270] sm:%s145]
                %311 = vst [vmem:[%s153 + $0x138] sm:%s145] %v310
                %v312 = vld [vmem:[%s152 + $0x274] sm:%s145]
                %313 = vst [vmem:[%s153 + $0x13c] sm:%s145] %v312
                %v314 = vld [vmem:[%s152 + $0x278] sm:%s145]
                %315 = vst [vmem:[%s153 + $0x140] sm:%s145] %v314
                %v316 = vld [vmem:[%s152 + $0x27c] sm:%s145]
                %317 = vst [vmem:[%s153 + $0x144] sm:%s145] %v316
                %v318 = vld [vmem:[%s152 + $0x280] sm:%s145]
                %319 = vst [vmem:[%s153 + $0x148] sm:%s145] %v318
                %v320 = vld [vmem:[%s152 + $0x284] sm:%s145]
                %321 = vst [vmem:[%s153 + $0x14c] sm:%s145] %v320
                %v322 = vld [vmem:[%s152 + $0x288] sm:%s145]
                %323 = vst [vmem:[%s153 + $0x150] sm:%s145] %v322
                %v324 = vld [vmem:[%s152 + $0x28c] sm:%s145]
                %325 = vst [vmem:[%s153 + $0x154] sm:%s145] %v324
                %v326 = vld [vmem:[%s152 + $0x290] sm:%s145]
                %327 = vst [vmem:[%s153 + $0x158] sm:%s145] %v326
                %v328 = vld [vmem:[%s152 + $0x294] sm:%s145]
                %329 = vst [vmem:[%s153 + $0x15c] sm:%s145] %v328
                %v330 = vld [vmem:[%s152 + $0x298] sm:%s145]
                %331 = vst [vmem:[%s153 + $0x160] sm:%s145] %v330
                %v332 = vld [vmem:[%s152 + $0x29c] sm:%s145]
                %333 = vst [vmem:[%s153 + $0x164] sm:%s145] %v332
                %v334 = vld [vmem:[%s152 + $0x2a0] sm:%s145]
                %335 = vst [vmem:[%s153 + $0x168] sm:%s145] %v334
                %v336 = vld [vmem:[%s152 + $0x2a4] sm:%s145]
                %337 = vst [vmem:[%s153 + $0x16c] sm:%s145] %v336
                %v338 = vld [vmem:[%s152 + $0x2a8] sm:%s145]
                %339 = vst [vmem:[%s153 + $0x170] sm:%s145] %v338
                %v340 = vld [vmem:[%s152 + $0x2ac] sm:%s145]
                %341 = vst [vmem:[%s153 + $0x174] sm:%s145] %v340
                %v342 = vld [vmem:[%s152 + $0x2b0] sm:%s145]
                %343 = vst [vmem:[%s153 + $0x178] sm:%s145] %v342
                %v344 = vld [vmem:[%s152 + $0x2b4] sm:%s145]
                %345 = vst [vmem:[%s153 + $0x17c] sm:%s145] %v344
                %v346 = vld [vmem:[%s152 + $0x2b8] sm:%s145]
                %347 = vst [vmem:[%s153 + $0x180] sm:%s145] %v346
                %v348 = vld [vmem:[%s152 + $0x2bc] sm:%s145]
                %349 = vst [vmem:[%s153 + $0x184] sm:%s145] %v348
                %v350 = vld [vmem:[%s152 + $0x2c0] sm:%s145]
                %351 = vst [vmem:[%s153 + $0x188] sm:%s145] %v350
                %v352 = vld [vmem:[%s152 + $0x2c4] sm:%s145]
                %353 = vst [vmem:[%s153 + $0x18c] sm:%s145] %v352
                %v354 = vld [vmem:[%s152 + $0x2c8] sm:%s145]
                %355 = vst [vmem:[%s153 + $0x190] sm:%s145] %v354
                %v356 = vld [vmem:[%s152 + $0x2cc] sm:%s145]
                %357 = vst [vmem:[%s153 + $0x194] sm:%s145] %v356
                %v358 = vld [vmem:[%s152 + $0x2d0] sm:%s145]
                %359 = vst [vmem:[%s153 + $0x198] sm:%s145] %v358
                %v360 = vld [vmem:[%s152 + $0x2d4] sm:%s145]
                %361 = vst [vmem:[%s153 + $0x19c] sm:%s145] %v360
              $region45: #{forward.3} parent=39 // loop_footer
                %s151 = sadd.s32 1, %s147
              $region46: #{forward.3} parent=39 // loop_footer_branch
                %146 = sbr.rel target = $region42
              $region47: #{forward.3} parent=39 // loop_exit
                _
            $region40: #{forward.3} parent=31 // pred_fallthru
              _
          $region32: #{forward.3} parent=27 // pred_fallthru
            _
          %590 = vnop
        $region28: #{forward.3} parent=23 // pred_fallthru
          _
      $region24: #{forward.3} parent=5 // pred_fallthru
        _
      %p591 = scmp.le.s32.totalorder 1, %s9
      %p592 = scmp.lt.s32.totalorder %s9, 3
      %p593 = pnand %p591, %p592
      %p594 = pneg %p593
      // Predicated region
      $region66: #{forward.3} parent=5 // pred_check
        _
      $region67: #{forward.3} parent=5 // pred_check_branch
        %596 = sbr.rel (%p593) target = $region69
      $region68: #{forward.3} parent=5 // pred_region
        %s597 = ssub.s32 %s9, 1
        %s598 = sand.u32 %s22, 1
        %s599 = sand.u32 %s22, 1
        %s600 = smul.addr %s599, 416
        %s601 = scalar_lea.vmem [#allocation2], %s600
        // Predicated region
        $region70: #{forward.3} parent=68 // pred_check
          %p602 = pneg %p35
        $region71: #{forward.3} parent=68 // pred_check_branch
          %604 = sbr.rel (%p602) target = $region73
        $region72: #{forward.3} parent=68 // pred_region
          _
        $region73: #{forward.3} parent=68 // pred_fallthru
          _
        %s605 = sand.u32 %s22, 1
        %s606 = sand.u32 %s22, 1
        %s607 = smul.addr %s606, 416
        %s608 = scalar_lea.vmem [#allocation2], %s607
        %p609 = pneg %p35
        %p610 = pneg %p32
        %p611 = pneg %p56
        %p612 = pneg %p53
        %p613 = pneg %p77
        %p614 = pneg %p74
        %p615 = pneg %p103
        %p616 = pneg %p100
        %s617 = smul.u32 26, %s14
        %p618 = scmp.lt.s32.totalorder %s617, 51
        %s619 = scalar_select %p618, %s617, 51
        %s620 = smul.addr %s619, 4
        %s621 = scalar_lea.vmem %s3, %s620
        %s622 = smul.u32 26, %s14
        %s623 = smul.u32 26, %s14
        %p624 = scmp.lt.s32.totalorder %s623, 51
        %s625 = scalar_select %p624, %s623, 51
        %s626 = smul.addr %s625, 4
        %s627 = scalar_lea.vmem %s3, %s626
        %s628 = smul.u32 26, %s14
        %v630 = vld [vmem:[%s1] sm:$0xf]
        %v631 = vld [vmem:[%s1 + $0x4] sm:$0xf]
        %v632 = vld [vmem:[%s1 + $0x8] sm:$0xf]
        %v633 = vld [vmem:[%s1 + $0xc] sm:$0xf]
        %v634 = vld [vmem:[%s601] sm:$0xf]
        %v635 = vld [vmem:[%s601 + $0x4] sm:$0xf]
        %v636 = vld [vmem:[%s601 + $0x8] sm:$0xf]
        %v637 = vld [vmem:[%s601 + $0xc] sm:$0xf]
        %v638 = vld [vmem:[%s601 + $0x10] sm:$0xf]
        %v639 = vld [vmem:[%s601 + $0x14] sm:$0xf]
        %v640 = vld [vmem:[%s601 + $0x18] sm:$0xf]
        %v641 = vld [vmem:[%s601 + $0x1c] sm:$0xf]
        %v642 = vld [vmem:[%s601 + $0x20] sm:$0xf]
        %v643 = vld [vmem:[%s601 + $0x24] sm:$0xf]
        %v644 = vld [vmem:[%s601 + $0x28] sm:$0xf]
        %v645 = vld [vmem:[%s601 + $0x2c] sm:$0xf]
        %v646 = vld [vmem:[%s601 + $0x30] sm:$0xf]
        %v647 = vld [vmem:[%s601 + $0x34] sm:$0xf]
        %v648 = vld [vmem:[%s601 + $0x38] sm:$0xf]
        %v649 = vld [vmem:[%s601 + $0x3c] sm:$0xf]
        %v650 = vld [vmem:[%s601 + $0x40] sm:$0xf]
        %v651 = vld [vmem:[%s601 + $0x44] sm:$0xf]
        %v652 = vld [vmem:[%s601 + $0x48] sm:$0xf]
        %v653 = vld [vmem:[%s601 + $0x4c] sm:$0xf]
        %v654 = vld [vmem:[%s601 + $0x50] sm:$0xf]
        %v655 = vld [vmem:[%s601 + $0x54] sm:$0xf]
        %v656 = vld [vmem:[%s601 + $0x58] sm:$0xf]
        %v657 = vld [vmem:[%s601 + $0x5c] sm:$0xf]
        %v658 = vld [vmem:[%s601 + $0x60] sm:$0xf]
        %v659 = vld [vmem:[%s601 + $0x64] sm:$0xf]
        %v686 = vunpack.c.l.b16 %v634
        %v687 = vunpack.c.l.b16 %v635
        %v688 = vunpack.c.l.b16 %v636
        %v689 = vunpack.c.l.b16 %v637
        %v690 = vunpack.c.l.b16 %v638
        %v691 = vunpack.c.l.b16 %v639
        %v692 = vunpack.c.l.b16 %v640
        %v693 = vunpack.c.l.b16 %v641
        %v694 = vunpack.c.l.b16 %v642
        %v695 = vunpack.c.l.b16 %v643
        %v696 = vunpack.c.l.b16 %v644
        %v697 = vunpack.c.l.b16 %v645
        %v698 = vunpack.c.l.b16 %v646
        %v699 = vunpack.c.l.b16 %v647
        %v700 = vunpack.c.l.b16 %v648
        %v701 = vunpack.c.l.b16 %v649
        %v702 = vunpack.c.l.b16 %v650
        %v703 = vunpack.c.l.b16 %v651
        %v704 = vunpack.c.l.b16 %v652
        %v705 = vunpack.c.l.b16 %v653
        %v706 = vunpack.c.l.b16 %v654
        %v707 = vunpack.c.l.b16 %v655
        %v708 = vunpack.c.l.b16 %v656
        %v709 = vunpack.c.l.b16 %v657
        %v710 = vunpack.c.l.b16 %v658
        %v711 = vunpack.c.l.b16 %v659
        %v712 = vpack.c.b16 %v687, %v686
        %v713 = vpack.c.b16 %v689, %v688
        %v714 = vpack.c.b16 %v691, %v690
        %v715 = vpack.c.b16 %v693, %v692
        %v716 = vpack.c.b16 %v695, %v694
        %v717 = vpack.c.b16 %v697, %v696
        %v718 = vpack.c.b16 %v699, %v698
        %v719 = vpack.c.b16 %v701, %v700
        %v720 = vpack.c.b16 %v703, %v702
        %v721 = vpack.c.b16 %v705, %v704
        %v722 = vpack.c.b16 %v707, %v706
        %v723 = vpack.c.b16 %v709, %v708
        %v724 = vpack.c.b16 %v711, %v710
        %v729 = vunpack.c.l.b16 %v630
        %v730 = vunpack.c.l.b16 %v631
        %v731 = vunpack.c.l.b16 %v632
        %v732 = vunpack.c.l.b16 %v633
        %v733 = vpack.c.b16 %v730, %v729
        %v734 = vpack.c.b16 %v732, %v731
        %vm737 = vcmask 261120
        %v739 = vsel %vm737, %v712, 0
        %v742 = vsel %vm737, %v713, 0
        %v745 = vsel %vm737, %v714, 0
        %v748 = vsel %vm737, %v715, 0
        %v751 = vsel %vm737, %v716, 0
        %v754 = vsel %vm737, %v717, 0
        %v757 = vsel %vm737, %v718, 0
        %v760 = vsel %vm737, %v719, 0
        %v763 = vsel %vm737, %v720, 0
        %v766 = vsel %vm737, %v721, 0
        %v769 = vsel %vm737, %v722, 0
        %v772 = vsel %vm737, %v723, 0
        %v775 = vsel %vm737, %v724, 0
        %777 = vmatpush.bf16.msra.mxu0 0
        %778 = vmatpush.bf16.msra.mxu0 0
        %779 = vmatpush.bf16.msra.mxu0 0
        %780 = vmatpush.bf16.msra.mxu0 0
        %781 = vmatpush.bf16.msra.mxu0 0
        %782 = vmatpush.bf16.msra.mxu0 0
        %783 = vmatpush.bf16.msra.mxu0 %v734
        %784 = vmatpush.bf16.msra.mxu0 %v733
        %785 = vmatmul.bf16.gmra.mxu0 %v739
        %v786 = vpop.f32.mrf.mxu0
        %v787 = vadd.f32 0.0, %v786
        %v788 = vpop.f32.mrf.mxu0
        %v789 = vadd.f32 0.0, %v788
        %790 = vmatmul.bf16.gmra.mxu0 %v742
        %v791 = vpop.f32.mrf.mxu0
        %v792 = vadd.f32 0.0, %v791
        %v793 = vpop.f32.mrf.mxu0
        %v794 = vadd.f32 0.0, %v793
        %795 = vmatmul.bf16.gmra.mxu0 %v745
        %v796 = vpop.f32.mrf.mxu0
        %v797 = vadd.f32 0.0, %v796
        %v798 = vpop.f32.mrf.mxu0
        %v799 = vadd.f32 0.0, %v798
        %800 = vmatmul.bf16.gmra.mxu0 %v748
        %v801 = vpop.f32.mrf.mxu0
        %v802 = vadd.f32 0.0, %v801
        %v803 = vpop.f32.mrf.mxu0
        %v804 = vadd.f32 0.0, %v803
        %805 = vmatmul.bf16.gmra.mxu0 %v751
        %v806 = vpop.f32.mrf.mxu0
        %v807 = vadd.f32 0.0, %v806
        %v808 = vpop.f32.mrf.mxu0
        %v809 = vadd.f32 0.0, %v808
        %810 = vmatmul.bf16.gmra.mxu0 %v754
        %v811 = vpop.f32.mrf.mxu0
        %v812 = vadd.f32 0.0, %v811
        %v813 = vpop.f32.mrf.mxu0
        %v814 = vadd.f32 0.0, %v813
        %815 = vmatmul.bf16.gmra.mxu0 %v757
        %v816 = vpop.f32.mrf.mxu0
        %v817 = vadd.f32 0.0, %v816
        %v818 = vpop.f32.mrf.mxu0
        %v819 = vadd.f32 0.0, %v818
        %820 = vmatmul.bf16.gmra.mxu0 %v760
        %v821 = vpop.f32.mrf.mxu0
        %v822 = vadd.f32 0.0, %v821
        %v823 = vpop.f32.mrf.mxu0
        %v824 = vadd.f32 0.0, %v823
        %825 = vmatmul.bf16.gmra.mxu0 %v763
        %v826 = vpop.f32.mrf.mxu0
        %v827 = vadd.f32 0.0, %v826
        %v828 = vpop.f32.mrf.mxu0
        %v829 = vadd.f32 0.0, %v828
        %830 = vmatmul.bf16.gmra.mxu0 %v766
        %v831 = vpop.f32.mrf.mxu0
        %v832 = vadd.f32 0.0, %v831
        %v833 = vpop.f32.mrf.mxu0
        %v834 = vadd.f32 0.0, %v833
        %835 = vmatmul.bf16.gmra.mxu0 %v769
        %v836 = vpop.f32.mrf.mxu0
        %v837 = vadd.f32 0.0, %v836
        %v838 = vpop.f32.mrf.mxu0
        %v839 = vadd.f32 0.0, %v838
        %840 = vmatmul.bf16.gmra.mxu0 %v772
        %v841 = vpop.f32.mrf.mxu0
        %v842 = vadd.f32 0.0, %v841
        %v843 = vpop.f32.mrf.mxu0
        %v844 = vadd.f32 0.0, %v843
        %845 = vmatmul.bf16.gmra.mxu0 %v775
        %v846 = vpop.f32.mrf.mxu0
        %v847 = vadd.f32 0.0, %v846
        %v848 = vpop.f32.mrf.mxu0
        %v849 = vadd.f32 0.0, %v848
        %850 = vdwg.mxu0
        %s851 = scalar_lea.vmem %s601, 104 [#allocation2]
        %v852 = vld [vmem:[%s851] sm:$0xf]
        %v853 = vld [vmem:[%s851 + $0x4] sm:$0xf]
        %v854 = vld [vmem:[%s851 + $0x8] sm:$0xf]
        %v855 = vld [vmem:[%s851 + $0xc] sm:$0xf]
        %v856 = vld [vmem:[%s851 + $0x10] sm:$0xf]
        %v857 = vld [vmem:[%s851 + $0x14] sm:$0xf]
        %v858 = vld [vmem:[%s851 + $0x18] sm:$0xf]
        %v859 = vld [vmem:[%s851 + $0x1c] sm:$0xf]
        %v860 = vld [vmem:[%s851 + $0x20] sm:$0xf]
        %v861 = vld [vmem:[%s851 + $0x24] sm:$0xf]
        %v862 = vld [vmem:[%s851 + $0x28] sm:$0xf]
        %v863 = vld [vmem:[%s851 + $0x2c] sm:$0xf]
        %v864 = vld [vmem:[%s851 + $0x30] sm:$0xf]
        %v865 = vld [vmem:[%s851 + $0x34] sm:$0xf]
        %v866 = vld [vmem:[%s851 + $0x38] sm:$0xf]
        %v867 = vld [vmem:[%s851 + $0x3c] sm:$0xf]
        %v868 = vld [vmem:[%s851 + $0x40] sm:$0xf]
        %v869 = vld [vmem:[%s851 + $0x44] sm:$0xf]
        %v870 = vld [vmem:[%s851 + $0x48] sm:$0xf]
        %v871 = vld [vmem:[%s851 + $0x4c] sm:$0xf]
        %v872 = vld [vmem:[%s851 + $0x50] sm:$0xf]
        %v873 = vld [vmem:[%s851 + $0x54] sm:$0xf]
        %v874 = vld [vmem:[%s851 + $0x58] sm:$0xf]
        %v875 = vld [vmem:[%s851 + $0x5c] sm:$0xf]
        %v876 = vld [vmem:[%s851 + $0x60] sm:$0xf]
        %v877 = vld [vmem:[%s851 + $0x64] sm:$0xf]
        %v904 = vunpack.c.l.b16 %v852
        %v905 = vunpack.c.l.b16 %v853
        %v906 = vunpack.c.l.b16 %v854
        %v907 = vunpack.c.l.b16 %v855
        %v908 = vunpack.c.l.b16 %v856
        %v909 = vunpack.c.l.b16 %v857
        %v910 = vunpack.c.l.b16 %v858
        %v911 = vunpack.c.l.b16 %v859
        %v912 = vunpack.c.l.b16 %v860
        %v913 = vunpack.c.l.b16 %v861
        %v914 = vunpack.c.l.b16 %v862
        %v915 = vunpack.c.l.b16 %v863
        %v916 = vunpack.c.l.b16 %v864
        %v917 = vunpack.c.l.b16 %v865
        %v918 = vunpack.c.l.b16 %v866
        %v919 = vunpack.c.l.b16 %v867
        %v920 = vunpack.c.l.b16 %v868
        %v921 = vunpack.c.l.b16 %v869
        %v922 = vunpack.c.l.b16 %v870
        %v923 = vunpack.c.l.b16 %v871
        %v924 = vunpack.c.l.b16 %v872
        %v925 = vunpack.c.l.b16 %v873
        %v926 = vunpack.c.l.b16 %v874
        %v927 = vunpack.c.l.b16 %v875
        %v928 = vunpack.c.l.b16 %v876
        %v929 = vunpack.c.l.b16 %v877
        %v930 = vpack.c.b16 %v905, %v904
        %v931 = vpack.c.b16 %v907, %v906
        %v932 = vpack.c.b16 %v909, %v908
        %v933 = vpack.c.b16 %v911, %v910
        %v934 = vpack.c.b16 %v913, %v912
        %v935 = vpack.c.b16 %v915, %v914
        %v936 = vpack.c.b16 %v917, %v916
        %v937 = vpack.c.b16 %v919, %v918
        %v938 = vpack.c.b16 %v921, %v920
        %v939 = vpack.c.b16 %v923, %v922
        %v940 = vpack.c.b16 %v925, %v924
        %v941 = vpack.c.b16 %v927, %v926
        %v942 = vpack.c.b16 %v929, %v928
        %v944 = vsel %vm737, %v930, 0
        %v947 = vsel %vm737, %v931, 0
        %v950 = vsel %vm737, %v932, 0
        %v953 = vsel %vm737, %v933, 0
        %v956 = vsel %vm737, %v934, 0
        %v959 = vsel %vm737, %v935, 0
        %v962 = vsel %vm737, %v936, 0
        %v965 = vsel %vm737, %v937, 0
        %v968 = vsel %vm737, %v938, 0
        %v971 = vsel %vm737, %v939, 0
        %v974 = vsel %vm737, %v940, 0
        %v977 = vsel %vm737, %v941, 0
        %v980 = vsel %vm737, %v942, 0
        %982 = vmatpush.bf16.msra.mxu0 0
        %983 = vmatpush.bf16.msra.mxu0 0
        %984 = vmatpush.bf16.msra.mxu0 0
        %985 = vmatpush.bf16.msra.mxu0 0
        %986 = vmatpush.bf16.msra.mxu0 0
        %987 = vmatpush.bf16.msra.mxu0 0
        %988 = vmatpush.bf16.msra.mxu0 %v734
        %989 = vmatpush.bf16.msra.mxu0 %v733
        %990 = vmatmul.bf16.gmra.mxu0 %v944
        %v991 = vpop.f32.mrf.mxu0
        %v992 = vadd.f32 0.0, %v991
        %v993 = vpop.f32.mrf.mxu0
        %v994 = vadd.f32 0.0, %v993
        %995 = vmatmul.bf16.gmra.mxu0 %v947
        %v996 = vpop.f32.mrf.mxu0
        %v997 = vadd.f32 0.0, %v996
        %v998 = vpop.f32.mrf.mxu0
        %v999 = vadd.f32 0.0, %v998
        %1000 = vmatmul.bf16.gmra.mxu0 %v950
        %v1001 = vpop.f32.mrf.mxu0
        %v1002 = vadd.f32 0.0, %v1001
        %v1003 = vpop.f32.mrf.mxu0
        %v1004 = vadd.f32 0.0, %v1003
        %1005 = vmatmul.bf16.gmra.mxu0 %v953
        %v1006 = vpop.f32.mrf.mxu0
        %v1007 = vadd.f32 0.0, %v1006
        %v1008 = vpop.f32.mrf.mxu0
        %v1009 = vadd.f32 0.0, %v1008
        %1010 = vmatmul.bf16.gmra.mxu0 %v956
        %v1011 = vpop.f32.mrf.mxu0
        %v1012 = vadd.f32 0.0, %v1011
        %v1013 = vpop.f32.mrf.mxu0
        %v1014 = vadd.f32 0.0, %v1013
        %1015 = vmatmul.bf16.gmra.mxu0 %v959
        %v1016 = vpop.f32.mrf.mxu0
        %v1017 = vadd.f32 0.0, %v1016
        %v1018 = vpop.f32.mrf.mxu0
        %v1019 = vadd.f32 0.0, %v1018
        %1020 = vmatmul.bf16.gmra.mxu0 %v962
        %v1021 = vpop.f32.mrf.mxu0
        %v1022 = vadd.f32 0.0, %v1021
        %v1023 = vpop.f32.mrf.mxu0
        %v1024 = vadd.f32 0.0, %v1023
        %1025 = vmatmul.bf16.gmra.mxu0 %v965
        %v1026 = vpop.f32.mrf.mxu0
        %v1027 = vadd.f32 0.0, %v1026
        %v1028 = vpop.f32.mrf.mxu0
        %v1029 = vadd.f32 0.0, %v1028
        %1030 = vmatmul.bf16.gmra.mxu0 %v968
        %v1031 = vpop.f32.mrf.mxu0
        %v1032 = vadd.f32 0.0, %v1031
        %v1033 = vpop.f32.mrf.mxu0
        %v1034 = vadd.f32 0.0, %v1033
        %1035 = vmatmul.bf16.gmra.mxu0 %v971
        %v1036 = vpop.f32.mrf.mxu0
        %v1037 = vadd.f32 0.0, %v1036
        %v1038 = vpop.f32.mrf.mxu0
        %v1039 = vadd.f32 0.0, %v1038
        %1040 = vmatmul.bf16.gmra.mxu0 %v974
        %v1041 = vpop.f32.mrf.mxu0
        %v1042 = vadd.f32 0.0, %v1041
        %v1043 = vpop.f32.mrf.mxu0
        %v1044 = vadd.f32 0.0, %v1043
        %1045 = vmatmul.bf16.gmra.mxu0 %v977
        %v1046 = vpop.f32.mrf.mxu0
        %v1047 = vadd.f32 0.0, %v1046
        %v1048 = vpop.f32.mrf.mxu0
        %v1049 = vadd.f32 0.0, %v1048
        %1050 = vmatmul.bf16.gmra.mxu0 %v980
        %v1051 = vpop.f32.mrf.mxu0
        %v1052 = vadd.f32 0.0, %v1051
        %v1053 = vpop.f32.mrf.mxu0
        %v1054 = vadd.f32 0.0, %v1053
        %1055 = vdwg.mxu0
        %v1056 = vmax.f32 %v787, %v992
        %v1057 = vmax.f32 %v789, %v994
        %v1058 = vmax.f32 %v792, %v997
        %v1059 = vmax.f32 %v794, %v999
        %v1060 = vmax.f32 %v797, %v1002
        %v1061 = vmax.f32 %v799, %v1004
        %v1062 = vmax.f32 %v802, %v1007
        %v1063 = vmax.f32 %v804, %v1009
        %v1064 = vmax.f32 %v807, %v1012
        %v1065 = vmax.f32 %v809, %v1014
        %v1066 = vmax.f32 %v812, %v1017
        %v1067 = vmax.f32 %v814, %v1019
        %v1068 = vmax.f32 %v817, %v1022
        %v1069 = vmax.f32 %v819, %v1024
        %v1070 = vmax.f32 %v822, %v1027
        %v1071 = vmax.f32 %v824, %v1029
        %v1072 = vmax.f32 %v827, %v1032
        %v1073 = vmax.f32 %v829, %v1034
        %v1074 = vmax.f32 %v832, %v1037
        %v1075 = vmax.f32 %v834, %v1039
        %v1076 = vmax.f32 %v837, %v1042
        %v1077 = vmax.f32 %v839, %v1044
        %v1078 = vmax.f32 %v842, %v1047
        %v1079 = vmax.f32 %v844, %v1049
        %v1080 = vmax.f32 %v847, %v1052
        %v1081 = vmax.f32 %v849, %v1054
        %s1082 = scalar_lea.vmem %s601, 208 [#allocation2]
        %v1083 = vld [vmem:[%s1082] sm:$0xf]
        %v1084 = vld [vmem:[%s1082 + $0x4] sm:$0xf]
        %v1085 = vld [vmem:[%s1082 + $0x8] sm:$0xf]
        %v1086 = vld [vmem:[%s1082 + $0xc] sm:$0xf]
        %v1087 = vld [vmem:[%s1082 + $0x10] sm:$0xf]
        %v1088 = vld [vmem:[%s1082 + $0x14] sm:$0xf]
        %v1089 = vld [vmem:[%s1082 + $0x18] sm:$0xf]
        %v1090 = vld [vmem:[%s1082 + $0x1c] sm:$0xf]
        %v1091 = vld [vmem:[%s1082 + $0x20] sm:$0xf]
        %v1092 = vld [vmem:[%s1082 + $0x24] sm:$0xf]
        %v1093 = vld [vmem:[%s1082 + $0x28] sm:$0xf]
        %v1094 = vld [vmem:[%s1082 + $0x2c] sm:$0xf]
        %v1095 = vld [vmem:[%s1082 + $0x30] sm:$0xf]
        %v1096 = vld [vmem:[%s1082 + $0x34] sm:$0xf]
        %v1097 = vld [vmem:[%s1082 + $0x38] sm:$0xf]
        %v1098 = vld [vmem:[%s1082 + $0x3c] sm:$0xf]
        %v1099 = vld [vmem:[%s1082 + $0x40] sm:$0xf]
        %v1100 = vld [vmem:[%s1082 + $0x44] sm:$0xf]
        %v1101 = vld [vmem:[%s1082 + $0x48] sm:$0xf]
        %v1102 = vld [vmem:[%s1082 + $0x4c] sm:$0xf]
        %v1103 = vld [vmem:[%s1082 + $0x50] sm:$0xf]
        %v1104 = vld [vmem:[%s1082 + $0x54] sm:$0xf]
        %v1105 = vld [vmem:[%s1082 + $0x58] sm:$0xf]
        %v1106 = vld [vmem:[%s1082 + $0x5c] sm:$0xf]
        %v1107 = vld [vmem:[%s1082 + $0x60] sm:$0xf]
        %v1108 = vld [vmem:[%s1082 + $0x64] sm:$0xf]
        %v1135 = vunpack.c.l.b16 %v1083
        %v1136 = vunpack.c.l.b16 %v1084
        %v1137 = vunpack.c.l.b16 %v1085
        %v1138 = vunpack.c.l.b16 %v1086
        %v1139 = vunpack.c.l.b16 %v1087
        %v1140 = vunpack.c.l.b16 %v1088
        %v1141 = vunpack.c.l.b16 %v1089
        %v1142 = vunpack.c.l.b16 %v1090
        %v1143 = vunpack.c.l.b16 %v1091
        %v1144 = vunpack.c.l.b16 %v1092
        %v1145 = vunpack.c.l.b16 %v1093
        %v1146 = vunpack.c.l.b16 %v1094
        %v1147 = vunpack.c.l.b16 %v1095
        %v1148 = vunpack.c.l.b16 %v1096
        %v1149 = vunpack.c.l.b16 %v1097
        %v1150 = vunpack.c.l.b16 %v1098
        %v1151 = vunpack.c.l.b16 %v1099
        %v1152 = vunpack.c.l.b16 %v1100
        %v1153 = vunpack.c.l.b16 %v1101
        %v1154 = vunpack.c.l.b16 %v1102
        %v1155 = vunpack.c.l.b16 %v1103
        %v1156 = vunpack.c.l.b16 %v1104
        %v1157 = vunpack.c.l.b16 %v1105
        %v1158 = vunpack.c.l.b16 %v1106
        %v1159 = vunpack.c.l.b16 %v1107
        %v1160 = vunpack.c.l.b16 %v1108
        %v1161 = vpack.c.b16 %v1136, %v1135
        %v1162 = vpack.c.b16 %v1138, %v1137
        %v1163 = vpack.c.b16 %v1140, %v1139
        %v1164 = vpack.c.b16 %v1142, %v1141
        %v1165 = vpack.c.b16 %v1144, %v1143
        %v1166 = vpack.c.b16 %v1146, %v1145
        %v1167 = vpack.c.b16 %v1148, %v1147
        %v1168 = vpack.c.b16 %v1150, %v1149
        %v1169 = vpack.c.b16 %v1152, %v1151
        %v1170 = vpack.c.b16 %v1154, %v1153
        %v1171 = vpack.c.b16 %v1156, %v1155
        %v1172 = vpack.c.b16 %v1158, %v1157
        %v1173 = vpack.c.b16 %v1160, %v1159
        %v1175 = vsel %vm737, %v1161, 0
        %v1178 = vsel %vm737, %v1162, 0
        %v1181 = vsel %vm737, %v1163, 0
        %v1184 = vsel %vm737, %v1164, 0
        %v1187 = vsel %vm737, %v1165, 0
        %v1190 = vsel %vm737, %v1166, 0
        %v1193 = vsel %vm737, %v1167, 0
        %v1196 = vsel %vm737, %v1168, 0
        %v1199 = vsel %vm737, %v1169, 0
        %v1202 = vsel %vm737, %v1170, 0
        %v1205 = vsel %vm737, %v1171, 0
        %v1208 = vsel %vm737, %v1172, 0
        %v1211 = vsel %vm737, %v1173, 0
        %1213 = vmatpush.bf16.msra.mxu0 0
        %1214 = vmatpush.bf16.msra.mxu0 0
        %1215 = vmatpush.bf16.msra.mxu0 0
        %1216 = vmatpush.bf16.msra.mxu0 0
        %1217 = vmatpush.bf16.msra.mxu0 0
        %1218 = vmatpush.bf16.msra.mxu0 0
        %1219 = vmatpush.bf16.msra.mxu0 %v734
        %1220 = vmatpush.bf16.msra.mxu0 %v733
        %1221 = vmatmul.bf16.gmra.mxu0 %v1175
        %v1222 = vpop.f32.mrf.mxu0
        %v1223 = vadd.f32 0.0, %v1222
        %v1224 = vpop.f32.mrf.mxu0
        %v1225 = vadd.f32 0.0, %v1224
        %1226 = vmatmul.bf16.gmra.mxu0 %v1178
        %v1227 = vpop.f32.mrf.mxu0
        %v1228 = vadd.f32 0.0, %v1227
        %v1229 = vpop.f32.mrf.mxu0
        %v1230 = vadd.f32 0.0, %v1229
        %1231 = vmatmul.bf16.gmra.mxu0 %v1181
        %v1232 = vpop.f32.mrf.mxu0
        %v1233 = vadd.f32 0.0, %v1232
        %v1234 = vpop.f32.mrf.mxu0
        %v1235 = vadd.f32 0.0, %v1234
        %1236 = vmatmul.bf16.gmra.mxu0 %v1184
        %v1237 = vpop.f32.mrf.mxu0
        %v1238 = vadd.f32 0.0, %v1237
        %v1239 = vpop.f32.mrf.mxu0
        %v1240 = vadd.f32 0.0, %v1239
        %1241 = vmatmul.bf16.gmra.mxu0 %v1187
        %v1242 = vpop.f32.mrf.mxu0
        %v1243 = vadd.f32 0.0, %v1242
        %v1244 = vpop.f32.mrf.mxu0
        %v1245 = vadd.f32 0.0, %v1244
        %1246 = vmatmul.bf16.gmra.mxu0 %v1190
        %v1247 = vpop.f32.mrf.mxu0
        %v1248 = vadd.f32 0.0, %v1247
        %v1249 = vpop.f32.mrf.mxu0
        %v1250 = vadd.f32 0.0, %v1249
        %1251 = vmatmul.bf16.gmra.mxu0 %v1193
        %v1252 = vpop.f32.mrf.mxu0
        %v1253 = vadd.f32 0.0, %v1252
        %v1254 = vpop.f32.mrf.mxu0
        %v1255 = vadd.f32 0.0, %v1254
        %1256 = vmatmul.bf16.gmra.mxu0 %v1196
        %v1257 = vpop.f32.mrf.mxu0
        %v1258 = vadd.f32 0.0, %v1257
        %v1259 = vpop.f32.mrf.mxu0
        %v1260 = vadd.f32 0.0, %v1259
        %1261 = vmatmul.bf16.gmra.mxu0 %v1199
        %v1262 = vpop.f32.mrf.mxu0
        %v1263 = vadd.f32 0.0, %v1262
        %v1264 = vpop.f32.mrf.mxu0
        %v1265 = vadd.f32 0.0, %v1264
        %1266 = vmatmul.bf16.gmra.mxu0 %v1202
        %v1267 = vpop.f32.mrf.mxu0
        %v1268 = vadd.f32 0.0, %v1267
        %v1269 = vpop.f32.mrf.mxu0
        %v1270 = vadd.f32 0.0, %v1269
        %1271 = vmatmul.bf16.gmra.mxu0 %v1205
        %v1272 = vpop.f32.mrf.mxu0
        %v1273 = vadd.f32 0.0, %v1272
        %v1274 = vpop.f32.mrf.mxu0
        %v1275 = vadd.f32 0.0, %v1274
        %1276 = vmatmul.bf16.gmra.mxu0 %v1208
        %v1277 = vpop.f32.mrf.mxu0
        %v1278 = vadd.f32 0.0, %v1277
        %v1279 = vpop.f32.mrf.mxu0
        %v1280 = vadd.f32 0.0, %v1279
        %1281 = vmatmul.bf16.gmra.mxu0 %v1211
        %v1282 = vpop.f32.mrf.mxu0
        %v1283 = vadd.f32 0.0, %v1282
        %v1284 = vpop.f32.mrf.mxu0
        %v1285 = vadd.f32 0.0, %v1284
        %1286 = vdwg.mxu0
        %s1287 = scalar_lea.vmem %s601, 312 [#allocation2]
        %v1288 = vld [vmem:[%s1287] sm:$0xf]
        %v1289 = vld [vmem:[%s1287 + $0x4] sm:$0xf]
        %v1290 = vld [vmem:[%s1287 + $0x8] sm:$0xf]
        %v1291 = vld [vmem:[%s1287 + $0xc] sm:$0xf]
        %v1292 = vld [vmem:[%s1287 + $0x10] sm:$0xf]
        %v1293 = vld [vmem:[%s1287 + $0x14] sm:$0xf]
        %v1294 = vld [vmem:[%s1287 + $0x18] sm:$0xf]
        %v1295 = vld [vmem:[%s1287 + $0x1c] sm:$0xf]
        %v1296 = vld [vmem:[%s1287 + $0x20] sm:$0xf]
        %v1297 = vld [vmem:[%s1287 + $0x24] sm:$0xf]
        %v1298 = vld [vmem:[%s1287 + $0x28] sm:$0xf]
        %v1299 = vld [vmem:[%s1287 + $0x2c] sm:$0xf]
        %v1300 = vld [vmem:[%s1287 + $0x30] sm:$0xf]
        %v1301 = vld [vmem:[%s1287 + $0x34] sm:$0xf]
        %v1302 = vld [vmem:[%s1287 + $0x38] sm:$0xf]
        %v1303 = vld [vmem:[%s1287 + $0x3c] sm:$0xf]
        %v1304 = vld [vmem:[%s1287 + $0x40] sm:$0xf]
        %v1305 = vld [vmem:[%s1287 + $0x44] sm:$0xf]
        %v1306 = vld [vmem:[%s1287 + $0x48] sm:$0xf]
        %v1307 = vld [vmem:[%s1287 + $0x4c] sm:$0xf]
        %v1308 = vld [vmem:[%s1287 + $0x50] sm:$0xf]
        %v1309 = vld [vmem:[%s1287 + $0x54] sm:$0xf]
        %v1310 = vld [vmem:[%s1287 + $0x58] sm:$0xf]
        %v1311 = vld [vmem:[%s1287 + $0x5c] sm:$0xf]
        %v1312 = vld [vmem:[%s1287 + $0x60] sm:$0xf]
        %v1313 = vld [vmem:[%s1287 + $0x64] sm:$0xf]
        %v1340 = vunpack.c.l.b16 %v1288
        %v1341 = vunpack.c.l.b16 %v1289
        %v1342 = vunpack.c.l.b16 %v1290
        %v1343 = vunpack.c.l.b16 %v1291
        %v1344 = vunpack.c.l.b16 %v1292
        %v1345 = vunpack.c.l.b16 %v1293
        %v1346 = vunpack.c.l.b16 %v1294
        %v1347 = vunpack.c.l.b16 %v1295
        %v1348 = vunpack.c.l.b16 %v1296
        %v1349 = vunpack.c.l.b16 %v1297
        %v1350 = vunpack.c.l.b16 %v1298
        %v1351 = vunpack.c.l.b16 %v1299
        %v1352 = vunpack.c.l.b16 %v1300
        %v1353 = vunpack.c.l.b16 %v1301
        %v1354 = vunpack.c.l.b16 %v1302
        %v1355 = vunpack.c.l.b16 %v1303
        %v1356 = vunpack.c.l.b16 %v1304
        %v1357 = vunpack.c.l.b16 %v1305
        %v1358 = vunpack.c.l.b16 %v1306
        %v1359 = vunpack.c.l.b16 %v1307
        %v1360 = vunpack.c.l.b16 %v1308
        %v1361 = vunpack.c.l.b16 %v1309
        %v1362 = vunpack.c.l.b16 %v1310
        %v1363 = vunpack.c.l.b16 %v1311
        %v1364 = vunpack.c.l.b16 %v1312
        %v1365 = vunpack.c.l.b16 %v1313
        %v1366 = vpack.c.b16 %v1341, %v1340
        %v1367 = vpack.c.b16 %v1343, %v1342
        %v1368 = vpack.c.b16 %v1345, %v1344
        %v1369 = vpack.c.b16 %v1347, %v1346
        %v1370 = vpack.c.b16 %v1349, %v1348
        %v1371 = vpack.c.b16 %v1351, %v1350
        %v1372 = vpack.c.b16 %v1353, %v1352
        %v1373 = vpack.c.b16 %v1355, %v1354
        %v1374 = vpack.c.b16 %v1357, %v1356
        %v1375 = vpack.c.b16 %v1359, %v1358
        %v1376 = vpack.c.b16 %v1361, %v1360
        %v1377 = vpack.c.b16 %v1363, %v1362
        %v1378 = vpack.c.b16 %v1365, %v1364
        %v1380 = vsel %vm737, %v1366, 0
        %v1383 = vsel %vm737, %v1367, 0
        %v1386 = vsel %vm737, %v1368, 0
        %v1389 = vsel %vm737, %v1369, 0
        %v1392 = vsel %vm737, %v1370, 0
        %v1395 = vsel %vm737, %v1371, 0
        %v1398 = vsel %vm737, %v1372, 0
        %v1401 = vsel %vm737, %v1373, 0
        %v1404 = vsel %vm737, %v1374, 0
        %v1407 = vsel %vm737, %v1375, 0
        %v1410 = vsel %vm737, %v1376, 0
        %v1413 = vsel %vm737, %v1377, 0
        %v1416 = vsel %vm737, %v1378, 0
        %1418 = vmatpush.bf16.msra.mxu0 0
        %1419 = vmatpush.bf16.msra.mxu0 0
        %1420 = vmatpush.bf16.msra.mxu0 0
        %1421 = vmatpush.bf16.msra.mxu0 0
        %1422 = vmatpush.bf16.msra.mxu0 0
        %1423 = vmatpush.bf16.msra.mxu0 0
        %1424 = vmatpush.bf16.msra.mxu0 %v734
        %1425 = vmatpush.bf16.msra.mxu0 %v733
        %1426 = vmatmul.bf16.gmra.mxu0 %v1380
        %v1427 = vpop.f32.mrf.mxu0
        %v1428 = vadd.f32 0.0, %v1427
        %v1429 = vpop.f32.mrf.mxu0
        %v1430 = vadd.f32 0.0, %v1429
        %1431 = vmatmul.bf16.gmra.mxu0 %v1383
        %v1432 = vpop.f32.mrf.mxu0
        %v1433 = vadd.f32 0.0, %v1432
        %v1434 = vpop.f32.mrf.mxu0
        %v1435 = vadd.f32 0.0, %v1434
        %1436 = vmatmul.bf16.gmra.mxu0 %v1386
        %v1437 = vpop.f32.mrf.mxu0
        %v1438 = vadd.f32 0.0, %v1437
        %v1439 = vpop.f32.mrf.mxu0
        %v1440 = vadd.f32 0.0, %v1439
        %1441 = vmatmul.bf16.gmra.mxu0 %v1389
        %v1442 = vpop.f32.mrf.mxu0
        %v1443 = vadd.f32 0.0, %v1442
        %v1444 = vpop.f32.mrf.mxu0
        %v1445 = vadd.f32 0.0, %v1444
        %1446 = vmatmul.bf16.gmra.mxu0 %v1392
        %v1447 = vpop.f32.mrf.mxu0
        %v1448 = vadd.f32 0.0, %v1447
        %v1449 = vpop.f32.mrf.mxu0
        %v1450 = vadd.f32 0.0, %v1449
        %1451 = vmatmul.bf16.gmra.mxu0 %v1395
        %v1452 = vpop.f32.mrf.mxu0
        %v1453 = vadd.f32 0.0, %v1452
        %v1454 = vpop.f32.mrf.mxu0
        %v1455 = vadd.f32 0.0, %v1454
        %1456 = vmatmul.bf16.gmra.mxu0 %v1398
        %v1457 = vpop.f32.mrf.mxu0
        %v1458 = vadd.f32 0.0, %v1457
        %v1459 = vpop.f32.mrf.mxu0
        %v1460 = vadd.f32 0.0, %v1459
        %1461 = vmatmul.bf16.gmra.mxu0 %v1401
        %v1462 = vpop.f32.mrf.mxu0
        %v1463 = vadd.f32 0.0, %v1462
        %v1464 = vpop.f32.mrf.mxu0
        %v1465 = vadd.f32 0.0, %v1464
        %1466 = vmatmul.bf16.gmra.mxu0 %v1404
        %v1467 = vpop.f32.mrf.mxu0
        %v1468 = vadd.f32 0.0, %v1467
        %v1469 = vpop.f32.mrf.mxu0
        %v1470 = vadd.f32 0.0, %v1469
        %1471 = vmatmul.bf16.gmra.mxu0 %v1407
        %v1472 = vpop.f32.mrf.mxu0
        %v1473 = vadd.f32 0.0, %v1472
        %v1474 = vpop.f32.mrf.mxu0
        %v1475 = vadd.f32 0.0, %v1474
        %1476 = vmatmul.bf16.gmra.mxu0 %v1410
        %v1477 = vpop.f32.mrf.mxu0
        %v1478 = vadd.f32 0.0, %v1477
        %v1479 = vpop.f32.mrf.mxu0
        %v1480 = vadd.f32 0.0, %v1479
        %1481 = vmatmul.bf16.gmra.mxu0 %v1413
        %v1482 = vpop.f32.mrf.mxu0
        %v1483 = vadd.f32 0.0, %v1482
        %v1484 = vpop.f32.mrf.mxu0
        %v1485 = vadd.f32 0.0, %v1484
        %1486 = vmatmul.bf16.gmra.mxu0 %v1416
        %v1487 = vpop.f32.mrf.mxu0
        %v1488 = vadd.f32 0.0, %v1487
        %v1489 = vpop.f32.mrf.mxu0
        %v1490 = vadd.f32 0.0, %v1489
        %1491 = vdwg.mxu0
        %v1492 = vmax.f32 %v1223, %v1428
        %v1493 = vmax.f32 %v1225, %v1430
        %v1494 = vmax.f32 %v1228, %v1433
        %v1495 = vmax.f32 %v1230, %v1435
        %v1496 = vmax.f32 %v1233, %v1438
        %v1497 = vmax.f32 %v1235, %v1440
        %v1498 = vmax.f32 %v1238, %v1443
        %v1499 = vmax.f32 %v1240, %v1445
        %v1500 = vmax.f32 %v1243, %v1448
        %v1501 = vmax.f32 %v1245, %v1450
        %v1502 = vmax.f32 %v1248, %v1453
        %v1503 = vmax.f32 %v1250, %v1455
        %v1504 = vmax.f32 %v1253, %v1458
        %v1505 = vmax.f32 %v1255, %v1460
        %v1506 = vmax.f32 %v1258, %v1463
        %v1507 = vmax.f32 %v1260, %v1465
        %v1508 = vmax.f32 %v1263, %v1468
        %v1509 = vmax.f32 %v1265, %v1470
        %v1510 = vmax.f32 %v1268, %v1473
        %v1511 = vmax.f32 %v1270, %v1475
        %v1512 = vmax.f32 %v1273, %v1478
        %v1513 = vmax.f32 %v1275, %v1480
        %v1514 = vmax.f32 %v1278, %v1483
        %v1515 = vmax.f32 %v1280, %v1485
        %v1516 = vmax.f32 %v1283, %v1488
        %v1517 = vmax.f32 %v1285, %v1490
        %v1518 = vmax.f32 %v1056, %v1492
        %v1519 = vmax.f32 %v1057, %v1493
        %v1520 = vmax.f32 %v1058, %v1494
        %v1521 = vmax.f32 %v1059, %v1495
        %v1522 = vmax.f32 %v1060, %v1496
        %v1523 = vmax.f32 %v1061, %v1497
        %v1524 = vmax.f32 %v1062, %v1498
        %v1525 = vmax.f32 %v1063, %v1499
        %v1526 = vmax.f32 %v1064, %v1500
        %v1527 = vmax.f32 %v1065, %v1501
        %v1528 = vmax.f32 %v1066, %v1502
        %v1529 = vmax.f32 %v1067, %v1503
        %v1530 = vmax.f32 %v1068, %v1504
        %v1531 = vmax.f32 %v1069, %v1505
        %v1532 = vmax.f32 %v1070, %v1506
        %v1533 = vmax.f32 %v1071, %v1507
        %v1534 = vmax.f32 %v1072, %v1508
        %v1535 = vmax.f32 %v1073, %v1509
        %v1536 = vmax.f32 %v1074, %v1510
        %v1537 = vmax.f32 %v1075, %v1511
        %v1538 = vmax.f32 %v1076, %v1512
        %v1539 = vmax.f32 %v1077, %v1513
        %v1540 = vmax.f32 %v1078, %v1514
        %v1541 = vmax.f32 %v1079, %v1515
        %v1542 = vmax.f32 %v1080, %v1516
        %v1543 = vmax.f32 %v1081, %v1517
        %v1544 = vld [vmem:[%s2] sm:$0x1]
        %v1546 = vperm.slane %v1544, 0
        %v1548 = vadd.f32 %v1518, %v1546
        %v1549 = vadd.f32 %v1519, %v1546
        %v1550 = vadd.f32 %v1520, %v1546
        %v1551 = vadd.f32 %v1521, %v1546
        %v1552 = vadd.f32 %v1522, %v1546
        %v1553 = vadd.f32 %v1523, %v1546
        %v1554 = vadd.f32 %v1524, %v1546
        %v1555 = vadd.f32 %v1525, %v1546
        %v1556 = vadd.f32 %v1526, %v1546
        %v1557 = vadd.f32 %v1527, %v1546
        %v1558 = vadd.f32 %v1528, %v1546
        %v1559 = vadd.f32 %v1529, %v1546
        %v1560 = vadd.f32 %v1530, %v1546
        %v1561 = vadd.f32 %v1531, %v1546
        %v1562 = vadd.f32 %v1532, %v1546
        %v1563 = vadd.f32 %v1533, %v1546
        %v1564 = vadd.f32 %v1534, %v1546
        %v1565 = vadd.f32 %v1535, %v1546
        %v1566 = vadd.f32 %v1536, %v1546
        %v1567 = vadd.f32 %v1537, %v1546
        %v1568 = vadd.f32 %v1538, %v1546
        %v1569 = vadd.f32 %v1539, %v1546
        %v1570 = vadd.f32 %v1540, %v1546
        %v1571 = vadd.f32 %v1541, %v1546
        %v1572 = vadd.f32 %v1542, %v1546
        %v1573 = vadd.f32 %v1543, %v1546
        %v1574 = vmax.f32 %v1548, 0.0
        %v1575 = vmax.f32 %v1549, 0.0
        %v1576 = vmax.f32 %v1550, 0.0
        %v1577 = vmax.f32 %v1551, 0.0
        %v1578 = vmax.f32 %v1552, 0.0
        %v1579 = vmax.f32 %v1553, 0.0
        %v1580 = vmax.f32 %v1554, 0.0
        %v1581 = vmax.f32 %v1555, 0.0
        %v1582 = vmax.f32 %v1556, 0.0
        %v1583 = vmax.f32 %v1557, 0.0
        %v1584 = vmax.f32 %v1558, 0.0
        %v1585 = vmax.f32 %v1559, 0.0
        %v1586 = vmax.f32 %v1560, 0.0
        %v1587 = vmax.f32 %v1561, 0.0
        %v1588 = vmax.f32 %v1562, 0.0
        %v1589 = vmax.f32 %v1563, 0.0
        %v1590 = vmax.f32 %v1564, 0.0
        %v1591 = vmax.f32 %v1565, 0.0
        %v1592 = vmax.f32 %v1566, 0.0
        %v1593 = vmax.f32 %v1567, 0.0
        %v1594 = vmax.f32 %v1568, 0.0
        %v1595 = vmax.f32 %v1569, 0.0
        %v1596 = vmax.f32 %v1570, 0.0
        %v1597 = vmax.f32 %v1571, 0.0
        %v1598 = vmax.f32 %v1572, 0.0
        %v1599 = vmax.f32 %v1573, 0.0
        %v1600 = vpack.c.bf16 %v1574, %v1574
        %v1601 = vpack.c.bf16 %v1575, %v1575
        %v1602 = vpack.c.bf16 %v1576, %v1576
        %v1603 = vpack.c.bf16 %v1577, %v1577
        %v1604 = vpack.c.bf16 %v1578, %v1578
        %v1605 = vpack.c.bf16 %v1579, %v1579
        %v1606 = vpack.c.bf16 %v1580, %v1580
        %v1607 = vpack.c.bf16 %v1581, %v1581
        %v1608 = vpack.c.bf16 %v1582, %v1582
        %v1609 = vpack.c.bf16 %v1583, %v1583
        %v1610 = vpack.c.bf16 %v1584, %v1584
        %v1611 = vpack.c.bf16 %v1585, %v1585
        %v1612 = vpack.c.bf16 %v1586, %v1586
        %v1613 = vpack.c.bf16 %v1587, %v1587
        %v1614 = vpack.c.bf16 %v1588, %v1588
        %v1615 = vpack.c.bf16 %v1589, %v1589
        %v1616 = vpack.c.bf16 %v1590, %v1590
        %v1617 = vpack.c.bf16 %v1591, %v1591
        %v1618 = vpack.c.bf16 %v1592, %v1592
        %v1619 = vpack.c.bf16 %v1593, %v1593
        %v1620 = vpack.c.bf16 %v1594, %v1594
        %v1621 = vpack.c.bf16 %v1595, %v1595
        %v1622 = vpack.c.bf16 %v1596, %v1596
        %v1623 = vpack.c.bf16 %v1597, %v1597
        %v1624 = vpack.c.bf16 %v1598, %v1598
        %v1625 = vpack.c.bf16 %v1599, %v1599
        %1626 = vst [vmem:[%s627] sm:$0xf] %v1600
        %1627 = vst [vmem:[%s627 + $0x4] sm:$0xf] %v1601
        %1628 = vst [vmem:[%s627 + $0x8] sm:$0xf] %v1602
        %1629 = vst [vmem:[%s627 + $0xc] sm:$0xf] %v1603
        %1630 = vst [vmem:[%s627 + $0x10] sm:$0xf] %v1604
        %1631 = vst [vmem:[%s627 + $0x14] sm:$0xf] %v1605
        %1632 = vst [vmem:[%s627 + $0x18] sm:$0xf] %v1606
        %1633 = vst [vmem:[%s627 + $0x1c] sm:$0xf] %v1607
        %1634 = vst [vmem:[%s627 + $0x20] sm:$0xf] %v1608
        %1635 = vst [vmem:[%s627 + $0x24] sm:$0xf] %v1609
        %1636 = vst [vmem:[%s627 + $0x28] sm:$0xf] %v1610
        %1637 = vst [vmem:[%s627 + $0x2c] sm:$0xf] %v1611
        %1638 = vst [vmem:[%s627 + $0x30] sm:$0xf] %v1612
        %1639 = vst [vmem:[%s627 + $0x34] sm:$0xf] %v1613
        %1640 = vst [vmem:[%s627 + $0x38] sm:$0xf] %v1614
        %1641 = vst [vmem:[%s627 + $0x3c] sm:$0xf] %v1615
        %1642 = vst [vmem:[%s627 + $0x40] sm:$0xf] %v1616
        %1643 = vst [vmem:[%s627 + $0x44] sm:$0xf] %v1617
        %1644 = vst [vmem:[%s627 + $0x48] sm:$0xf] %v1618
        %1645 = vst [vmem:[%s627 + $0x4c] sm:$0xf] %v1619
        %1646 = vst [vmem:[%s627 + $0x50] sm:$0xf] %v1620
        %1647 = vst [vmem:[%s627 + $0x54] sm:$0xf] %v1621
        %1648 = vst [vmem:[%s627 + $0x58] sm:$0xf] %v1622
        %1649 = vst [vmem:[%s627 + $0x5c] sm:$0xf] %v1623
        %1650 = vst [vmem:[%s627 + $0x60] sm:$0xf] %v1624
        %1651 = vst [vmem:[%s627 + $0x64] sm:$0xf] %v1625
        %s1652 = smul.u32 26, %s14
        %p1653 = scmp.lt.s32.totalorder %s1652, 51
        %s1654 = scalar_select %p1653, %s1652, 51
        %s1655 = smul.addr %s1654, 4
        %s1656 = scalar_lea.vmem %s3, %s1655
        // Predicated region
        $region74: #{forward.3} parent=68 // pred_check
          %p1657 = pneg %p100
        $region75: #{forward.3} parent=68 // pred_check_branch
          %1659 = sbr.rel (%p1657) target = $region77
        $region76: #{forward.3} parent=68 // pred_region
          %s1660 = smul.u32 26, %s14
        $region77: #{forward.3} parent=68 // pred_fallthru
          _
      $region69: #{forward.3} parent=5 // pred_fallthru
        _
      %p1661 = scmp.le.s32.totalorder 2, %s9
      // Predicated region
      $region78: #{forward.3} parent=5 // pred_check
        %p1662 = pneg %p1661
      $region79: #{forward.3} parent=5 // pred_check_branch
        %1664 = sbr.rel (%p1662) target = $region81
      $region80: #{forward.3} parent=5 // pred_region
        %s1665 = ssub.s32 %s9, 2
        // Predicated region
        $region82: #{forward.3} parent=80 // pred_check
          %p1666 = pneg %p106
        $region83: #{forward.3} parent=80 // pred_check_branch
          %1668 = sbr.rel (%p1666) target = $region85
        $region84: #{forward.3} parent=80 // pred_region
          %s1669 = smul.u32 26, %s15
          %p1670 = scmp.lt.s32.totalorder %s1669, 51
          %s1671 = scalar_select %p1670, %s1669, 51
          %s1672 = smul.addr %s1671, 4
          %s1673 = scalar_lea.vmem %s3, %s1672
        $region85: #{forward.3} parent=80 // pred_fallthru
          _
      $region81: #{forward.3} parent=5 // pred_fallthru
        _
    $region6: #{forward.3} parent=1 // loop_footer
      %s13 = sadd.s32 1, %s9
    $region7: #{forward.3} parent=1 // loop_footer_branch
      %8 = sbr.rel target = $region3
    $region8: #{forward.3} parent=1 // loop_exit
      _

// kernel: forward.4
$region0: #{forward.4}
  #allocation0 [shape = 'u32[]', space=smem, size = 0x4, offset = 0x4, fixed_abs, tag = 'smem constant byte address 0x4 - core index']
  #allocation1 [shape = 'u32[72,128]{1,0:T(1,128)}', space=vmem, size = 0x9000, scoped, tag = 'internal scratch']
  %s0 = inlined_call_operand.vmem [shape: bf16[4,128,400], index: 0, kind: input, shape index: {}]
  %s1 = inlined_call_operand.vmem [shape: bf16[400,128], index: 1, kind: input, shape index: {}]
  %s2 = inlined_call_operand.vmem [shape: f32[1,128], index: 2, kind: input, shape index: {}]
  %s3 = inlined_call_operand.vmem [shape: bf16[128,128], index: 3, kind: output, shape index: {}]
  %s4 = sld [smem:[#allocation0]]
  $region68: #{forward.4} parent=0
    _
  %s6 = ssub.s32 1, %s4
  %s7 = scalar_select 0, %s6, %s4
  $region1: #{forward.4} parent=0
    #allocation2 [shape = 'u8[524288]{0}', space=vmem, size = 0x80000, scoped, tag = 'input window, operand 0']
    loop: start=0, step=1, limit=4
    $region2: #{forward.4} parent=1 // loop_pre_header
      _
    $region3: #{forward.4} parent=1 // loop_header
      %s9 = sphi 0, %s13
      %p10 = scmp.ge.s32.totalorder %s9, 4
      %s19 = sphi 0, %s21
      %s22 = sphi 0, %s19
      %s23 = sphi 0, %s22
      %s39 = sphi 0, %s23
      %s43 = sphi 0, %s43
      %s45 = sphi 0, %s43
      %s46 = sphi 0, %s45
      %s60 = sphi 0, %s46
      %s64 = sphi 0, %s64
      %s66 = sphi 0, %s64
      %s67 = sphi 0, %s66
      %s81 = sphi 0, %s67
      %s87 = sphi 0, %s89
      %s90 = sphi 0, %s87
      %s91 = sphi 0, %s90
      %s107 = sphi 0, %s91
    $region4: #{forward.4} parent=1 // loop_header_branch
      %12 = sbr.rel (%p10) target = $region8
    $region5: #{forward.4} parent=1 // loop_body
      %s14 = ssub.s32 %s9, 1
      %s15 = ssub.s32 %s9, 2
      %s16 = sadd.s32 %s9, 1
      %s17 = ssub.s32 %s9, %s16
      %p18 = scmp.eq.s32.totalorder %s17, 0
      %s20 = sadd.s32 %s19, 1
      %s21 = scalar_select %p18, %s19, %s20
      %p24 = pneg %p18
      %p25 = scmp.eq.s32.totalorder %s9, 1
      %p26 = por %p24, %p25
      %p27 = scmp.ne.s32.totalorder %s19, %s22
      %p28 = scmp.eq.s32.totalorder %s9, 0
      %p29 = por %p27, %p28
      %p30 = scmp.ne.s32.totalorder %s19, %s22
      %p31 = scmp.eq.s32.totalorder %s14, 1
      %p32 = por %p30, %p31
      %p33 = scmp.ne.s32.totalorder %s22, %s23
      %p34 = scmp.eq.s32.totalorder %s14, 0
      %p35 = por %p33, %p34
      %p36 = scmp.ne.s32.totalorder %s22, %s23
      %p37 = scmp.eq.s32.totalorder %s15, 1
      %p38 = por %p36, %p37
      %p40 = scmp.ne.s32.totalorder %s23, %s39
      %p41 = scmp.eq.s32.totalorder %s15, 0
      %p42 = por %p40, %p41
      %s44 = sadd.s32 %s43, 1
      %p47 = scmp.eq.s32.totalorder %s9, 1
      %p48 = scmp.ne.s32.totalorder %s43, %s45
      %p49 = scmp.eq.s32.totalorder %s9, 0
      %p50 = por %p48, %p49
      %p51 = scmp.ne.s32.totalorder %s43, %s45
      %p52 = scmp.eq.s32.totalorder %s14, 1
      %p53 = por %p51, %p52
      %p54 = scmp.ne.s32.totalorder %s45, %s46
      %p55 = scmp.eq.s32.totalorder %s14, 0
      %p56 = por %p54, %p55
      %p57 = scmp.ne.s32.totalorder %s45, %s46
      %p58 = scmp.eq.s32.totalorder %s15, 1
      %p59 = por %p57, %p58
      %p61 = scmp.ne.s32.totalorder %s46, %s60
      %p62 = scmp.eq.s32.totalorder %s15, 0
      %p63 = por %p61, %p62
      %s65 = sadd.s32 %s64, 1
      %p68 = scmp.eq.s32.totalorder %s9, 1
      %p69 = scmp.ne.s32.totalorder %s64, %s66
      %p70 = scmp.eq.s32.totalorder %s9, 0
      %p71 = por %p69, %p70
      %p72 = scmp.ne.s32.totalorder %s64, %s66
      %p73 = scmp.eq.s32.totalorder %s14, 1
      %p74 = por %p72, %p73
      %p75 = scmp.ne.s32.totalorder %s66, %s67
      %p76 = scmp.eq.s32.totalorder %s14, 0
      %p77 = por %p75, %p76
      %p78 = scmp.ne.s32.totalorder %s66, %s67
      %p79 = scmp.eq.s32.totalorder %s15, 1
      %p80 = por %p78, %p79
      %p82 = scmp.ne.s32.totalorder %s67, %s81
      %p83 = scmp.eq.s32.totalorder %s15, 0
      %p84 = por %p82, %p83
      %s85 = ssub.s32 %s9, %s16
      %p86 = scmp.eq.s32.totalorder %s85, 0
      %s88 = sadd.s32 %s87, 1
      %s89 = scalar_select %p86, %s87, %s88
      %p92 = pneg %p86
      %p93 = scmp.eq.s32.totalorder %s9, 1
      %p94 = por %p92, %p93
      %p95 = scmp.ne.s32.totalorder %s87, %s90
      %p96 = scmp.eq.s32.totalorder %s9, 0
      %p97 = por %p95, %p96
      %p98 = scmp.ne.s32.totalorder %s87, %s90
      %p99 = scmp.eq.s32.totalorder %s14, 1
      %p100 = por %p98, %p99
      %p101 = scmp.ne.s32.totalorder %s90, %s91
      %p102 = scmp.eq.s32.totalorder %s14, 0
      %p103 = por %p101, %p102
      %p104 = scmp.ne.s32.totalorder %s90, %s91
      %p105 = scmp.eq.s32.totalorder %s15, 1
      %p106 = por %p104, %p105
      %p108 = scmp.ne.s32.totalorder %s91, %s107
      %p109 = scmp.eq.s32.totalorder %s15, 0
      %p110 = por %p108, %p109
      %p111 = scmp.le.s32.totalorder 1, %s9
      %p112 = scmp.lt.s32.totalorder %s9, 3
      %p113 = pnand %p111, %p112
      %p114 = pneg %p113
      // Predicated region
      $region9: #{forward.4} parent=5 // pred_check
        _
      $region10: #{forward.4} parent=5 // pred_check_branch
        %116 = sbr.rel (%p113) target = $region12
      $region11: #{forward.4} parent=5 // pred_region
        %s117 = ssub.s32 %s9, 1
        // Predicated region
        $region13: #{forward.4} parent=11 // pred_check
          %p118 = pneg %p56
        $region14: #{forward.4} parent=11 // pred_check_branch
          %120 = sbr.rel (%p118) target = $region16
        $region15: #{forward.4} parent=11 // pred_region
          _
        $region16: #{forward.4} parent=11 // pred_fallthru
          _
        // Predicated region
        $region17: #{forward.4} parent=11 // pred_check
          %p121 = pneg %p77
        $region18: #{forward.4} parent=11 // pred_check_branch
          %123 = sbr.rel (%p121) target = $region20
        $region19: #{forward.4} parent=11 // pred_region
          _
        $region20: #{forward.4} parent=11 // pred_fallthru
          _
      $region12: #{forward.4} parent=5 // pred_fallthru
        _
      %p124 = scmp.lt.s32.totalorder %s9, 2
      // Predicated region
      $region21: #{forward.4} parent=5 // pred_check
        %p125 = pneg %p124
      $region22: #{forward.4} parent=5 // pred_check_branch
        %127 = sbr.rel (%p125) target = $region24
      $region23: #{forward.4} parent=5 // pred_region
        // Predicated region
        $region25: #{forward.4} parent=23 // pred_check
          %p128 = pneg %p29
        $region26: #{forward.4} parent=23 // pred_check_branch
          %130 = sbr.rel (%p128) target = $region28
        $region27: #{forward.4} parent=23 // pred_region
          %s131 = sand.u32 %s19, 1
          %s132 = sand.u32 %s19, 1
          %s133 = smul.addr %s132, 512
          %s134 = scalar_lea.vmem [#allocation2], %s133
          %s135 = smul.u32 8, %s9
          %s136 = smul.addr %s135, 4
          %s137 = smul.addr %s136, 4
          %s138 = scalar_lea.vmem %s0, %s137
          // Predicated region
          $region29: #{forward.4} parent=27 // pred_check
            _
          $region30: #{forward.4} parent=27 // pred_check_branch
            %140 = sbr.rel (0) target = $region32
          $region31: #{forward.4} parent=27 // pred_region
            // Predicated region
            $region33: #{forward.4} parent=31 // pred_check
              _
            $region34: #{forward.4} parent=31 // pred_check_branch
              %142 = sbr.rel (0) target = $region36
            $region35: #{forward.4} parent=31 // pred_region
              loop: start=0, step=1, limit=1
              $region37: #{forward.4} parent=35 // loop_pre_header
                _
              $region38: #{forward.4} parent=35 // loop_header
                %s144 = sphi 0, %s148
                %p145 = scmp.ge.s32.totalorder %s144, 1
                %s149 = sphi %s138, %s138
                %s150 = sphi %s134, %s134
              $region39: #{forward.4} parent=35 // loop_header_branch
                %147 = sbr.rel (%p145) target = $region43
              $region40: #{forward.4} parent=35 // loop_body
                %v151 = vld [vmem:[%s149] sm:$0xff]
                %152 = vst [vmem:[%s150] sm:$0xff] %v151
                %v153 = vld [vmem:[%s149 + $0x8] sm:$0xff]
                %154 = vst [vmem:[%s150 + $0x8] sm:$0xff] %v153
                %v155 = vld [vmem:[%s149 + $0x10] sm:$0xff]
                %156 = vst [vmem:[%s150 + $0x10] sm:$0xff] %v155
                %v157 = vld [vmem:[%s149 + $0x18] sm:$0xff]
                %158 = vst [vmem:[%s150 + $0x18] sm:$0xff] %v157
                %v159 = vld [vmem:[%s149 + $0x20] sm:$0xff]
                %160 = vst [vmem:[%s150 + $0x20] sm:$0xff] %v159
                %v161 = vld [vmem:[%s149 + $0x28] sm:$0xff]
                %162 = vst [vmem:[%s150 + $0x28] sm:$0xff] %v161
                %v163 = vld [vmem:[%s149 + $0x30] sm:$0xff]
                %164 = vst [vmem:[%s150 + $0x30] sm:$0xff] %v163
                %v165 = vld [vmem:[%s149 + $0x38] sm:$0xff]
                %166 = vst [vmem:[%s150 + $0x38] sm:$0xff] %v165
                %v167 = vld [vmem:[%s149 + $0x40] sm:$0xff]
                %168 = vst [vmem:[%s150 + $0x40] sm:$0xff] %v167
                %v169 = vld [vmem:[%s149 + $0x48] sm:$0xff]
                %170 = vst [vmem:[%s150 + $0x48] sm:$0xff] %v169
                %v171 = vld [vmem:[%s149 + $0x50] sm:$0xff]
                %172 = vst [vmem:[%s150 + $0x50] sm:$0xff] %v171
                %v173 = vld [vmem:[%s149 + $0x58] sm:$0xff]
                %174 = vst [vmem:[%s150 + $0x58] sm:$0xff] %v173
                %v175 = vld [vmem:[%s149 + $0x60] sm:$0xff]
                %176 = vst [vmem:[%s150 + $0x60] sm:$0xff] %v175
                %v177 = vld [vmem:[%s149 + $0x68] sm:$0xff]
                %178 = vst [vmem:[%s150 + $0x68] sm:$0xff] %v177
                %v179 = vld [vmem:[%s149 + $0x70] sm:$0xff]
                %180 = vst [vmem:[%s150 + $0x70] sm:$0xff] %v179
                %v181 = vld [vmem:[%s149 + $0x78] sm:$0xff]
                %182 = vst [vmem:[%s150 + $0x78] sm:$0xff] %v181
                %v183 = vld [vmem:[%s149 + $0x100] sm:$0xff]
                %184 = vst [vmem:[%s150 + $0x80] sm:$0xff] %v183
                %v185 = vld [vmem:[%s149 + $0x108] sm:$0xff]
                %186 = vst [vmem:[%s150 + $0x88] sm:$0xff] %v185
                %v187 = vld [vmem:[%s149 + $0x110] sm:$0xff]
                %188 = vst [vmem:[%s150 + $0x90] sm:$0xff] %v187
                %v189 = vld [vmem:[%s149 + $0x118] sm:$0xff]
                %190 = vst [vmem:[%s150 + $0x98] sm:$0xff] %v189
                %v191 = vld [vmem:[%s149 + $0x120] sm:$0xff]
                %192 = vst [vmem:[%s150 + $0xa0] sm:$0xff] %v191
                %v193 = vld [vmem:[%s149 + $0x128] sm:$0xff]
                %194 = vst [vmem:[%s150 + $0xa8] sm:$0xff] %v193
                %v195 = vld [vmem:[%s149 + $0x130] sm:$0xff]
                %196 = vst [vmem:[%s150 + $0xb0] sm:$0xff] %v195
                %v197 = vld [vmem:[%s149 + $0x138] sm:$0xff]
                %198 = vst [vmem:[%s150 + $0xb8] sm:$0xff] %v197
                %v199 = vld [vmem:[%s149 + $0x140] sm:$0xff]
                %200 = vst [vmem:[%s150 + $0xc0] sm:$0xff] %v199
                %v201 = vld [vmem:[%s149 + $0x148] sm:$0xff]
                %202 = vst [vmem:[%s150 + $0xc8] sm:$0xff] %v201
                %v203 = vld [vmem:[%s149 + $0x150] sm:$0xff]
                %204 = vst [vmem:[%s150 + $0xd0] sm:$0xff] %v203
                %v205 = vld [vmem:[%s149 + $0x158] sm:$0xff]
                %206 = vst [vmem:[%s150 + $0xd8] sm:$0xff] %v205
                %v207 = vld [vmem:[%s149 + $0x160] sm:$0xff]
                %208 = vst [vmem:[%s150 + $0xe0] sm:$0xff] %v207
                %v209 = vld [vmem:[%s149 + $0x168] sm:$0xff]
                %210 = vst [vmem:[%s150 + $0xe8] sm:$0xff] %v209
                %v211 = vld [vmem:[%s149 + $0x170] sm:$0xff]
                %212 = vst [vmem:[%s150 + $0xf0] sm:$0xff] %v211
                %v213 = vld [vmem:[%s149 + $0x178] sm:$0xff]
                %214 = vst [vmem:[%s150 + $0xf8] sm:$0xff] %v213
                %v215 = vld [vmem:[%s149 + $0x200] sm:$0xff]
                %216 = vst [vmem:[%s150 + $0x100] sm:$0xff] %v215
                %v217 = vld [vmem:[%s149 + $0x208] sm:$0xff]
                %218 = vst [vmem:[%s150 + $0x108] sm:$0xff] %v217
                %v219 = vld [vmem:[%s149 + $0x210] sm:$0xff]
                %220 = vst [vmem:[%s150 + $0x110] sm:$0xff] %v219
                %v221 = vld [vmem:[%s149 + $0x218] sm:$0xff]
                %222 = vst [vmem:[%s150 + $0x118] sm:$0xff] %v221
                %v223 = vld [vmem:[%s149 + $0x220] sm:$0xff]
                %224 = vst [vmem:[%s150 + $0x120] sm:$0xff] %v223
                %v225 = vld [vmem:[%s149 + $0x228] sm:$0xff]
                %226 = vst [vmem:[%s150 + $0x128] sm:$0xff] %v225
                %v227 = vld [vmem:[%s149 + $0x230] sm:$0xff]
                %228 = vst [vmem:[%s150 + $0x130] sm:$0xff] %v227
                %v229 = vld [vmem:[%s149 + $0x238] sm:$0xff]
                %230 = vst [vmem:[%s150 + $0x138] sm:$0xff] %v229
                %v231 = vld [vmem:[%s149 + $0x240] sm:$0xff]
                %232 = vst [vmem:[%s150 + $0x140] sm:$0xff] %v231
                %v233 = vld [vmem:[%s149 + $0x248] sm:$0xff]
                %234 = vst [vmem:[%s150 + $0x148] sm:$0xff] %v233
                %v235 = vld [vmem:[%s149 + $0x250] sm:$0xff]
                %236 = vst [vmem:[%s150 + $0x150] sm:$0xff] %v235
                %v237 = vld [vmem:[%s149 + $0x258] sm:$0xff]
                %238 = vst [vmem:[%s150 + $0x158] sm:$0xff] %v237
                %v239 = vld [vmem:[%s149 + $0x260] sm:$0xff]
                %240 = vst [vmem:[%s150 + $0x160] sm:$0xff] %v239
                %v241 = vld [vmem:[%s149 + $0x268] sm:$0xff]
                %242 = vst [vmem:[%s150 + $0x168] sm:$0xff] %v241
                %v243 = vld [vmem:[%s149 + $0x270] sm:$0xff]
                %244 = vst [vmem:[%s150 + $0x170] sm:$0xff] %v243
                %v245 = vld [vmem:[%s149 + $0x278] sm:$0xff]
                %246 = vst [vmem:[%s150 + $0x178] sm:$0xff] %v245
                %v247 = vld [vmem:[%s149 + $0x300] sm:$0xff]
                %248 = vst [vmem:[%s150 + $0x180] sm:$0xff] %v247
                %v249 = vld [vmem:[%s149 + $0x308] sm:$0xff]
                %250 = vst [vmem:[%s150 + $0x188] sm:$0xff] %v249
                %v251 = vld [vmem:[%s149 + $0x310] sm:$0xff]
                %252 = vst [vmem:[%s150 + $0x190] sm:$0xff] %v251
                %v253 = vld [vmem:[%s149 + $0x318] sm:$0xff]
                %254 = vst [vmem:[%s150 + $0x198] sm:$0xff] %v253
                %v255 = vld [vmem:[%s149 + $0x320] sm:$0xff]
                %256 = vst [vmem:[%s150 + $0x1a0] sm:$0xff] %v255
                %v257 = vld [vmem:[%s149 + $0x328] sm:$0xff]
                %258 = vst [vmem:[%s150 + $0x1a8] sm:$0xff] %v257
                %v259 = vld [vmem:[%s149 + $0x330] sm:$0xff]
                %260 = vst [vmem:[%s150 + $0x1b0] sm:$0xff] %v259
                %v261 = vld [vmem:[%s149 + $0x338] sm:$0xff]
                %262 = vst [vmem:[%s150 + $0x1b8] sm:$0xff] %v261
                %v263 = vld [vmem:[%s149 + $0x340] sm:$0xff]
                %264 = vst [vmem:[%s150 + $0x1c0] sm:$0xff] %v263
                %v265 = vld [vmem:[%s149 + $0x348] sm:$0xff]
                %266 = vst [vmem:[%s150 + $0x1c8] sm:$0xff] %v265
                %v267 = vld [vmem:[%s149 + $0x350] sm:$0xff]
                %268 = vst [vmem:[%s150 + $0x1d0] sm:$0xff] %v267
                %v269 = vld [vmem:[%s149 + $0x358] sm:$0xff]
                %270 = vst [vmem:[%s150 + $0x1d8] sm:$0xff] %v269
                %v271 = vld [vmem:[%s149 + $0x360] sm:$0xff]
                %272 = vst [vmem:[%s150 + $0x1e0] sm:$0xff] %v271
                %v273 = vld [vmem:[%s149 + $0x368] sm:$0xff]
                %274 = vst [vmem:[%s150 + $0x1e8] sm:$0xff] %v273
                %v275 = vld [vmem:[%s149 + $0x370] sm:$0xff]
                %276 = vst [vmem:[%s150 + $0x1f0] sm:$0xff] %v275
                %v277 = vld [vmem:[%s149 + $0x378] sm:$0xff]
                %278 = vst [vmem:[%s150 + $0x1f8] sm:$0xff] %v277
              $region41: #{forward.4} parent=35 // loop_footer
                %s148 = sadd.s32 1, %s144
              $region42: #{forward.4} parent=35 // loop_footer_branch
                %143 = sbr.rel target = $region38
              $region43: #{forward.4} parent=35 // loop_exit
                _
            $region36: #{forward.4} parent=31 // pred_fallthru
              _
            // Predicated region
            $region44: #{forward.4} parent=31 // pred_check
              _
            $region45: #{forward.4} parent=31 // pred_check_branch
              %280 = sbr.rel target = $region47
            $region46: #{forward.4} parent=31 // pred_region
              _
            $region47: #{forward.4} parent=31 // pred_fallthru
              _
          $region32: #{forward.4} parent=27 // pred_fallthru
            _
          %281 = vnop
        $region28: #{forward.4} parent=23 // pred_fallthru
          _
      $region24: #{forward.4} parent=5 // pred_fallthru
        _
      %p282 = scmp.le.s32.totalorder 1, %s9
      %p283 = scmp.lt.s32.totalorder %s9, 3
      %p284 = pnand %p282, %p283
      %p285 = pneg %p284
      // Predicated region
      $region48: #{forward.4} parent=5 // pred_check
        _
      $region49: #{forward.4} parent=5 // pred_check_branch
        %287 = sbr.rel (%p284) target = $region51
      $region50: #{forward.4} parent=5 // pred_region
        %s288 = ssub.s32 %s9, 1
        %s289 = sand.u32 %s22, 1
        %s290 = sand.u32 %s22, 1
        %s291 = smul.addr %s290, 512
        %s292 = scalar_lea.vmem [#allocation2], %s291
        // Predicated region
        $region52: #{forward.4} parent=50 // pred_check
          %p293 = pneg %p35
        $region53: #{forward.4} parent=50 // pred_check_branch
          %295 = sbr.rel (%p293) target = $region55
        $region54: #{forward.4} parent=50 // pred_region
          _
        $region55: #{forward.4} parent=50 // pred_fallthru
          _
        %s296 = sand.u32 %s22, 1
        %s297 = sand.u32 %s22, 1
        %s298 = smul.addr %s297, 512
        %s299 = scalar_lea.vmem [#allocation2], %s298
        %p300 = pneg %p35
        %p301 = pneg %p32
        %p302 = pneg %p56
        %p303 = pneg %p53
        %p304 = pneg %p77
        %p305 = pneg %p74
        %p306 = pneg %p103
        %p307 = pneg %p100
        %s308 = smul.u32 8, %s14
        %p309 = scmp.lt.s32.totalorder %s308, 15
        %s310 = scalar_select %p309, %s308, 15
        %s311 = smul.addr %s310, 4
        %s312 = scalar_lea.vmem %s3, %s311
        %s313 = smul.u32 8, %s14
        %s314 = smul.u32 8, %s14
        %p315 = scmp.lt.s32.totalorder %s314, 15
        %s316 = scalar_select %p315, %s314, 15
        %s317 = smul.addr %s316, 4
        %s318 = scalar_lea.vmem %s3, %s317
        %s319 = smul.u32 8, %s14
        %v321 = vld [vmem:[%s1] sm:$0xf]
        %v322 = vld [vmem:[%s1 + $0x4] sm:$0xf]
        %v323 = vld [vmem:[%s1 + $0x8] sm:$0xf]
        %v324 = vld [vmem:[%s1 + $0xc] sm:$0xf]
        %v325 = vld [vmem:[%s1 + $0x10] sm:$0xf]
        %v326 = vld [vmem:[%s1 + $0x14] sm:$0xf]
        %v327 = vld [vmem:[%s1 + $0x18] sm:$0xf]
        %v328 = vld [vmem:[%s1 + $0x1c] sm:$0xf]
        %v329 = vld [vmem:[%s1 + $0x20] sm:$0xf]
        %v330 = vld [vmem:[%s1 + $0x24] sm:$0xf]
        %v331 = vld [vmem:[%s1 + $0x28] sm:$0xf]
        %v332 = vld [vmem:[%s1 + $0x2c] sm:$0xf]
        %v333 = vld [vmem:[%s1 + $0x30] sm:$0xf]
        %v334 = vld [vmem:[%s1 + $0x34] sm:$0xf]
        %v335 = vld [vmem:[%s1 + $0x38] sm:$0xf]
        %v336 = vld [vmem:[%s1 + $0x3c] sm:$0xf]
        %v337 = vld [vmem:[%s1 + $0x40] sm:$0xf]
        %v338 = vld [vmem:[%s1 + $0x44] sm:$0xf]
        %v339 = vld [vmem:[%s1 + $0x48] sm:$0xf]
        %v340 = vld [vmem:[%s1 + $0x4c] sm:$0xf]
        %v341 = vld [vmem:[%s1 + $0x50] sm:$0xf]
        %v342 = vld [vmem:[%s1 + $0x54] sm:$0xf]
        %v343 = vld [vmem:[%s1 + $0x58] sm:$0xf]
        %v344 = vld [vmem:[%s1 + $0x5c] sm:$0xf]
        %v345 = vld [vmem:[%s1 + $0x60] sm:$0xf]
        %v346 = vld [vmem:[%s1 + $0x64] sm:$0xf]
        %v347 = vld [vmem:[%s1 + $0x68] sm:$0xf]
        %v348 = vld [vmem:[%s1 + $0x6c] sm:$0xf]
        %v349 = vld [vmem:[%s1 + $0x70] sm:$0xf]
        %v350 = vld [vmem:[%s1 + $0x74] sm:$0xf]
        %v351 = vld [vmem:[%s1 + $0x78] sm:$0xf]
        %v352 = vld [vmem:[%s1 + $0x7c] sm:$0xf]
        %v353 = vld [vmem:[%s1 + $0x80] sm:$0xf]
        %v354 = vld [vmem:[%s1 + $0x84] sm:$0xf]
        %v355 = vld [vmem:[%s1 + $0x88] sm:$0xf]
        %v356 = vld [vmem:[%s1 + $0x8c] sm:$0xf]
        %v357 = vld [vmem:[%s1 + $0x90] sm:$0xf]
        %v358 = vld [vmem:[%s1 + $0x94] sm:$0xf]
        %v359 = vld [vmem:[%s1 + $0x98] sm:$0xf]
        %v360 = vld [vmem:[%s1 + $0x9c] sm:$0xf]
        %v361 = vld [vmem:[%s1 + $0xa0] sm:$0xf]
        %v362 = vld [vmem:[%s1 + $0xa4] sm:$0xf]
        %v363 = vld [vmem:[%s1 + $0xa8] sm:$0xf]
        %v364 = vld [vmem:[%s1 + $0xac] sm:$0xf]
        %v365 = vld [vmem:[%s1 + $0xb0] sm:$0xf]
        %v366 = vld [vmem:[%s1 + $0xb4] sm:$0xf]
        %v367 = vld [vmem:[%s1 + $0xb8] sm:$0xf]
        %v368 = vld [vmem:[%s1 + $0xbc] sm:$0xf]
        %v369 = vld [vmem:[%s1 + $0xc0] sm:$0xf]
        %v370 = vld [vmem:[%s1 + $0xc4] sm:$0xf]
        %v371 = vld [vmem:[%s292] sm:$0xff]
        %v372 = vld [vmem:[%s292 + $0x8] sm:$0xff]
        %v373 = vld [vmem:[%s292 + $0x10] sm:$0xff]
        %v374 = vld [vmem:[%s292 + $0x18] sm:$0xff]
        %v375 = vld [vmem:[%s292 + $0x20] sm:$0xff]
        %v376 = vld [vmem:[%s292 + $0x28] sm:$0xff]
        %v377 = vld [vmem:[%s292 + $0x30] sm:$0xff]
        %v378 = vld [vmem:[%s292 + $0x38] sm:$0xff]
        %v379 = vld [vmem:[%s292 + $0x40] sm:$0xff]
        %v380 = vld [vmem:[%s292 + $0x48] sm:$0xff]
        %v381 = vld [vmem:[%s292 + $0x50] sm:$0xff]
        %v382 = vld [vmem:[%s292 + $0x58] sm:$0xff]
        %v383 = vld [vmem:[%s292 + $0x60] sm:$0xff]
        %v384 = vld [vmem:[%s292 + $0x68] sm:$0xff]
        %v385 = vld [vmem:[%s292 + $0x70] sm:$0xff]
        %v386 = vld [vmem:[%s292 + $0x78] sm:$0xff]
        %v403 = vunpack.c.l.b16 %v371
        %v404 = vunpack.c.h.b16 %v371
        %v405 = vunpack.c.l.b16 %v372
        %v406 = vunpack.c.h.b16 %v372
        %v407 = vunpack.c.l.b16 %v373
        %v408 = vunpack.c.h.b16 %v373
        %v409 = vunpack.c.l.b16 %v374
        %v410 = vunpack.c.h.b16 %v374
        %v411 = vunpack.c.l.b16 %v375
        %v412 = vunpack.c.h.b16 %v375
        %v413 = vunpack.c.l.b16 %v376
        %v414 = vunpack.c.h.b16 %v376
        %v415 = vunpack.c.l.b16 %v377
        %v416 = vunpack.c.h.b16 %v377
        %v417 = vunpack.c.l.b16 %v378
        %v418 = vunpack.c.h.b16 %v378
        %v419 = vunpack.c.l.b16 %v379
        %v420 = vunpack.c.h.b16 %v379
        %v421 = vunpack.c.l.b16 %v380
        %v422 = vunpack.c.h.b16 %v380
        %v423 = vunpack.c.l.b16 %v381
        %v424 = vunpack.c.h.b16 %v381
        %v425 = vunpack.c.l.b16 %v382
        %v426 = vunpack.c.h.b16 %v382
        %v427 = vunpack.c.l.b16 %v383
        %v428 = vunpack.c.h.b16 %v383
        %v429 = vunpack.c.l.b16 %v384
        %v430 = vunpack.c.h.b16 %v384
        %v431 = vunpack.c.l.b16 %v385
        %v432 = vunpack.c.h.b16 %v385
        %v433 = vunpack.c.l.b16 %v386
        %v434 = vunpack.c.h.b16 %v386
        %v435 = vpack.c.b16 %v407, %v403
        %v436 = vpack.c.b16 %v408, %v404
        %v437 = vpack.c.b16 %v409, %v405
        %v438 = vpack.c.b16 %v410, %v406
        %v439 = vpack.c.b16 %v415, %v411
        %v440 = vpack.c.b16 %v416, %v412
        %v441 = vpack.c.b16 %v417, %v413
        %v442 = vpack.c.b16 %v418, %v414
        %v443 = vpack.c.b16 %v423, %v419
        %v444 = vpack.c.b16 %v424, %v420
        %v445 = vpack.c.b16 %v425, %v421
        %v446 = vpack.c.b16 %v426, %v422
        %v447 = vpack.c.b16 %v431, %v427
        %v448 = vpack.c.b16 %v432, %v428
        %v449 = vpack.c.b16 %v433, %v429
        %v450 = vpack.c.b16 %v434, %v430
        %v513 = vunpack.c.l.b16 %v321
        %v514 = vunpack.c.l.b16 %v322
        %v515 = vunpack.c.l.b16 %v323
        %v516 = vunpack.c.l.b16 %v324
        %v517 = vunpack.c.l.b16 %v325
        %v518 = vunpack.c.l.b16 %v326
        %v519 = vunpack.c.l.b16 %v327
        %v520 = vunpack.c.l.b16 %v328
        %v521 = vunpack.c.l.b16 %v329
        %v522 = vunpack.c.l.b16 %v330
        %v523 = vunpack.c.l.b16 %v331
        %v524 = vunpack.c.l.b16 %v332
        %v525 = vunpack.c.l.b16 %v333
        %v526 = vunpack.c.l.b16 %v334
        %v527 = vunpack.c.l.b16 %v335
        %v528 = vunpack.c.l.b16 %v336
        %v529 = vunpack.c.l.b16 %v337
        %v530 = vunpack.c.l.b16 %v338
        %v531 = vunpack.c.l.b16 %v339
        %v532 = vunpack.c.l.b16 %v340
        %v533 = vunpack.c.l.b16 %v341
        %v534 = vunpack.c.l.b16 %v342
        %v535 = vunpack.c.l.b16 %v343
        %v536 = vunpack.c.l.b16 %v344
        %v537 = vunpack.c.l.b16 %v345
        %v538 = vunpack.c.l.b16 %v346
        %v539 = vunpack.c.l.b16 %v347
        %v540 = vunpack.c.l.b16 %v348
        %v541 = vunpack.c.l.b16 %v349
        %v542 = vunpack.c.l.b16 %v350
        %v543 = vunpack.c.l.b16 %v351
        %v544 = vunpack.c.l.b16 %v352
        %v545 = vunpack.c.l.b16 %v353
        %v546 = vunpack.c.l.b16 %v354
        %v547 = vunpack.c.l.b16 %v355
        %v548 = vunpack.c.l.b16 %v356
        %v549 = vunpack.c.l.b16 %v357
        %v550 = vunpack.c.l.b16 %v358
        %v551 = vunpack.c.l.b16 %v359
        %v552 = vunpack.c.l.b16 %v360
        %v553 = vunpack.c.l.b16 %v361
        %v554 = vunpack.c.l.b16 %v362
        %v555 = vunpack.c.l.b16 %v363
        %v556 = vunpack.c.l.b16 %v364
        %v557 = vunpack.c.l.b16 %v365
        %v558 = vunpack.c.l.b16 %v366
        %v559 = vunpack.c.l.b16 %v367
        %v560 = vunpack.c.l.b16 %v368
        %v561 = vunpack.c.l.b16 %v369
        %v562 = vunpack.c.l.b16 %v370
        %v563 = vpack.c.b16 %v514, %v513
        %v564 = vpack.c.b16 %v516, %v515
        %v565 = vpack.c.b16 %v518, %v517
        %v566 = vpack.c.b16 %v520, %v519
        %v567 = vpack.c.b16 %v522, %v521
        %v568 = vpack.c.b16 %v524, %v523
        %v569 = vpack.c.b16 %v526, %v525
        %v570 = vpack.c.b16 %v528, %v527
        %v571 = vpack.c.b16 %v530, %v529
        %v572 = vpack.c.b16 %v532, %v531
        %v573 = vpack.c.b16 %v534, %v533
        %v574 = vpack.c.b16 %v536, %v535
        %v575 = vpack.c.b16 %v538, %v537
        %v576 = vpack.c.b16 %v540, %v539
        %v577 = vpack.c.b16 %v542, %v541
        %v578 = vpack.c.b16 %v544, %v543
        %v579 = vpack.c.b16 %v546, %v545
        %v580 = vpack.c.b16 %v548, %v547
        %v581 = vpack.c.b16 %v550, %v549
        %v582 = vpack.c.b16 %v552, %v551
        %v583 = vpack.c.b16 %v554, %v553
        %v584 = vpack.c.b16 %v556, %v555
        %v585 = vpack.c.b16 %v558, %v557
        %v586 = vpack.c.b16 %v560, %v559
        %v587 = vpack.c.b16 %v562, %v561
        %vm613 = vcmask 130048
        %v615 = vsel %vm613, %v438, 0
        %v618 = vsel %vm613, %v442, 0
        %v621 = vsel %vm613, %v446, 0
        %v624 = vsel %vm613, %v450, 0
        %626 = vmatpush.bf16.msra.mxu0 %v570
        %627 = vmatpush.bf16.msra.mxu0 %v569
        %628 = vmatpush.bf16.msra.mxu0 %v568
        %629 = vmatpush.bf16.msra.mxu0 %v567
        %630 = vmatpush.bf16.msra.mxu0 %v566
        %631 = vmatpush.bf16.msra.mxu0 %v565
        %632 = vmatpush.bf16.msra.mxu0 %v564
        %633 = vmatpush.bf16.msra.mxu0 %v563
        %634 = vmatmul.bf16.gmra.mxu0 %v435
        %v635 = vpop.f32.mrf.mxu0
        %v636 = vadd.f32 0.0, %v635
        %v637 = vpop.f32.mrf.mxu0
        %v638 = vadd.f32 0.0, %v637
        %639 = vmatmul.bf16.gmra.mxu0 %v439
        %v640 = vpop.f32.mrf.mxu0
        %v641 = vadd.f32 0.0, %v640
        %v642 = vpop.f32.mrf.mxu0
        %v643 = vadd.f32 0.0, %v642
        %644 = vmatmul.bf16.gmra.mxu0 %v443
        %v645 = vpop.f32.mrf.mxu0
        %v646 = vadd.f32 0.0, %v645
        %v647 = vpop.f32.mrf.mxu0
        %v648 = vadd.f32 0.0, %v647
        %649 = vmatmul.bf16.gmra.mxu0 %v447
        %v650 = vpop.f32.mrf.mxu0
        %v651 = vadd.f32 0.0, %v650
        %v652 = vpop.f32.mrf.mxu0
        %v653 = vadd.f32 0.0, %v652
        %654 = vdwg.mxu0
        %655 = vmatpush.bf16.msra.mxu0 %v578
        %656 = vmatpush.bf16.msra.mxu0 %v577
        %657 = vmatpush.bf16.msra.mxu0 %v576
        %658 = vmatpush.bf16.msra.mxu0 %v575
        %659 = vmatpush.bf16.msra.mxu0 %v574
        %660 = vmatpush.bf16.msra.mxu0 %v573
        %661 = vmatpush.bf16.msra.mxu0 %v572
        %662 = vmatpush.bf16.msra.mxu0 %v571
        %663 = vmatmul.bf16.gmra.mxu0 %v436
        %v664 = vpop.f32.mrf.mxu0
        %v665 = vadd.f32 %v636, %v664
        %v666 = vpop.f32.mrf.mxu0
        %v667 = vadd.f32 %v638, %v666
        %668 = vmatmul.bf16.gmra.mxu0 %v440
        %v669 = vpop.f32.mrf.mxu0
        %v670 = vadd.f32 %v641, %v669
        %v671 = vpop.f32.mrf.mxu0
        %v672 = vadd.f32 %v643, %v671
        %673 = vmatmul.bf16.gmra.mxu0 %v444
        %v674 = vpop.f32.mrf.mxu0
        %v675 = vadd.f32 %v646, %v674
        %v676 = vpop.f32.mrf.mxu0
        %v677 = vadd.f32 %v648, %v676
        %678 = vmatmul.bf16.gmra.mxu0 %v448
        %v679 = vpop.f32.mrf.mxu0
        %v680 = vadd.f32 %v651, %v679
        %v681 = vpop.f32.mrf.mxu0
        %v682 = vadd.f32 %v653, %v681
        %683 = vdwg.mxu0
        %684 = vmatpush.bf16.msra.mxu0 %v586
        %685 = vmatpush.bf16.msra.mxu0 %v585
        %686 = vmatpush.bf16.msra.mxu0 %v584
        %687 = vmatpush.bf16.msra.mxu0 %v583
        %688 = vmatpush.bf16.msra.mxu0 %v582
        %689 = vmatpush.bf16.msra.mxu0 %v581
        %690 = vmatpush.bf16.msra.mxu0 %v580
        %691 = vmatpush.bf16.msra.mxu0 %v579
        %692 = vmatmul.bf16.gmra.mxu0 %v437
        %v693 = vpop.f32.mrf.mxu0
        %v694 = vadd.f32 %v665, %v693
        %v695 = vpop.f32.mrf.mxu0
        %v696 = vadd.f32 %v667, %v695
        %697 = vmatmul.bf16.gmra.mxu0 %v441
        %v698 = vpop.f32.mrf.mxu0
        %v699 = vadd.f32 %v670, %v698
        %v700 = vpop.f32.mrf.mxu0
        %v701 = vadd.f32 %v672, %v700
        %702 = vmatmul.bf16.gmra.mxu0 %v445
        %v703 = vpop.f32.mrf.mxu0
        %v704 = vadd.f32 %v675, %v703
        %v705 = vpop.f32.mrf.mxu0
        %v706 = vadd.f32 %v677, %v705
        %707 = vmatmul.bf16.gmra.mxu0 %v449
        %v708 = vpop.f32.mrf.mxu0
        %v709 = vadd.f32 %v680, %v708
        %v710 = vpop.f32.mrf.mxu0
        %v711 = vadd.f32 %v682, %v710
        %712 = vdwg.mxu0
        %713 = vmatpush.bf16.msra.mxu0 0
        %714 = vmatpush.bf16.msra.mxu0 0
        %715 = vmatpush.bf16.msra.mxu0 0
        %716 = vmatpush.bf16.msra.mxu0 0
        %717 = vmatpush.bf16.msra.mxu0 0
        %718 = vmatpush.bf16.msra.mxu0 0
        %719 = vmatpush.bf16.msra.mxu0 0
        %720 = vmatpush.bf16.msra.mxu0 %v587
        %721 = vmatmul.bf16.gmra.mxu0 %v615
        %v722 = vpop.f32.mrf.mxu0
        %v723 = vadd.f32 %v694, %v722
        %v724 = vpop.f32.mrf.mxu0
        %v725 = vadd.f32 %v696, %v724
        %726 = vmatmul.bf16.gmra.mxu0 %v618
        %v727 = vpop.f32.mrf.mxu0
        %v728 = vadd.f32 %v699, %v727
        %v729 = vpop.f32.mrf.mxu0
        %v730 = vadd.f32 %v701, %v729
        %731 = vmatmul.bf16.gmra.mxu0 %v621
        %v732 = vpop.f32.mrf.mxu0
        %v733 = vadd.f32 %v704, %v732
        %v734 = vpop.f32.mrf.mxu0
        %v735 = vadd.f32 %v706, %v734
        %736 = vmatmul.bf16.gmra.mxu0 %v624
        %v737 = vpop.f32.mrf.mxu0
        %v738 = vadd.f32 %v709, %v737
        %v739 = vpop.f32.mrf.mxu0
        %v740 = vadd.f32 %v711, %v739
        %741 = vdwg.mxu0
        %s742 = scalar_lea.vmem %s292, 128 [#allocation2]
        %v743 = vld [vmem:[%s742] sm:$0xff]
        %v744 = vld [vmem:[%s742 + $0x8] sm:$0xff]
        %v745 = vld [vmem:[%s742 + $0x10] sm:$0xff]
        %v746 = vld [vmem:[%s742 + $0x18] sm:$0xff]
        %v747 = vld [vmem:[%s742 + $0x20] sm:$0xff]
        %v748 = vld [vmem:[%s742 + $0x28] sm:$0xff]
        %v749 = vld [vmem:[%s742 + $0x30] sm:$0xff]
        %v750 = vld [vmem:[%s742 + $0x38] sm:$0xff]
        %v751 = vld [vmem:[%s742 + $0x40] sm:$0xff]
        %v752 = vld [vmem:[%s742 + $0x48] sm:$0xff]
        %v753 = vld [vmem:[%s742 + $0x50] sm:$0xff]
        %v754 = vld [vmem:[%s742 + $0x58] sm:$0xff]
        %v755 = vld [vmem:[%s742 + $0x60] sm:$0xff]
        %v756 = vld [vmem:[%s742 + $0x68] sm:$0xff]
        %v757 = vld [vmem:[%s742 + $0x70] sm:$0xff]
        %v758 = vld [vmem:[%s742 + $0x78] sm:$0xff]
        %v775 = vunpack.c.l.b16 %v743
        %v776 = vunpack.c.h.b16 %v743
        %v777 = vunpack.c.l.b16 %v744
        %v778 = vunpack.c.h.b16 %v744
        %v779 = vunpack.c.l.b16 %v745
        %v780 = vunpack.c.h.b16 %v745
        %v781 = vunpack.c.l.b16 %v746
        %v782 = vunpack.c.h.b16 %v746
        %v783 = vunpack.c.l.b16 %v747
        %v784 = vunpack.c.h.b16 %v747
        %v785 = vunpack.c.l.b16 %v748
        %v786 = vunpack.c.h.b16 %v748
        %v787 = vunpack.c.l.b16 %v749
        %v788 = vunpack.c.h.b16 %v749
        %v789 = vunpack.c.l.b16 %v750
        %v790 = vunpack.c.h.b16 %v750
        %v791 = vunpack.c.l.b16 %v751
        %v792 = vunpack.c.h.b16 %v751
        %v793 = vunpack.c.l.b16 %v752
        %v794 = vunpack.c.h.b16 %v752
        %v795 = vunpack.c.l.b16 %v753
        %v796 = vunpack.c.h.b16 %v753
        %v797 = vunpack.c.l.b16 %v754
        %v798 = vunpack.c.h.b16 %v754
        %v799 = vunpack.c.l.b16 %v755
        %v800 = vunpack.c.h.b16 %v755
        %v801 = vunpack.c.l.b16 %v756
        %v802 = vunpack.c.h.b16 %v756
        %v803 = vunpack.c.l.b16 %v757
        %v804 = vunpack.c.h.b16 %v757
        %v805 = vunpack.c.l.b16 %v758
        %v806 = vunpack.c.h.b16 %v758
        %v807 = vpack.c.b16 %v779, %v775
        %v808 = vpack.c.b16 %v780, %v776
        %v809 = vpack.c.b16 %v781, %v777
        %v810 = vpack.c.b16 %v782, %v778
        %v811 = vpack.c.b16 %v787, %v783
        %v812 = vpack.c.b16 %v788, %v784
        %v813 = vpack.c.b16 %v789, %v785
        %v814 = vpack.c.b16 %v790, %v786
        %v815 = vpack.c.b16 %v795, %v791
        %v816 = vpack.c.b16 %v796, %v792
        %v817 = vpack.c.b16 %v797, %v793
        %v818 = vpack.c.b16 %v798, %v794
        %v819 = vpack.c.b16 %v803, %v799
        %v820 = vpack.c.b16 %v804, %v800
        %v821 = vpack.c.b16 %v805, %v801
        %v822 = vpack.c.b16 %v806, %v802
        %v836 = vsel %vm613, %v810, 0
        %v839 = vsel %vm613, %v814, 0
        %v842 = vsel %vm613, %v818, 0
        %v845 = vsel %vm613, %v822, 0
        %847 = vmatpush.bf16.msra.mxu0 %v570
        %848 = vmatpush.bf16.msra.mxu0 %v569
        %849 = vmatpush.bf16.msra.mxu0 %v568
        %850 = vmatpush.bf16.msra.mxu0 %v567
        %851 = vmatpush.bf16.msra.mxu0 %v566
        %852 = vmatpush.bf16.msra.mxu0 %v565
        %853 = vmatpush.bf16.msra.mxu0 %v564
        %854 = vmatpush.bf16.msra.mxu0 %v563
        %855 = vmatmul.bf16.gmra.mxu0 %v807
        %v856 = vpop.f32.mrf.mxu0
        %v857 = vadd.f32 0.0, %v856
        %v858 = vpop.f32.mrf.mxu0
        %v859 = vadd.f32 0.0, %v858
        %860 = vmatmul.bf16.gmra.mxu0 %v811
        %v861 = vpop.f32.mrf.mxu0
        %v862 = vadd.f32 0.0, %v861
        %v863 = vpop.f32.mrf.mxu0
        %v864 = vadd.f32 0.0, %v863
        %865 = vmatmul.bf16.gmra.mxu0 %v815
        %v866 = vpop.f32.mrf.mxu0
        %v867 = vadd.f32 0.0, %v866
        %v868 = vpop.f32.mrf.mxu0
        %v869 = vadd.f32 0.0, %v868
        %870 = vmatmul.bf16.gmra.mxu0 %v819
        %v871 = vpop.f32.mrf.mxu0
        %v872 = vadd.f32 0.0, %v871
        %v873 = vpop.f32.mrf.mxu0
        %v874 = vadd.f32 0.0, %v873
        %875 = vdwg.mxu0
        %876 = vmatpush.bf16.msra.mxu0 %v578
        %877 = vmatpush.bf16.msra.mxu0 %v577
        %878 = vmatpush.bf16.msra.mxu0 %v576
        %879 = vmatpush.bf16.msra.mxu0 %v575
        %880 = vmatpush.bf16.msra.mxu0 %v574
        %881 = vmatpush.bf16.msra.mxu0 %v573
        %882 = vmatpush.bf16.msra.mxu0 %v572
        %883 = vmatpush.bf16.msra.mxu0 %v571
        %884 = vmatmul.bf16.gmra.mxu0 %v808
        %v885 = vpop.f32.mrf.mxu0
        %v886 = vadd.f32 %v857, %v885
        %v887 = vpop.f32.mrf.mxu0
        %v888 = vadd.f32 %v859, %v887
        %889 = vmatmul.bf16.gmra.mxu0 %v812
        %v890 = vpop.f32.mrf.mxu0
        %v891 = vadd.f32 %v862, %v890
        %v892 = vpop.f32.mrf.mxu0
        %v893 = vadd.f32 %v864, %v892
        %894 = vmatmul.bf16.gmra.mxu0 %v816
        %v895 = vpop.f32.mrf.mxu0
        %v896 = vadd.f32 %v867, %v895
        %v897 = vpop.f32.mrf.mxu0
        %v898 = vadd.f32 %v869, %v897
        %899 = vmatmul.bf16.gmra.mxu0 %v820
        %v900 = vpop.f32.mrf.mxu0
        %v901 = vadd.f32 %v872, %v900
        %v902 = vpop.f32.mrf.mxu0
        %v903 = vadd.f32 %v874, %v902
        %904 = vdwg.mxu0
        %905 = vmatpush.bf16.msra.mxu0 %v586
        %906 = vmatpush.bf16.msra.mxu0 %v585
        %907 = vmatpush.bf16.msra.mxu0 %v584
        %908 = vmatpush.bf16.msra.mxu0 %v583
        %909 = vmatpush.bf16.msra.mxu0 %v582
        %910 = vmatpush.bf16.msra.mxu0 %v581
        %911 = vmatpush.bf16.msra.mxu0 %v580
        %912 = vmatpush.bf16.msra.mxu0 %v579
        %913 = vmatmul.bf16.gmra.mxu0 %v809
        %v914 = vpop.f32.mrf.mxu0
        %v915 = vadd.f32 %v886, %v914
        %v916 = vpop.f32.mrf.mxu0
        %v917 = vadd.f32 %v888, %v916
        %918 = vmatmul.bf16.gmra.mxu0 %v813
        %v919 = vpop.f32.mrf.mxu0
        %v920 = vadd.f32 %v891, %v919
        %v921 = vpop.f32.mrf.mxu0
        %v922 = vadd.f32 %v893, %v921
        %923 = vmatmul.bf16.gmra.mxu0 %v817
        %v924 = vpop.f32.mrf.mxu0
        %v925 = vadd.f32 %v896, %v924
        %v926 = vpop.f32.mrf.mxu0
        %v927 = vadd.f32 %v898, %v926
        %928 = vmatmul.bf16.gmra.mxu0 %v821
        %v929 = vpop.f32.mrf.mxu0
        %v930 = vadd.f32 %v901, %v929
        %v931 = vpop.f32.mrf.mxu0
        %v932 = vadd.f32 %v903, %v931
        %933 = vdwg.mxu0
        %934 = vmatpush.bf16.msra.mxu0 0
        %935 = vmatpush.bf16.msra.mxu0 0
        %936 = vmatpush.bf16.msra.mxu0 0
        %937 = vmatpush.bf16.msra.mxu0 0
        %938 = vmatpush.bf16.msra.mxu0 0
        %939 = vmatpush.bf16.msra.mxu0 0
        %940 = vmatpush.bf16.msra.mxu0 0
        %941 = vmatpush.bf16.msra.mxu0 %v587
        %942 = vmatmul.bf16.gmra.mxu0 %v836
        %v943 = vpop.f32.mrf.mxu0
        %v944 = vadd.f32 %v915, %v943
        %v945 = vpop.f32.mrf.mxu0
        %v946 = vadd.f32 %v917, %v945
        %947 = vmatmul.bf16.gmra.mxu0 %v839
        %v948 = vpop.f32.mrf.mxu0
        %v949 = vadd.f32 %v920, %v948
        %v950 = vpop.f32.mrf.mxu0
        %v951 = vadd.f32 %v922, %v950
        %952 = vmatmul.bf16.gmra.mxu0 %v842
        %v953 = vpop.f32.mrf.mxu0
        %v954 = vadd.f32 %v925, %v953
        %v955 = vpop.f32.mrf.mxu0
        %v956 = vadd.f32 %v927, %v955
        %957 = vmatmul.bf16.gmra.mxu0 %v845
        %v958 = vpop.f32.mrf.mxu0
        %v959 = vadd.f32 %v930, %v958
        %v960 = vpop.f32.mrf.mxu0
        %v961 = vadd.f32 %v932, %v960
        %962 = vdwg.mxu0
        %v963 = vmax.f32 %v723, %v944
        %v964 = vmax.f32 %v725, %v946
        %v965 = vmax.f32 %v728, %v949
        %v966 = vmax.f32 %v730, %v951
        %v967 = vmax.f32 %v733, %v954
        %v968 = vmax.f32 %v735, %v956
        %v969 = vmax.f32 %v738, %v959
        %v970 = vmax.f32 %v740, %v961
        %s971 = scalar_lea.vmem %s292, 256 [#allocation2]
        %v972 = vld [vmem:[%s971] sm:$0xff]
        %v973 = vld [vmem:[%s971 + $0x8] sm:$0xff]
        %v974 = vld [vmem:[%s971 + $0x10] sm:$0xff]
        %v975 = vld [vmem:[%s971 + $0x18] sm:$0xff]
        %v976 = vld [vmem:[%s971 + $0x20] sm:$0xff]
        %v977 = vld [vmem:[%s971 + $0x28] sm:$0xff]
        %v978 = vld [vmem:[%s971 + $0x30] sm:$0xff]
        %v979 = vld [vmem:[%s971 + $0x38] sm:$0xff]
        %v980 = vld [vmem:[%s971 + $0x40] sm:$0xff]
        %v981 = vld [vmem:[%s971 + $0x48] sm:$0xff]
        %v982 = vld [vmem:[%s971 + $0x50] sm:$0xff]
        %v983 = vld [vmem:[%s971 + $0x58] sm:$0xff]
        %v984 = vld [vmem:[%s971 + $0x60] sm:$0xff]
        %v985 = vld [vmem:[%s971 + $0x68] sm:$0xff]
        %v986 = vld [vmem:[%s971 + $0x70] sm:$0xff]
        %v987 = vld [vmem:[%s971 + $0x78] sm:$0xff]
        %v1004 = vunpack.c.l.b16 %v972
        %v1005 = vunpack.c.h.b16 %v972
        %v1006 = vunpack.c.l.b16 %v973
        %v1007 = vunpack.c.h.b16 %v973
        %v1008 = vunpack.c.l.b16 %v974
        %v1009 = vunpack.c.h.b16 %v974
        %v1010 = vunpack.c.l.b16 %v975
        %v1011 = vunpack.c.h.b16 %v975
        %v1012 = vunpack.c.l.b16 %v976
        %v1013 = vunpack.c.h.b16 %v976
        %v1014 = vunpack.c.l.b16 %v977
        %v1015 = vunpack.c.h.b16 %v977
        %v1016 = vunpack.c.l.b16 %v978
        %v1017 = vunpack.c.h.b16 %v978
        %v1018 = vunpack.c.l.b16 %v979
        %v1019 = vunpack.c.h.b16 %v979
        %v1020 = vunpack.c.l.b16 %v980
        %v1021 = vunpack.c.h.b16 %v980
        %v1022 = vunpack.c.l.b16 %v981
        %v1023 = vunpack.c.h.b16 %v981
        %v1024 = vunpack.c.l.b16 %v982
        %v1025 = vunpack.c.h.b16 %v982
        %v1026 = vunpack.c.l.b16 %v983
        %v1027 = vunpack.c.h.b16 %v983
        %v1028 = vunpack.c.l.b16 %v984
        %v1029 = vunpack.c.h.b16 %v984
        %v1030 = vunpack.c.l.b16 %v985
        %v1031 = vunpack.c.h.b16 %v985
        %v1032 = vunpack.c.l.b16 %v986
        %v1033 = vunpack.c.h.b16 %v986
        %v1034 = vunpack.c.l.b16 %v987
        %v1035 = vunpack.c.h.b16 %v987
        %v1036 = vpack.c.b16 %v1008, %v1004
        %v1037 = vpack.c.b16 %v1009, %v1005
        %v1038 = vpack.c.b16 %v1010, %v1006
        %v1039 = vpack.c.b16 %v1011, %v1007
        %v1040 = vpack.c.b16 %v1016, %v1012
        %v1041 = vpack.c.b16 %v1017, %v1013
        %v1042 = vpack.c.b16 %v1018, %v1014
        %v1043 = vpack.c.b16 %v1019, %v1015
        %v1044 = vpack.c.b16 %v1024, %v1020
        %v1045 = vpack.c.b16 %v1025, %v1021
        %v1046 = vpack.c.b16 %v1026, %v1022
        %v1047 = vpack.c.b16 %v1027, %v1023
        %v1048 = vpack.c.b16 %v1032, %v1028
        %v1049 = vpack.c.b16 %v1033, %v1029
        %v1050 = vpack.c.b16 %v1034, %v1030
        %v1051 = vpack.c.b16 %v1035, %v1031
        %v1065 = vsel %vm613, %v1039, 0
        %v1068 = vsel %vm613, %v1043, 0
        %v1071 = vsel %vm613, %v1047, 0
        %v1074 = vsel %vm613, %v1051, 0
        %1076 = vmatpush.bf16.msra.mxu0 %v570
        %1077 = vmatpush.bf16.msra.mxu0 %v569
        %1078 = vmatpush.bf16.msra.mxu0 %v568
        %1079 = vmatpush.bf16.msra.mxu0 %v567
        %1080 = vmatpush.bf16.msra.mxu0 %v566
        %1081 = vmatpush.bf16.msra.mxu0 %v565
        %1082 = vmatpush.bf16.msra.mxu0 %v564
        %1083 = vmatpush.bf16.msra.mxu0 %v563
        %1084 = vmatmul.bf16.gmra.mxu0 %v1036
        %v1085 = vpop.f32.mrf.mxu0
        %v1086 = vadd.f32 0.0, %v1085
        %v1087 = vpop.f32.mrf.mxu0
        %v1088 = vadd.f32 0.0, %v1087
        %1089 = vmatmul.bf16.gmra.mxu0 %v1040
        %v1090 = vpop.f32.mrf.mxu0
        %v1091 = vadd.f32 0.0, %v1090
        %v1092 = vpop.f32.mrf.mxu0
        %v1093 = vadd.f32 0.0, %v1092
        %1094 = vmatmul.bf16.gmra.mxu0 %v1044
        %v1095 = vpop.f32.mrf.mxu0
        %v1096 = vadd.f32 0.0, %v1095
        %v1097 = vpop.f32.mrf.mxu0
        %v1098 = vadd.f32 0.0, %v1097
        %1099 = vmatmul.bf16.gmra.mxu0 %v1048
        %v1100 = vpop.f32.mrf.mxu0
        %v1101 = vadd.f32 0.0, %v1100
        %v1102 = vpop.f32.mrf.mxu0
        %v1103 = vadd.f32 0.0, %v1102
        %1104 = vdwg.mxu0
        %1105 = vmatpush.bf16.msra.mxu0 %v578
        %1106 = vmatpush.bf16.msra.mxu0 %v577
        %1107 = vmatpush.bf16.msra.mxu0 %v576
        %1108 = vmatpush.bf16.msra.mxu0 %v575
        %1109 = vmatpush.bf16.msra.mxu0 %v574
        %1110 = vmatpush.bf16.msra.mxu0 %v573
        %1111 = vmatpush.bf16.msra.mxu0 %v572
        %1112 = vmatpush.bf16.msra.mxu0 %v571
        %1113 = vmatmul.bf16.gmra.mxu0 %v1037
        %v1114 = vpop.f32.mrf.mxu0
        %v1115 = vadd.f32 %v1086, %v1114
        %v1116 = vpop.f32.mrf.mxu0
        %v1117 = vadd.f32 %v1088, %v1116
        %1118 = vmatmul.bf16.gmra.mxu0 %v1041
        %v1119 = vpop.f32.mrf.mxu0
        %v1120 = vadd.f32 %v1091, %v1119
        %v1121 = vpop.f32.mrf.mxu0
        %v1122 = vadd.f32 %v1093, %v1121
        %1123 = vmatmul.bf16.gmra.mxu0 %v1045
        %v1124 = vpop.f32.mrf.mxu0
        %v1125 = vadd.f32 %v1096, %v1124
        %v1126 = vpop.f32.mrf.mxu0
        %v1127 = vadd.f32 %v1098, %v1126
        %1128 = vmatmul.bf16.gmra.mxu0 %v1049
        %v1129 = vpop.f32.mrf.mxu0
        %v1130 = vadd.f32 %v1101, %v1129
        %v1131 = vpop.f32.mrf.mxu0
        %v1132 = vadd.f32 %v1103, %v1131
        %1133 = vdwg.mxu0
        %1134 = vmatpush.bf16.msra.mxu0 %v586
        %1135 = vmatpush.bf16.msra.mxu0 %v585
        %1136 = vmatpush.bf16.msra.mxu0 %v584
        %1137 = vmatpush.bf16.msra.mxu0 %v583
        %1138 = vmatpush.bf16.msra.mxu0 %v582
        %1139 = vmatpush.bf16.msra.mxu0 %v581
        %1140 = vmatpush.bf16.msra.mxu0 %v580
        %1141 = vmatpush.bf16.msra.mxu0 %v579
        %1142 = vmatmul.bf16.gmra.mxu0 %v1038
        %v1143 = vpop.f32.mrf.mxu0
        %v1144 = vadd.f32 %v1115, %v1143
        %v1145 = vpop.f32.mrf.mxu0
        %v1146 = vadd.f32 %v1117, %v1145
        %1147 = vmatmul.bf16.gmra.mxu0 %v1042
        %v1148 = vpop.f32.mrf.mxu0
        %v1149 = vadd.f32 %v1120, %v1148
        %v1150 = vpop.f32.mrf.mxu0
        %v1151 = vadd.f32 %v1122, %v1150
        %1152 = vmatmul.bf16.gmra.mxu0 %v1046
        %v1153 = vpop.f32.mrf.mxu0
        %v1154 = vadd.f32 %v1125, %v1153
        %v1155 = vpop.f32.mrf.mxu0
        %v1156 = vadd.f32 %v1127, %v1155
        %1157 = vmatmul.bf16.gmra.mxu0 %v1050
        %v1158 = vpop.f32.mrf.mxu0
        %v1159 = vadd.f32 %v1130, %v1158
        %v1160 = vpop.f32.mrf.mxu0
        %v1161 = vadd.f32 %v1132, %v1160
        %1162 = vdwg.mxu0
        %1163 = vmatpush.bf16.msra.mxu0 0
        %1164 = vmatpush.bf16.msra.mxu0 0
        %1165 = vmatpush.bf16.msra.mxu0 0
        %1166 = vmatpush.bf16.msra.mxu0 0
        %1167 = vmatpush.bf16.msra.mxu0 0
        %1168 = vmatpush.bf16.msra.mxu0 0
        %1169 = vmatpush.bf16.msra.mxu0 0
        %1170 = vmatpush.bf16.msra.mxu0 %v587
        %1171 = vmatmul.bf16.gmra.mxu0 %v1065
        %v1172 = vpop.f32.mrf.mxu0
        %v1173 = vadd.f32 %v1144, %v1172
        %v1174 = vpop.f32.mrf.mxu0
        %v1175 = vadd.f32 %v1146, %v1174
        %1176 = vmatmul.bf16.gmra.mxu0 %v1068
        %v1177 = vpop.f32.mrf.mxu0
        %v1178 = vadd.f32 %v1149, %v1177
        %v1179 = vpop.f32.mrf.mxu0
        %v1180 = vadd.f32 %v1151, %v1179
        %1181 = vmatmul.bf16.gmra.mxu0 %v1071
        %v1182 = vpop.f32.mrf.mxu0
        %v1183 = vadd.f32 %v1154, %v1182
        %v1184 = vpop.f32.mrf.mxu0
        %v1185 = vadd.f32 %v1156, %v1184
        %1186 = vmatmul.bf16.gmra.mxu0 %v1074
        %v1187 = vpop.f32.mrf.mxu0
        %v1188 = vadd.f32 %v1159, %v1187
        %v1189 = vpop.f32.mrf.mxu0
        %v1190 = vadd.f32 %v1161, %v1189
        %1191 = vdwg.mxu0
        %s1192 = scalar_lea.vmem %s292, 384 [#allocation2]
        %v1193 = vld [vmem:[%s1192] sm:$0xff]
        %v1194 = vld [vmem:[%s1192 + $0x8] sm:$0xff]
        %v1195 = vld [vmem:[%s1192 + $0x10] sm:$0xff]
        %v1196 = vld [vmem:[%s1192 + $0x18] sm:$0xff]
        %v1197 = vld [vmem:[%s1192 + $0x20] sm:$0xff]
        %v1198 = vld [vmem:[%s1192 + $0x28] sm:$0xff]
        %v1199 = vld [vmem:[%s1192 + $0x30] sm:$0xff]
        %v1200 = vld [vmem:[%s1192 + $0x38] sm:$0xff]
        %v1201 = vld [vmem:[%s1192 + $0x40] sm:$0xff]
        %v1202 = vld [vmem:[%s1192 + $0x48] sm:$0xff]
        %v1203 = vld [vmem:[%s1192 + $0x50] sm:$0xff]
        %v1204 = vld [vmem:[%s1192 + $0x58] sm:$0xff]
        %v1205 = vld [vmem:[%s1192 + $0x60] sm:$0xff]
        %v1206 = vld [vmem:[%s1192 + $0x68] sm:$0xff]
        %v1207 = vld [vmem:[%s1192 + $0x70] sm:$0xff]
        %v1208 = vld [vmem:[%s1192 + $0x78] sm:$0xff]
        %v1225 = vunpack.c.l.b16 %v1193
        %v1226 = vunpack.c.h.b16 %v1193
        %v1227 = vunpack.c.l.b16 %v1194
        %v1228 = vunpack.c.h.b16 %v1194
        %v1229 = vunpack.c.l.b16 %v1195
        %v1230 = vunpack.c.h.b16 %v1195
        %v1231 = vunpack.c.l.b16 %v1196
        %v1232 = vunpack.c.h.b16 %v1196
        %v1233 = vunpack.c.l.b16 %v1197
        %v1234 = vunpack.c.h.b16 %v1197
        %v1235 = vunpack.c.l.b16 %v1198
        %v1236 = vunpack.c.h.b16 %v1198
        %v1237 = vunpack.c.l.b16 %v1199
        %v1238 = vunpack.c.h.b16 %v1199
        %v1239 = vunpack.c.l.b16 %v1200
        %v1240 = vunpack.c.h.b16 %v1200
        %v1241 = vunpack.c.l.b16 %v1201
        %v1242 = vunpack.c.h.b16 %v1201
        %v1243 = vunpack.c.l.b16 %v1202
        %v1244 = vunpack.c.h.b16 %v1202
        %v1245 = vunpack.c.l.b16 %v1203
        %v1246 = vunpack.c.h.b16 %v1203
        %v1247 = vunpack.c.l.b16 %v1204
        %v1248 = vunpack.c.h.b16 %v1204
        %v1249 = vunpack.c.l.b16 %v1205
        %v1250 = vunpack.c.h.b16 %v1205
        %v1251 = vunpack.c.l.b16 %v1206
        %v1252 = vunpack.c.h.b16 %v1206
        %v1253 = vunpack.c.l.b16 %v1207
        %v1254 = vunpack.c.h.b16 %v1207
        %v1255 = vunpack.c.l.b16 %v1208
        %v1256 = vunpack.c.h.b16 %v1208
        %v1257 = vpack.c.b16 %v1229, %v1225
        %v1258 = vpack.c.b16 %v1230, %v1226
        %v1259 = vpack.c.b16 %v1231, %v1227
        %v1260 = vpack.c.b16 %v1232, %v1228
        %v1261 = vpack.c.b16 %v1237, %v1233
        %v1262 = vpack.c.b16 %v1238, %v1234
        %v1263 = vpack.c.b16 %v1239, %v1235
        %v1264 = vpack.c.b16 %v1240, %v1236
        %v1265 = vpack.c.b16 %v1245, %v1241
        %v1266 = vpack.c.b16 %v1246, %v1242
        %v1267 = vpack.c.b16 %v1247, %v1243
        %v1268 = vpack.c.b16 %v1248, %v1244
        %v1269 = vpack.c.b16 %v1253, %v1249
        %v1270 = vpack.c.b16 %v1254, %v1250
        %v1271 = vpack.c.b16 %v1255, %v1251
        %v1272 = vpack.c.b16 %v1256, %v1252
        %v1286 = vsel %vm613, %v1260, 0
        %v1289 = vsel %vm613, %v1264, 0
        %v1292 = vsel %vm613, %v1268, 0
        %v1295 = vsel %vm613, %v1272, 0
        %1297 = vmatpush.bf16.msra.mxu0 %v570
        %1298 = vmatpush.bf16.msra.mxu0 %v569
        %1299 = vmatpush.bf16.msra.mxu0 %v568
        %1300 = vmatpush.bf16.msra.mxu0 %v567
        %1301 = vmatpush.bf16.msra.mxu0 %v566
        %1302 = vmatpush.bf16.msra.mxu0 %v565
        %1303 = vmatpush.bf16.msra.mxu0 %v564
        %1304 = vmatpush.bf16.msra.mxu0 %v563
        %1305 = vmatmul.bf16.gmra.mxu0 %v1257
        %v1306 = vpop.f32.mrf.mxu0
        %v1307 = vadd.f32 0.0, %v1306
        %v1308 = vpop.f32.mrf.mxu0
        %v1309 = vadd.f32 0.0, %v1308
        %1310 = vmatmul.bf16.gmra.mxu0 %v1261
        %v1311 = vpop.f32.mrf.mxu0
        %v1312 = vadd.f32 0.0, %v1311
        %v1313 = vpop.f32.mrf.mxu0
        %v1314 = vadd.f32 0.0, %v1313
        %1315 = vmatmul.bf16.gmra.mxu0 %v1265
        %v1316 = vpop.f32.mrf.mxu0
        %v1317 = vadd.f32 0.0, %v1316
        %v1318 = vpop.f32.mrf.mxu0
        %v1319 = vadd.f32 0.0, %v1318
        %1320 = vmatmul.bf16.gmra.mxu0 %v1269
        %v1321 = vpop.f32.mrf.mxu0
        %v1322 = vadd.f32 0.0, %v1321
        %v1323 = vpop.f32.mrf.mxu0
        %v1324 = vadd.f32 0.0, %v1323
        %1325 = vdwg.mxu0
        %1326 = vmatpush.bf16.msra.mxu0 %v578
        %1327 = vmatpush.bf16.msra.mxu0 %v577
        %1328 = vmatpush.bf16.msra.mxu0 %v576
        %1329 = vmatpush.bf16.msra.mxu0 %v575
        %1330 = vmatpush.bf16.msra.mxu0 %v574
        %1331 = vmatpush.bf16.msra.mxu0 %v573
        %1332 = vmatpush.bf16.msra.mxu0 %v572
        %1333 = vmatpush.bf16.msra.mxu0 %v571
        %1334 = vmatmul.bf16.gmra.mxu0 %v1258
        %v1335 = vpop.f32.mrf.mxu0
        %v1336 = vadd.f32 %v1307, %v1335
        %v1337 = vpop.f32.mrf.mxu0
        %v1338 = vadd.f32 %v1309, %v1337
        %1339 = vmatmul.bf16.gmra.mxu0 %v1262
        %v1340 = vpop.f32.mrf.mxu0
        %v1341 = vadd.f32 %v1312, %v1340
        %v1342 = vpop.f32.mrf.mxu0
        %v1343 = vadd.f32 %v1314, %v1342
        %1344 = vmatmul.bf16.gmra.mxu0 %v1266
        %v1345 = vpop.f32.mrf.mxu0
        %v1346 = vadd.f32 %v1317, %v1345
        %v1347 = vpop.f32.mrf.mxu0
        %v1348 = vadd.f32 %v1319, %v1347
        %1349 = vmatmul.bf16.gmra.mxu0 %v1270
        %v1350 = vpop.f32.mrf.mxu0
        %v1351 = vadd.f32 %v1322, %v1350
        %v1352 = vpop.f32.mrf.mxu0
        %v1353 = vadd.f32 %v1324, %v1352
        %1354 = vdwg.mxu0
        %1355 = vmatpush.bf16.msra.mxu0 %v586
        %1356 = vmatpush.bf16.msra.mxu0 %v585
        %1357 = vmatpush.bf16.msra.mxu0 %v584
        %1358 = vmatpush.bf16.msra.mxu0 %v583
        %1359 = vmatpush.bf16.msra.mxu0 %v582
        %1360 = vmatpush.bf16.msra.mxu0 %v581
        %1361 = vmatpush.bf16.msra.mxu0 %v580
        %1362 = vmatpush.bf16.msra.mxu0 %v579
        %1363 = vmatmul.bf16.gmra.mxu0 %v1259
        %v1364 = vpop.f32.mrf.mxu0
        %v1365 = vadd.f32 %v1336, %v1364
        %v1366 = vpop.f32.mrf.mxu0
        %v1367 = vadd.f32 %v1338, %v1366
        %1368 = vmatmul.bf16.gmra.mxu0 %v1263
        %v1369 = vpop.f32.mrf.mxu0
        %v1370 = vadd.f32 %v1341, %v1369
        %v1371 = vpop.f32.mrf.mxu0
        %v1372 = vadd.f32 %v1343, %v1371
        %1373 = vmatmul.bf16.gmra.mxu0 %v1267
        %v1374 = vpop.f32.mrf.mxu0
        %v1375 = vadd.f32 %v1346, %v1374
        %v1376 = vpop.f32.mrf.mxu0
        %v1377 = vadd.f32 %v1348, %v1376
        %1378 = vmatmul.bf16.gmra.mxu0 %v1271
        %v1379 = vpop.f32.mrf.mxu0
        %v1380 = vadd.f32 %v1351, %v1379
        %v1381 = vpop.f32.mrf.mxu0
        %v1382 = vadd.f32 %v1353, %v1381
        %1383 = vdwg.mxu0
        %1384 = vmatpush.bf16.msra.mxu0 0
        %1385 = vmatpush.bf16.msra.mxu0 0
        %1386 = vmatpush.bf16.msra.mxu0 0
        %1387 = vmatpush.bf16.msra.mxu0 0
        %1388 = vmatpush.bf16.msra.mxu0 0
        %1389 = vmatpush.bf16.msra.mxu0 0
        %1390 = vmatpush.bf16.msra.mxu0 0
        %1391 = vmatpush.bf16.msra.mxu0 %v587
        %1392 = vmatmul.bf16.gmra.mxu0 %v1286
        %v1393 = vpop.f32.mrf.mxu0
        %v1394 = vadd.f32 %v1365, %v1393
        %v1395 = vpop.f32.mrf.mxu0
        %v1396 = vadd.f32 %v1367, %v1395
        %1397 = vmatmul.bf16.gmra.mxu0 %v1289
        %v1398 = vpop.f32.mrf.mxu0
        %v1399 = vadd.f32 %v1370, %v1398
        %v1400 = vpop.f32.mrf.mxu0
        %v1401 = vadd.f32 %v1372, %v1400
        %1402 = vmatmul.bf16.gmra.mxu0 %v1292
        %v1403 = vpop.f32.mrf.mxu0
        %v1404 = vadd.f32 %v1375, %v1403
        %v1405 = vpop.f32.mrf.mxu0
        %v1406 = vadd.f32 %v1377, %v1405
        %1407 = vmatmul.bf16.gmra.mxu0 %v1295
        %v1408 = vpop.f32.mrf.mxu0
        %v1409 = vadd.f32 %v1380, %v1408
        %v1410 = vpop.f32.mrf.mxu0
        %v1411 = vadd.f32 %v1382, %v1410
        %1412 = vdwg.mxu0
        %v1413 = vmax.f32 %v1173, %v1394
        %v1414 = vmax.f32 %v1175, %v1396
        %v1415 = vmax.f32 %v1178, %v1399
        %v1416 = vmax.f32 %v1180, %v1401
        %v1417 = vmax.f32 %v1183, %v1404
        %v1418 = vmax.f32 %v1185, %v1406
        %v1419 = vmax.f32 %v1188, %v1409
        %v1420 = vmax.f32 %v1190, %v1411
        %v1421 = vmax.f32 %v963, %v1413
        %v1422 = vmax.f32 %v964, %v1414
        %v1423 = vmax.f32 %v965, %v1415
        %v1424 = vmax.f32 %v966, %v1416
        %v1425 = vmax.f32 %v967, %v1417
        %v1426 = vmax.f32 %v968, %v1418
        %v1427 = vmax.f32 %v969, %v1419
        %v1428 = vmax.f32 %v970, %v1420
        %v1429 = vld [vmem:[%s2] sm:$0x1]
        %v1431 = vperm.slane %v1429, 0
        %v1433 = vadd.f32 %v1421, %v1431
        %v1434 = vadd.f32 %v1422, %v1431
        %v1435 = vadd.f32 %v1423, %v1431
        %v1436 = vadd.f32 %v1424, %v1431
        %v1437 = vadd.f32 %v1425, %v1431
        %v1438 = vadd.f32 %v1426, %v1431
        %v1439 = vadd.f32 %v1427, %v1431
        %v1440 = vadd.f32 %v1428, %v1431
        %v1441 = vmax.f32 %v1433, 0.0
        %v1442 = vmax.f32 %v1434, 0.0
        %v1443 = vmax.f32 %v1435, 0.0
        %v1444 = vmax.f32 %v1436, 0.0
        %v1445 = vmax.f32 %v1437, 0.0
        %v1446 = vmax.f32 %v1438, 0.0
        %v1447 = vmax.f32 %v1439, 0.0
        %v1448 = vmax.f32 %v1440, 0.0
        %v1449 = vpack.c.bf16 %v1441, %v1441
        %v1450 = vpack.c.bf16 %v1442, %v1442
        %v1451 = vpack.c.bf16 %v1443, %v1443
        %v1452 = vpack.c.bf16 %v1444, %v1444
        %v1453 = vpack.c.bf16 %v1445, %v1445
        %v1454 = vpack.c.bf16 %v1446, %v1446
        %v1455 = vpack.c.bf16 %v1447, %v1447
        %v1456 = vpack.c.bf16 %v1448, %v1448
        %1457 = vst [vmem:[%s318] sm:$0xf] %v1449
        %1458 = vst [vmem:[%s318 + $0x4] sm:$0xf] %v1450
        %1459 = vst [vmem:[%s318 + $0x8] sm:$0xf] %v1451
        %1460 = vst [vmem:[%s318 + $0xc] sm:$0xf] %v1452
        %1461 = vst [vmem:[%s318 + $0x10] sm:$0xf] %v1453
        %1462 = vst [vmem:[%s318 + $0x14] sm:$0xf] %v1454
        %1463 = vst [vmem:[%s318 + $0x18] sm:$0xf] %v1455
        %1464 = vst [vmem:[%s318 + $0x1c] sm:$0xf] %v1456
        %s1465 = smul.u32 8, %s14
        %p1466 = scmp.lt.s32.totalorder %s1465, 15
        %s1467 = scalar_select %p1466, %s1465, 15
        %s1468 = smul.addr %s1467, 4
        %s1469 = scalar_lea.vmem %s3, %s1468
        // Predicated region
        $region56: #{forward.4} parent=50 // pred_check
          %p1470 = pneg %p100
        $region57: #{forward.4} parent=50 // pred_check_branch
          %1472 = sbr.rel (%p1470) target = $region59
        $region58: #{forward.4} parent=50 // pred_region
          %s1473 = smul.u32 8, %s14
        $region59: #{forward.4} parent=50 // pred_fallthru
          _
      $region51: #{forward.4} parent=5 // pred_fallthru
        _
      %p1474 = scmp.le.s32.totalorder 2, %s9
      // Predicated region
      $region60: #{forward.4} parent=5 // pred_check
        %p1475 = pneg %p1474
      $region61: #{forward.4} parent=5 // pred_check_branch
        %1477 = sbr.rel (%p1475) target = $region63
      $region62: #{forward.4} parent=5 // pred_region
        %s1478 = ssub.s32 %s9, 2
        // Predicated region
        $region64: #{forward.4} parent=62 // pred_check
          %p1479 = pneg %p106
        $region65: #{forward.4} parent=62 // pred_check_branch
          %1481 = sbr.rel (%p1479) target = $region67
        $region66: #{forward.4} parent=62 // pred_region
          %s1482 = smul.u32 8, %s15
          %p1483 = scmp.lt.s32.totalorder %s1482, 15
          %s1484 = scalar_select %p1483, %s1482, 15
          %s1485 = smul.addr %s1484, 4
          %s1486 = scalar_lea.vmem %s3, %s1485
        $region67: #{forward.4} parent=62 // pred_fallthru
          _
      $region63: #{forward.4} parent=5 // pred_fallthru
        _
    $region6: #{forward.4} parent=1 // loop_footer
      %s13 = sadd.s32 1, %s9
    $region7: #{forward.4} parent=1 // loop_footer_branch
      %8 = sbr.rel target = $region3
    $region8: #{forward.4} parent=1 // loop_exit
      _

// kernel: forward.5
$region0: #{forward.5}
  #allocation0 [shape = 'u32[]', space=smem, size = 0x4, offset = 0x4, fixed_abs, tag = 'smem constant byte address 0x4 - core index']
  #allocation1 [shape = 'u32[72,128]{1,0:T(1,128)}', space=vmem, size = 0x9000, scoped, tag = 'internal scratch']
  %s0 = inlined_call_operand.vmem [shape: bf16[2,1568], index: 0, kind: input, shape index: {}]
  %s1 = inlined_call_operand.vmem [shape: bf16[1568,128], index: 1, kind: input, shape index: {}]
  %s2 = inlined_call_operand.vmem [shape: f32[1,128], index: 2, kind: input, shape index: {}]
  %s3 = inlined_call_operand.hbm [shape: f32[2,128], index: 3, kind: output, shape index: {}]
  %s4 = sld [smem:[#allocation0]]
  $region22: #{forward.5} parent=0
    _
  %s6 = ssub.s32 1, %s4
  %s7 = scalar_select 0, %s6, %s4
  $region1: #{forward.5} parent=0
    #allocation2 [shape = 'u8[1024]{0}', space=vmem, size = 0x400, scoped, tag = 'output window, operand 0, single buffered']
    #allocation3 [shape = 's32[1]{0}', space=sflag, size = 0x4, scoped, tag = 'scoped memory for forward.5']
    %8 = vsyncpa [#allocation3], 0
    // Predicated region
    $region2: #{forward.5} parent=1 // pred_check
      _
    $region3: #{forward.5} parent=1 // pred_check_branch
      %10 = sbr.rel (0) target = $region5
    $region4: #{forward.5} parent=1 // pred_region
      _
    $region5: #{forward.5} parent=1 // pred_fallthru
      _
    // Predicated region
    $region6: #{forward.5} parent=1 // pred_check
      _
    $region7: #{forward.5} parent=1 // pred_check_branch
      %12 = sbr.rel (0) target = $region9
    $region8: #{forward.5} parent=1 // pred_region
      _
    $region9: #{forward.5} parent=1 // pred_fallthru
      _
    // Predicated region
    $region10: #{forward.5} parent=1 // pred_check
      _
    $region11: #{forward.5} parent=1 // pred_check_branch
      %14 = sbr.rel (0) target = $region13
    $region12: #{forward.5} parent=1 // pred_region
      _
    $region13: #{forward.5} parent=1 // pred_fallthru
      _
    %v16 = vld [vmem:[%s0] sm:$0xff]
    %v17 = vld [vmem:[%s0 + $0x8] sm:$0x1f]
    %v18 = vld [vmem:[%s1] sm:$0xf]
    %v19 = vld [vmem:[%s1 + $0x4] sm:$0xf]
    %v20 = vld [vmem:[%s1 + $0x8] sm:$0xf]
    %v21 = vld [vmem:[%s1 + $0xc] sm:$0xf]
    %v22 = vld [vmem:[%s1 + $0x10] sm:$0xf]
    %v23 = vld [vmem:[%s1 + $0x14] sm:$0xf]
    %v24 = vld [vmem:[%s1 + $0x18] sm:$0xf]
    %v25 = vld [vmem:[%s1 + $0x1c] sm:$0xf]
    %v26 = vld [vmem:[%s1 + $0x20] sm:$0xf]
    %v27 = vld [vmem:[%s1 + $0x24] sm:$0xf]
    %v28 = vld [vmem:[%s1 + $0x28] sm:$0xf]
    %v29 = vld [vmem:[%s1 + $0x2c] sm:$0xf]
    %v30 = vld [vmem:[%s1 + $0x30] sm:$0xf]
    %v31 = vld [vmem:[%s1 + $0x34] sm:$0xf]
    %v32 = vld [vmem:[%s1 + $0x38] sm:$0xf]
    %v33 = vld [vmem:[%s1 + $0x3c] sm:$0xf]
    %v34 = vld [vmem:[%s1 + $0x40] sm:$0xf]
    %v35 = vld [vmem:[%s1 + $0x44] sm:$0xf]
    %v36 = vld [vmem:[%s1 + $0x48] sm:$0xf]
    %v37 = vld [vmem:[%s1 + $0x4c] sm:$0xf]
    %v38 = vld [vmem:[%s1 + $0x50] sm:$0xf]
    %v39 = vld [vmem:[%s1 + $0x54] sm:$0xf]
    %v40 = vld [vmem:[%s1 + $0x58] sm:$0xf]
    %v41 = vld [vmem:[%s1 + $0x5c] sm:$0xf]
    %v42 = vld [vmem:[%s1 + $0x60] sm:$0xf]
    %v43 = vld [vmem:[%s1 + $0x64] sm:$0xf]
    %v44 = vld [vmem:[%s1 + $0x68] sm:$0xf]
    %v45 = vld [vmem:[%s1 + $0x6c] sm:$0xf]
    %v46 = vld [vmem:[%s1 + $0x70] sm:$0xf]
    %v47 = vld [vmem:[%s1 + $0x74] sm:$0xf]
    %v48 = vld [vmem:[%s1 + $0x78] sm:$0xf]
    %v49 = vld [vmem:[%s1 + $0x7c] sm:$0xf]
    %v50 = vld [vmem:[%s1 + $0x80] sm:$0xf]
    %v51 = vld [vmem:[%s1 + $0x84] sm:$0xf]
    %v52 = vld [vmem:[%s1 + $0x88] sm:$0xf]
    %v53 = vld [vmem:[%s1 + $0x8c] sm:$0xf]
    %v54 = vld [vmem:[%s1 + $0x90] sm:$0xf]
    %v55 = vld [vmem:[%s1 + $0x94] sm:$0xf]
    %v56 = vld [vmem:[%s1 + $0x98] sm:$0xf]
    %v57 = vld [vmem:[%s1 + $0x9c] sm:$0xf]
    %v58 = vld [vmem:[%s1 + $0xa0] sm:$0xf]
    %v59 = vld [vmem:[%s1 + $0xa4] sm:$0xf]
    %v60 = vld [vmem:[%s1 + $0xa8] sm:$0xf]
    %v61 = vld [vmem:[%s1 + $0xac] sm:$0xf]
    %v62 = vld [vmem:[%s1 + $0xb0] sm:$0xf]
    %v63 = vld [vmem:[%s1 + $0xb4] sm:$0xf]
    %v64 = vld [vmem:[%s1 + $0xb8] sm:$0xf]
    %v65 = vld [vmem:[%s1 + $0xbc] sm:$0xf]
    %v66 = vld [vmem:[%s1 + $0xc0] sm:$0xf]
    %v67 = vld [vmem:[%s1 + $0xc4] sm:$0xf]
    %v68 = vld [vmem:[%s1 + $0xc8] sm:$0xf]
    %v69 = vld [vmem:[%s1 + $0xcc] sm:$0xf]
    %v70 = vld [vmem:[%s1 + $0xd0] sm:$0xf]
    %v71 = vld [vmem:[%s1 + $0xd4] sm:$0xf]
    %v72 = vld [vmem:[%s1 + $0xd8] sm:$0xf]
    %v73 = vld [vmem:[%s1 + $0xdc] sm:$0xf]
    %v74 = vld [vmem:[%s1 + $0xe0] sm:$0xf]
    %v75 = vld [vmem:[%s1 + $0xe4] sm:$0xf]
    %v76 = vld [vmem:[%s1 + $0xe8] sm:$0xf]
    %v77 = vld [vmem:[%s1 + $0xec] sm:$0xf]
    %v78 = vld [vmem:[%s1 + $0xf0] sm:$0xf]
    %v79 = vld [vmem:[%s1 + $0xf4] sm:$0xf]
    %v80 = vld [vmem:[%s1 + $0xf8] sm:$0xf]
    %v81 = vld [vmem:[%s1 + $0xfc] sm:$0xf]
    %v82 = vld [vmem:[%s1 + $0x100] sm:$0xf]
    %v83 = vld [vmem:[%s1 + $0x104] sm:$0xf]
    %v84 = vld [vmem:[%s1 + $0x108] sm:$0xf]
    %v85 = vld [vmem:[%s1 + $0x10c] sm:$0xf]
    %v86 = vld [vmem:[%s1 + $0x110] sm:$0xf]
    %v87 = vld [vmem:[%s1 + $0x114] sm:$0xf]
    %v88 = vld [vmem:[%s1 + $0x118] sm:$0xf]
    %v89 = vld [vmem:[%s1 + $0x11c] sm:$0xf]
    %v90 = vld [vmem:[%s1 + $0x120] sm:$0xf]
    %v91 = vld [vmem:[%s1 + $0x124] sm:$0xf]
    %v92 = vld [vmem:[%s1 + $0x128] sm:$0xf]
    %v93 = vld [vmem:[%s1 + $0x12c] sm:$0xf]
    %v94 = vld [vmem:[%s1 + $0x130] sm:$0xf]
    %v95 = vld [vmem:[%s1 + $0x134] sm:$0xf]
    %v96 = vld [vmem:[%s1 + $0x138] sm:$0xf]
    %v97 = vld [vmem:[%s1 + $0x13c] sm:$0xf]
    %v98 = vld [vmem:[%s1 + $0x140] sm:$0xf]
    %v99 = vld [vmem:[%s1 + $0x144] sm:$0xf]
    %v100 = vld [vmem:[%s1 + $0x148] sm:$0xf]
    %v101 = vld [vmem:[%s1 + $0x14c] sm:$0xf]
    %v102 = vld [vmem:[%s1 + $0x150] sm:$0xf]
    %v103 = vld [vmem:[%s1 + $0x154] sm:$0xf]
    %v104 = vld [vmem:[%s1 + $0x158] sm:$0xf]
    %v105 = vld [vmem:[%s1 + $0x15c] sm:$0xf]
    %v106 = vld [vmem:[%s1 + $0x160] sm:$0xf]
    %v107 = vld [vmem:[%s1 + $0x164] sm:$0xf]
    %v108 = vld [vmem:[%s1 + $0x168] sm:$0xf]
    %v109 = vld [vmem:[%s1 + $0x16c] sm:$0xf]
    %v110 = vld [vmem:[%s1 + $0x170] sm:$0xf]
    %v111 = vld [vmem:[%s1 + $0x174] sm:$0xf]
    %v112 = vld [vmem:[%s1 + $0x178] sm:$0xf]
    %v113 = vld [vmem:[%s1 + $0x17c] sm:$0xf]
    %v114 = vld [vmem:[%s1 + $0x180] sm:$0xf]
    %v115 = vld [vmem:[%s1 + $0x184] sm:$0xf]
    %v116 = vld [vmem:[%s1 + $0x188] sm:$0xf]
    %v117 = vld [vmem:[%s1 + $0x18c] sm:$0xf]
    %v118 = vld [vmem:[%s1 + $0x190] sm:$0xf]
    %v119 = vld [vmem:[%s1 + $0x194] sm:$0xf]
    %v120 = vld [vmem:[%s1 + $0x198] sm:$0xf]
    %v121 = vld [vmem:[%s1 + $0x19c] sm:$0xf]
    %v122 = vld [vmem:[%s1 + $0x1a0] sm:$0xf]
    %v123 = vld [vmem:[%s1 + $0x1a4] sm:$0xf]
    %v124 = vld [vmem:[%s1 + $0x1a8] sm:$0xf]
    %v125 = vld [vmem:[%s1 + $0x1ac] sm:$0xf]
    %v126 = vld [vmem:[%s1 + $0x1b0] sm:$0xf]
    %v127 = vld [vmem:[%s1 + $0x1b4] sm:$0xf]
    %v128 = vld [vmem:[%s1 + $0x1b8] sm:$0xf]
    %v129 = vld [vmem:[%s1 + $0x1bc] sm:$0xf]
    %v130 = vld [vmem:[%s1 + $0x1c0] sm:$0xf]
    %v131 = vld [vmem:[%s1 + $0x1c4] sm:$0xf]
    %v132 = vld [vmem:[%s1 + $0x1c8] sm:$0xf]
    %v133 = vld [vmem:[%s1 + $0x1cc] sm:$0xf]
    %v134 = vld [vmem:[%s1 + $0x1d0] sm:$0xf]
    %v135 = vld [vmem:[%s1 + $0x1d4] sm:$0xf]
    %v136 = vld [vmem:[%s1 + $0x1d8] sm:$0xf]
    %v137 = vld [vmem:[%s1 + $0x1dc] sm:$0xf]
    %v138 = vld [vmem:[%s1 + $0x1e0] sm:$0xf]
    %v139 = vld [vmem:[%s1 + $0x1e4] sm:$0xf]
    %v140 = vld [vmem:[%s1 + $0x1e8] sm:$0xf]
    %v141 = vld [vmem:[%s1 + $0x1ec] sm:$0xf]
    %v142 = vld [vmem:[%s1 + $0x1f0] sm:$0xf]
    %v143 = vld [vmem:[%s1 + $0x1f4] sm:$0xf]
    %v144 = vld [vmem:[%s1 + $0x1f8] sm:$0xf]
    %v145 = vld [vmem:[%s1 + $0x1fc] sm:$0xf]
    %v146 = vld [vmem:[%s1 + $0x200] sm:$0xf]
    %v147 = vld [vmem:[%s1 + $0x204] sm:$0xf]
    %v148 = vld [vmem:[%s1 + $0x208] sm:$0xf]
    %v149 = vld [vmem:[%s1 + $0x20c] sm:$0xf]
    %v150 = vld [vmem:[%s1 + $0x210] sm:$0xf]
    %v151 = vld [vmem:[%s1 + $0x214] sm:$0xf]
    %v152 = vld [vmem:[%s1 + $0x218] sm:$0xf]
    %v153 = vld [vmem:[%s1 + $0x21c] sm:$0xf]
    %v154 = vld [vmem:[%s1 + $0x220] sm:$0xf]
    %v155 = vld [vmem:[%s1 + $0x224] sm:$0xf]
    %v156 = vld [vmem:[%s1 + $0x228] sm:$0xf]
    %v157 = vld [vmem:[%s1 + $0x22c] sm:$0xf]
    %v158 = vld [vmem:[%s1 + $0x230] sm:$0xf]
    %v159 = vld [vmem:[%s1 + $0x234] sm:$0xf]
    %v160 = vld [vmem:[%s1 + $0x238] sm:$0xf]
    %v161 = vld [vmem:[%s1 + $0x23c] sm:$0xf]
    %v162 = vld [vmem:[%s1 + $0x240] sm:$0xf]
    %v163 = vld [vmem:[%s1 + $0x244] sm:$0xf]
    %v164 = vld [vmem:[%s1 + $0x248] sm:$0xf]
    %v165 = vld [vmem:[%s1 + $0x24c] sm:$0xf]
    %v166 = vld [vmem:[%s1 + $0x250] sm:$0xf]
    %v167 = vld [vmem:[%s1 + $0x254] sm:$0xf]
    %v168 = vld [vmem:[%s1 + $0x258] sm:$0xf]
    %v169 = vld [vmem:[%s1 + $0x25c] sm:$0xf]
    %v170 = vld [vmem:[%s1 + $0x260] sm:$0xf]
    %v171 = vld [vmem:[%s1 + $0x264] sm:$0xf]
    %v172 = vld [vmem:[%s1 + $0x268] sm:$0xf]
    %v173 = vld [vmem:[%s1 + $0x26c] sm:$0xf]
    %v174 = vld [vmem:[%s1 + $0x270] sm:$0xf]
    %v175 = vld [vmem:[%s1 + $0x274] sm:$0xf]
    %v176 = vld [vmem:[%s1 + $0x278] sm:$0xf]
    %v177 = vld [vmem:[%s1 + $0x27c] sm:$0xf]
    %v178 = vld [vmem:[%s1 + $0x280] sm:$0xf]
    %v179 = vld [vmem:[%s1 + $0x284] sm:$0xf]
    %v180 = vld [vmem:[%s1 + $0x288] sm:$0xf]
    %v181 = vld [vmem:[%s1 + $0x28c] sm:$0xf]
    %v182 = vld [vmem:[%s1 + $0x290] sm:$0xf]
    %v183 = vld [vmem:[%s1 + $0x294] sm:$0xf]
    %v184 = vld [vmem:[%s1 + $0x298] sm:$0xf]
    %v185 = vld [vmem:[%s1 + $0x29c] sm:$0xf]
    %v186 = vld [vmem:[%s1 + $0x2a0] sm:$0xf]
    %v187 = vld [vmem:[%s1 + $0x2a4] sm:$0xf]
    %v188 = vld [vmem:[%s1 + $0x2a8] sm:$0xf]
    %v189 = vld [vmem:[%s1 + $0x2ac] sm:$0xf]
    %v190 = vld [vmem:[%s1 + $0x2b0] sm:$0xf]
    %v191 = vld [vmem:[%s1 + $0x2b4] sm:$0xf]
    %v192 = vld [vmem:[%s1 + $0x2b8] sm:$0xf]
    %v193 = vld [vmem:[%s1 + $0x2bc] sm:$0xf]
    %v194 = vld [vmem:[%s1 + $0x2c0] sm:$0xf]
    %v195 = vld [vmem:[%s1 + $0x2c4] sm:$0xf]
    %v196 = vld [vmem:[%s1 + $0x2c8] sm:$0xf]
    %v197 = vld [vmem:[%s1 + $0x2cc] sm:$0xf]
    %v198 = vld [vmem:[%s1 + $0x2d0] sm:$0xf]
    %v199 = vld [vmem:[%s1 + $0x2d4] sm:$0xf]
    %v200 = vld [vmem:[%s1 + $0x2d8] sm:$0xf]
    %v201 = vld [vmem:[%s1 + $0x2dc] sm:$0xf]
    %v202 = vld [vmem:[%s1 + $0x2e0] sm:$0xf]
    %v203 = vld [vmem:[%s1 + $0x2e4] sm:$0xf]
    %v204 = vld [vmem:[%s1 + $0x2e8] sm:$0xf]
    %v205 = vld [vmem:[%s1 + $0x2ec] sm:$0xf]
    %v206 = vld [vmem:[%s1 + $0x2f0] sm:$0xf]
    %v207 = vld [vmem:[%s1 + $0x2f4] sm:$0xf]
    %v208 = vld [vmem:[%s1 + $0x2f8] sm:$0xf]
    %v209 = vld [vmem:[%s1 + $0x2fc] sm:$0xf]
    %v210 = vld [vmem:[%s1 + $0x300] sm:$0xf]
    %v211 = vld [vmem:[%s1 + $0x304] sm:$0xf]
    %v212 = vld [vmem:[%s1 + $0x308] sm:$0xf]
    %v213 = vld [vmem:[%s1 + $0x30c] sm:$0xf]
    %v214 = vld [vmem:[%s2] sm:$0x1]
    %v216 = vperm.slane %v214, 0
    %219 = vst [vmem:[#allocation1] ss:$9 sm:$0xff] %v16
    %v220 = vld [vmem:[#allocation1] sm:$0xff]
    %v221 = vld [vmem:[#allocation1 + $0x9] sm:$0xff]
    %v222 = vld [vmem:[#allocation1 + $0x12] sm:$0xff]
    %v223 = vld [vmem:[#allocation1 + $0x1b] sm:$0xff]
    %v224 = vld [vmem:[#allocation1 + $0x24] sm:$0xff]
    %v225 = vld [vmem:[#allocation1 + $0x2d] sm:$0xff]
    %v226 = vld [vmem:[#allocation1 + $0x36] sm:$0xff]
    %v227 = vld [vmem:[#allocation1 + $0x3f] sm:$0xff]
    %229 = vst [vmem:[#allocation1] ss:$9 sm:$0xff] %v17
    %v230 = vld [vmem:[#allocation1] sm:$0xff]
    %v231 = vld [vmem:[#allocation1 + $0x9] sm:$0xff]
    %v232 = vld [vmem:[#allocation1 + $0x12] sm:$0xff]
    %v233 = vld [vmem:[#allocation1 + $0x1b] sm:$0xff]
    %v234 = vld [vmem:[#allocation1 + $0x24] sm:$0xff]
    %v443 = vunpack.c.l.b16 %v18
    %v444 = vunpack.c.l.b16 %v19
    %v445 = vunpack.c.l.b16 %v20
    %v446 = vunpack.c.l.b16 %v21
    %v447 = vunpack.c.l.b16 %v22
    %v448 = vunpack.c.l.b16 %v23
    %v449 = vunpack.c.l.b16 %v24
    %v450 = vunpack.c.l.b16 %v25
    %v451 = vunpack.c.l.b16 %v26
    %v452 = vunpack.c.l.b16 %v27
    %v453 = vunpack.c.l.b16 %v28
    %v454 = vunpack.c.l.b16 %v29
    %v455 = vunpack.c.l.b16 %v30
    %v456 = vunpack.c.l.b16 %v31
    %v457 = vunpack.c.l.b16 %v32
    %v458 = vunpack.c.l.b16 %v33
    %v459 = vunpack.c.l.b16 %v34
    %v460 = vunpack.c.l.b16 %v35
    %v461 = vunpack.c.l.b16 %v36
    %v462 = vunpack.c.l.b16 %v37
    %v463 = vunpack.c.l.b16 %v38
    %v464 = vunpack.c.l.b16 %v39
    %v465 = vunpack.c.l.b16 %v40
    %v466 = vunpack.c.l.b16 %v41
    %v467 = vunpack.c.l.b16 %v42
    %v468 = vunpack.c.l.b16 %v43
    %v469 = vunpack.c.l.b16 %v44
    %v470 = vunpack.c.l.b16 %v45
    %v471 = vunpack.c.l.b16 %v46
    %v472 = vunpack.c.l.b16 %v47
    %v473 = vunpack.c.l.b16 %v48
    %v474 = vunpack.c.l.b16 %v49
    %v475 = vunpack.c.l.b16 %v50
    %v476 = vunpack.c.l.b16 %v51
    %v477 = vunpack.c.l.b16 %v52
    %v478 = vunpack.c.l.b16 %v53
    %v479 = vunpack.c.l.b16 %v54
    %v480 = vunpack.c.l.b16 %v55
    %v481 = vunpack.c.l.b16 %v56
    %v482 = vunpack.c.l.b16 %v57
    %v483 = vunpack.c.l.b16 %v58
    %v484 = vunpack.c.l.b16 %v59
    %v485 = vunpack.c.l.b16 %v60
    %v486 = vunpack.c.l.b16 %v61
    %v487 = vunpack.c.l.b16 %v62
    %v488 = vunpack.c.l.b16 %v63
    %v489 = vunpack.c.l.b16 %v64
    %v490 = vunpack.c.l.b16 %v65
    %v491 = vunpack.c.l.b16 %v66
    %v492 = vunpack.c.l.b16 %v67
    %v493 = vunpack.c.l.b16 %v68
    %v494 = vunpack.c.l.b16 %v69
    %v495 = vunpack.c.l.b16 %v70
    %v496 = vunpack.c.l.b16 %v71
    %v497 = vunpack.c.l.b16 %v72
    %v498 = vunpack.c.l.b16 %v73
    %v499 = vunpack.c.l.b16 %v74
    %v500 = vunpack.c.l.b16 %v75
    %v501 = vunpack.c.l.b16 %v76
    %v502 = vunpack.c.l.b16 %v77
    %v503 = vunpack.c.l.b16 %v78
    %v504 = vunpack.c.l.b16 %v79
    %v505 = vunpack.c.l.b16 %v80
    %v506 = vunpack.c.l.b16 %v81
    %v507 = vunpack.c.l.b16 %v82
    %v508 = vunpack.c.l.b16 %v83
    %v509 = vunpack.c.l.b16 %v84
    %v510 = vunpack.c.l.b16 %v85
    %v511 = vunpack.c.l.b16 %v86
    %v512 = vunpack.c.l.b16 %v87
    %v513 = vunpack.c.l.b16 %v88
    %v514 = vunpack.c.l.b16 %v89
    %v515 = vunpack.c.l.b16 %v90
    %v516 = vunpack.c.l.b16 %v91
    %v517 = vunpack.c.l.b16 %v92
    %v518 = vunpack.c.l.b16 %v93
    %v519 = vunpack.c.l.b16 %v94
    %v520 = vunpack.c.l.b16 %v95
    %v521 = vunpack.c.l.b16 %v96
    %v522 = vunpack.c.l.b16 %v97
    %v523 = vunpack.c.l.b16 %v98
    %v524 = vunpack.c.l.b16 %v99
    %v525 = vunpack.c.l.b16 %v100
    %v526 = vunpack.c.l.b16 %v101
    %v527 = vunpack.c.l.b16 %v102
    %v528 = vunpack.c.l.b16 %v103
    %v529 = vunpack.c.l.b16 %v104
    %v530 = vunpack.c.l.b16 %v105
    %v531 = vunpack.c.l.b16 %v106
    %v532 = vunpack.c.l.b16 %v107
    %v533 = vunpack.c.l.b16 %v108
    %v534 = vunpack.c.l.b16 %v109
    %v535 = vunpack.c.l.b16 %v110
    %v536 = vunpack.c.l.b16 %v111
    %v537 = vunpack.c.l.b16 %v112
    %v538 = vunpack.c.l.b16 %v113
    %v539 = vunpack.c.l.b16 %v114
    %v540 = vunpack.c.l.b16 %v115
    %v541 = vunpack.c.l.b16 %v116
    %v542 = vunpack.c.l.b16 %v117
    %v543 = vunpack.c.l.b16 %v118
    %v544 = vunpack.c.l.b16 %v119
    %v545 = vunpack.c.l.b16 %v120
    %v546 = vunpack.c.l.b16 %v121
    %v547 = vunpack.c.l.b16 %v122
    %v548 = vunpack.c.l.b16 %v123
    %v549 = vunpack.c.l.b16 %v124
    %v550 = vunpack.c.l.b16 %v125
    %v551 = vunpack.c.l.b16 %v126
    %v552 = vunpack.c.l.b16 %v127
    %v553 = vunpack.c.l.b16 %v128
    %v554 = vunpack.c.l.b16 %v129
    %v555 = vunpack.c.l.b16 %v130
    %v556 = vunpack.c.l.b16 %v131
    %v557 = vunpack.c.l.b16 %v132
    %v558 = vunpack.c.l.b16 %v133
    %v559 = vunpack.c.l.b16 %v134
    %v560 = vunpack.c.l.b16 %v135
    %v561 = vunpack.c.l.b16 %v136
    %v562 = vunpack.c.l.b16 %v137
    %v563 = vunpack.c.l.b16 %v138
    %v564 = vunpack.c.l.b16 %v139
    %v565 = vunpack.c.l.b16 %v140
    %v566 = vunpack.c.l.b16 %v141
    %v567 = vunpack.c.l.b16 %v142
    %v568 = vunpack.c.l.b16 %v143
    %v569 = vunpack.c.l.b16 %v144
    %v570 = vunpack.c.l.b16 %v145
    %v571 = vunpack.c.l.b16 %v146
    %v572 = vunpack.c.l.b16 %v147
    %v573 = vunpack.c.l.b16 %v148
    %v574 = vunpack.c.l.b16 %v149
    %v575 = vunpack.c.l.b16 %v150
    %v576 = vunpack.c.l.b16 %v151
    %v577 = vunpack.c.l.b16 %v152
    %v578 = vunpack.c.l.b16 %v153
    %v579 = vunpack.c.l.b16 %v154
    %v580 = vunpack.c.l.b16 %v155
    %v581 = vunpack.c.l.b16 %v156
    %v582 = vunpack.c.l.b16 %v157
    %v583 = vunpack.c.l.b16 %v158
    %v584 = vunpack.c.l.b16 %v159
    %v585 = vunpack.c.l.b16 %v160
    %v586 = vunpack.c.l.b16 %v161
    %v587 = vunpack.c.l.b16 %v162
    %v588 = vunpack.c.l.b16 %v163
    %v589 = vunpack.c.l.b16 %v164
    %v590 = vunpack.c.l.b16 %v165
    %v591 = vunpack.c.l.b16 %v166
    %v592 = vunpack.c.l.b16 %v167
    %v593 = vunpack.c.l.b16 %v168
    %v594 = vunpack.c.l.b16 %v169
    %v595 = vunpack.c.l.b16 %v170
    %v596 = vunpack.c.l.b16 %v171
    %v597 = vunpack.c.l.b16 %v172
    %v598 = vunpack.c.l.b16 %v173
    %v599 = vunpack.c.l.b16 %v174
    %v600 = vunpack.c.l.b16 %v175
    %v601 = vunpack.c.l.b16 %v176
    %v602 = vunpack.c.l.b16 %v177
    %v603 = vunpack.c.l.b16 %v178
    %v604 = vunpack.c.l.b16 %v179
    %v605 = vunpack.c.l.b16 %v180
    %v606 = vunpack.c.l.b16 %v181
    %v607 = vunpack.c.l.b16 %v182
    %v608 = vunpack.c.l.b16 %v183
    %v609 = vunpack.c.l.b16 %v184
    %v610 = vunpack.c.l.b16 %v185
    %v611 = vunpack.c.l.b16 %v186
    %v612 = vunpack.c.l.b16 %v187
    %v613 = vunpack.c.l.b16 %v188
    %v614 = vunpack.c.l.b16 %v189
    %v615 = vunpack.c.l.b16 %v190
    %v616 = vunpack.c.l.b16 %v191
    %v617 = vunpack.c.l.b16 %v192
    %v618 = vunpack.c.l.b16 %v193
    %v619 = vunpack.c.l.b16 %v194
    %v620 = vunpack.c.l.b16 %v195
    %v621 = vunpack.c.l.b16 %v196
    %v622 = vunpack.c.l.b16 %v197
    %v623 = vunpack.c.l.b16 %v198
    %v624 = vunpack.c.l.b16 %v199
    %v625 = vunpack.c.l.b16 %v200
    %v626 = vunpack.c.l.b16 %v201
    %v627 = vunpack.c.l.b16 %v202
    %v628 = vunpack.c.l.b16 %v203
    %v629 = vunpack.c.l.b16 %v204
    %v630 = vunpack.c.l.b16 %v205
    %v631 = vunpack.c.l.b16 %v206
    %v632 = vunpack.c.l.b16 %v207
    %v633 = vunpack.c.l.b16 %v208
    %v634 = vunpack.c.l.b16 %v209
    %v635 = vunpack.c.l.b16 %v210
    %v636 = vunpack.c.l.b16 %v211
    %v637 = vunpack.c.l.b16 %v212
    %v638 = vunpack.c.l.b16 %v213
    %v639 = vpack.c.b16 %v444, %v443
    %v640 = vpack.c.b16 %v446, %v445
    %v641 = vpack.c.b16 %v448, %v447
    %v642 = vpack.c.b16 %v450, %v449
    %v643 = vpack.c.b16 %v452, %v451
    %v644 = vpack.c.b16 %v454, %v453
    %v645 = vpack.c.b16 %v456, %v455
    %v646 = vpack.c.b16 %v458, %v457
    %v647 = vpack.c.b16 %v460, %v459
    %v648 = vpack.c.b16 %v462, %v461
    %v649 = vpack.c.b16 %v464, %v463
    %v650 = vpack.c.b16 %v466, %v465
    %v651 = vpack.c.b16 %v468, %v467
    %v652 = vpack.c.b16 %v470, %v469
    %v653 = vpack.c.b16 %v472, %v471
    %v654 = vpack.c.b16 %v474, %v473
    %v655 = vpack.c.b16 %v476, %v475
    %v656 = vpack.c.b16 %v478, %v477
    %v657 = vpack.c.b16 %v480, %v479
    %v658 = vpack.c.b16 %v482, %v481
    %v659 = vpack.c.b16 %v484, %v483
    %v660 = vpack.c.b16 %v486, %v485
    %v661 = vpack.c.b16 %v488, %v487
    %v662 = vpack.c.b16 %v490, %v489
    %v663 = vpack.c.b16 %v492, %v491
    %v664 = vpack.c.b16 %v494, %v493
    %v665 = vpack.c.b16 %v496, %v495
    %v666 = vpack.c.b16 %v498, %v497
    %v667 = vpack.c.b16 %v500, %v499
    %v668 = vpack.c.b16 %v502, %v501
    %v669 = vpack.c.b16 %v504, %v503
    %v670 = vpack.c.b16 %v506, %v505
    %v671 = vpack.c.b16 %v508, %v507
    %v672 = vpack.c.b16 %v510, %v509
    %v673 = vpack.c.b16 %v512, %v511
    %v674 = vpack.c.b16 %v514, %v513
    %v675 = vpack.c.b16 %v516, %v515
    %v676 = vpack.c.b16 %v518, %v517
    %v677 = vpack.c.b16 %v520, %v519
    %v678 = vpack.c.b16 %v522, %v521
    %v679 = vpack.c.b16 %v524, %v523
    %v680 = vpack.c.b16 %v526, %v525
    %v681 = vpack.c.b16 %v528, %v527
    %v682 = vpack.c.b16 %v530, %v529
    %v683 = vpack.c.b16 %v532, %v531
    %v684 = vpack.c.b16 %v534, %v533
    %v685 = vpack.c.b16 %v536, %v535
    %v686 = vpack.c.b16 %v538, %v537
    %v687 = vpack.c.b16 %v540, %v539
    %v688 = vpack.c.b16 %v542, %v541
    %v689 = vpack.c.b16 %v544, %v543
    %v690 = vpack.c.b16 %v546, %v545
    %v691 = vpack.c.b16 %v548, %v547
    %v692 = vpack.c.b16 %v550, %v549
    %v693 = vpack.c.b16 %v552, %v551
    %v694 = vpack.c.b16 %v554, %v553
    %v695 = vpack.c.b16 %v556, %v555
    %v696 = vpack.c.b16 %v558, %v557
    %v697 = vpack.c.b16 %v560, %v559
    %v698 = vpack.c.b16 %v562, %v561
    %v699 = vpack.c.b16 %v564, %v563
    %v700 = vpack.c.b16 %v566, %v565
    %v701 = vpack.c.b16 %v568, %v567
    %v702 = vpack.c.b16 %v570, %v569
    %v703 = vpack.c.b16 %v572, %v571
    %v704 = vpack.c.b16 %v574, %v573
    %v705 = vpack.c.b16 %v576, %v575
    %v706 = vpack.c.b16 %v578, %v577
    %v707 = vpack.c.b16 %v580, %v579
    %v708 = vpack.c.b16 %v582, %v581
    %v709 = vpack.c.b16 %v584, %v583
    %v710 = vpack.c.b16 %v586, %v585
    %v711 = vpack.c.b16 %v588, %v587
    %v712 = vpack.c.b16 %v590, %v589
    %v713 = vpack.c.b16 %v592, %v591
    %v714 = vpack.c.b16 %v594, %v593
    %v715 = vpack.c.b16 %v596, %v595
    %v716 = vpack.c.b16 %v598, %v597
    %v717 = vpack.c.b16 %v600, %v599
    %v718 = vpack.c.b16 %v602, %v601
    %v719 = vpack.c.b16 %v604, %v603
    %v720 = vpack.c.b16 %v606, %v605
    %v721 = vpack.c.b16 %v608, %v607
    %v722 = vpack.c.b16 %v610, %v609
    %v723 = vpack.c.b16 %v612, %v611
    %v724 = vpack.c.b16 %v614, %v613
    %v725 = vpack.c.b16 %v616, %v615
    %v726 = vpack.c.b16 %v618, %v617
    %v727 = vpack.c.b16 %v620, %v619
    %v728 = vpack.c.b16 %v622, %v621
    %v729 = vpack.c.b16 %v624, %v623
    %v730 = vpack.c.b16 %v626, %v625
    %v731 = vpack.c.b16 %v628, %v627
    %v732 = vpack.c.b16 %v630, %v629
    %v733 = vpack.c.b16 %v632, %v631
    %v734 = vpack.c.b16 %v634, %v633
    %v735 = vpack.c.b16 %v636, %v635
    %v736 = vpack.c.b16 %v638, %v637
    %vm835 = vcmask 261120
    %v836 = vsel %vm835, %v234, 0
    %838 = vmatpush.bf16.msra.mxu0 %v646
    %839 = vmatpush.bf16.msra.mxu0 %v645
    %840 = vmatpush.bf16.msra.mxu0 %v644
    %841 = vmatpush.bf16.msra.mxu0 %v643
    %842 = vmatpush.bf16.msra.mxu0 %v642
    %843 = vmatpush.bf16.msra.mxu0 %v641
    %844 = vmatpush.bf16.msra.mxu0 %v640
    %845 = vmatpush.bf16.msra.mxu0 %v639
    %846 = vmatmul.bf16.gmra.mxu0 %v220
    %v847 = vpop.f32.mrf.mxu0
    %v848 = vadd.f32 %v216, %v847
    %v849 = vpop.f32.mrf.mxu0
    %850 = vdwg.mxu0
    %851 = vmatpush.bf16.msra.mxu0 %v654
    %852 = vmatpush.bf16.msra.mxu0 %v653
    %853 = vmatpush.bf16.msra.mxu0 %v652
    %854 = vmatpush.bf16.msra.mxu0 %v651
    %855 = vmatpush.bf16.msra.mxu0 %v650
    %856 = vmatpush.bf16.msra.mxu0 %v649
    %857 = vmatpush.bf16.msra.mxu0 %v648
    %858 = vmatpush.bf16.msra.mxu0 %v647
    %859 = vmatmul.bf16.gmra.mxu0 %v221
    %v860 = vpop.f32.mrf.mxu0
    %v861 = vadd.f32 %v848, %v860
    %v862 = vpop.f32.mrf.mxu0
    %863 = vdwg.mxu0
    %864 = vmatpush.bf16.msra.mxu0 %v662
    %865 = vmatpush.bf16.msra.mxu0 %v661
    %866 = vmatpush.bf16.msra.mxu0 %v660
    %867 = vmatpush.bf16.msra.mxu0 %v659
    %868 = vmatpush.bf16.msra.mxu0 %v658
    %869 = vmatpush.bf16.msra.mxu0 %v657
    %870 = vmatpush.bf16.msra.mxu0 %v656
    %871 = vmatpush.bf16.msra.mxu0 %v655
    %872 = vmatmul.bf16.gmra.mxu0 %v222
    %v873 = vpop.f32.mrf.mxu0
    %v874 = vadd.f32 %v861, %v873
    %v875 = vpop.f32.mrf.mxu0
    %876 = vdwg.mxu0
    %877 = vmatpush.bf16.msra.mxu0 %v670
    %878 = vmatpush.bf16.msra.mxu0 %v669
    %879 = vmatpush.bf16.msra.mxu0 %v668
    %880 = vmatpush.bf16.msra.mxu0 %v667
    %881 = vmatpush.bf16.msra.mxu0 %v666
    %882 = vmatpush.bf16.msra.mxu0 %v665
    %883 = vmatpush.bf16.msra.mxu0 %v664
    %884 = vmatpush.bf16.msra.mxu0 %v663
    %885 = vmatmul.bf16.gmra.mxu0 %v223
    %v886 = vpop.f32.mrf.mxu0
    %v887 = vadd.f32 %v874, %v886
    %v888 = vpop.f32.mrf.mxu0
    %889 = vdwg.mxu0
    %890 = vmatpush.bf16.msra.mxu0 %v678
    %891 = vmatpush.bf16.msra.mxu0 %v677
    %892 = vmatpush.bf16.msra.mxu0 %v676
    %893 = vmatpush.bf16.msra.mxu0 %v675
    %894 = vmatpush.bf16.msra.mxu0 %v674
    %895 = vmatpush.bf16.msra.mxu0 %v673
    %896 = vmatpush.bf16.msra.mxu0 %v672
    %897 = vmatpush.bf16.msra.mxu0 %v671
    %898 = vmatmul.bf16.gmra.mxu0 %v224
    %v899 = vpop.f32.mrf.mxu0
    %v900 = vadd.f32 %v887, %v899
    %v901 = vpop.f32.mrf.mxu0
    %902 = vdwg.mxu0
    %903 = vmatpush.bf16.msra.mxu0 %v686
    %904 = vmatpush.bf16.msra.mxu0 %v685
    %905 = vmatpush.bf16.msra.mxu0 %v684
    %906 = vmatpush.bf16.msra.mxu0 %v683
    %907 = vmatpush.bf16.msra.mxu0 %v682
    %908 = vmatpush.bf16.msra.mxu0 %v681
    %909 = vmatpush.bf16.msra.mxu0 %v680
    %910 = vmatpush.bf16.msra.mxu0 %v679
    %911 = vmatmul.bf16.gmra.mxu0 %v225
    %v912 = vpop.f32.mrf.mxu0
    %v913 = vadd.f32 %v900, %v912
    %v914 = vpop.f32.mrf.mxu0
    %915 = vdwg.mxu0
    %916 = vmatpush.bf16.msra.mxu0 %v694
    %917 = vmatpush.bf16.msra.mxu0 %v693
    %918 = vmatpush.bf16.msra.mxu0 %v692
    %919 = vmatpush.bf16.msra.mxu0 %v691
    %920 = vmatpush.bf16.msra.mxu0 %v690
    %921 = vmatpush.bf16.msra.mxu0 %v689
    %922 = vmatpush.bf16.msra.mxu0 %v688
    %923 = vmatpush.bf16.msra.mxu0 %v687
    %924 = vmatmul.bf16.gmra.mxu0 %v226
    %v925 = vpop.f32.mrf.mxu0
    %v926 = vadd.f32 %v913, %v925
    %v927 = vpop.f32.mrf.mxu0
    %928 = vdwg.mxu0
    %929 = vmatpush.bf16.msra.mxu0 %v702
    %930 = vmatpush.bf16.msra.mxu0 %v701
    %931 = vmatpush.bf16.msra.mxu0 %v700
    %932 = vmatpush.bf16.msra.mxu0 %v699
    %933 = vmatpush.bf16.msra.mxu0 %v698
    %934 = vmatpush.bf16.msra.mxu0 %v697
    %935 = vmatpush.bf16.msra.mxu0 %v696
    %936 = vmatpush.bf16.msra.mxu0 %v695
    %937 = vmatmul.bf16.gmra.mxu0 %v227
    %v938 = vpop.f32.mrf.mxu0
    %v939 = vadd.f32 %v926, %v938
    %v940 = vpop.f32.mrf.mxu0
    %941 = vdwg.mxu0
    %942 = vmatpush.bf16.msra.mxu0 %v710
    %943 = vmatpush.bf16.msra.mxu0 %v709
    %944 = vmatpush.bf16.msra.mxu0 %v708
    %945 = vmatpush.bf16.msra.mxu0 %v707
    %946 = vmatpush.bf16.msra.mxu0 %v706
    %947 = vmatpush.bf16.msra.mxu0 %v705
    %948 = vmatpush.bf16.msra.mxu0 %v704
    %949 = vmatpush.bf16.msra.mxu0 %v703
    %950 = vmatmul.bf16.gmra.mxu0 %v230
    %v951 = vpop.f32.mrf.mxu0
    %v952 = vadd.f32 %v939, %v951
    %v953 = vpop.f32.mrf.mxu0
    %954 = vdwg.mxu0
    %955 = vmatpush.bf16.msra.mxu0 %v718
    %956 = vmatpush.bf16.msra.mxu0 %v717
    %957 = vmatpush.bf16.msra.mxu0 %v716
    %958 = vmatpush.bf16.msra.mxu0 %v715
    %959 = vmatpush.bf16.msra.mxu0 %v714
    %960 = vmatpush.bf16.msra.mxu0 %v713
    %961 = vmatpush.bf16.msra.mxu0 %v712
    %962 = vmatpush.bf16.msra.mxu0 %v711
    %963 = vmatmul.bf16.gmra.mxu0 %v231
    %v964 = vpop.f32.mrf.mxu0
    %v965 = vadd.f32 %v952, %v964
    %v966 = vpop.f32.mrf.mxu0
    %967 = vdwg.mxu0
    %968 = vmatpush.bf16.msra.mxu0 %v726
    %969 = vmatpush.bf16.msra.mxu0 %v725
    %970 = vmatpush.bf16.msra.mxu0 %v724
    %971 = vmatpush.bf16.msra.mxu0 %v723
    %972 = vmatpush.bf16.msra.mxu0 %v722
    %973 = vmatpush.bf16.msra.mxu0 %v721
    %974 = vmatpush.bf16.msra.mxu0 %v720
    %975 = vmatpush.bf16.msra.mxu0 %v719
    %976 = vmatmul.bf16.gmra.mxu0 %v232
    %v977 = vpop.f32.mrf.mxu0
    %v978 = vadd.f32 %v965, %v977
    %v979 = vpop.f32.mrf.mxu0
    %980 = vdwg.mxu0
    %981 = vmatpush.bf16.msra.mxu0 %v734
    %982 = vmatpush.bf16.msra.mxu0 %v733
    %983 = vmatpush.bf16.msra.mxu0 %v732
    %984 = vmatpush.bf16.msra.mxu0 %v731
    %985 = vmatpush.bf16.msra.mxu0 %v730
    %986 = vmatpush.bf16.msra.mxu0 %v729
    %987 = vmatpush.bf16.msra.mxu0 %v728
    %988 = vmatpush.bf16.msra.mxu0 %v727
    %989 = vmatmul.bf16.gmra.mxu0 %v233
    %v990 = vpop.f32.mrf.mxu0
    %v991 = vadd.f32 %v978, %v990
    %v992 = vpop.f32.mrf.mxu0
    %993 = vdwg.mxu0
    %994 = vmatpush.bf16.msra.mxu0 0
    %995 = vmatpush.bf16.msra.mxu0 0
    %996 = vmatpush.bf16.msra.mxu0 0
    %997 = vmatpush.bf16.msra.mxu0 0
    %998 = vmatpush.bf16.msra.mxu0 0
    %999 = vmatpush.bf16.msra.mxu0 0
    %1000 = vmatpush.bf16.msra.mxu0 %v736
    %1001 = vmatpush.bf16.msra.mxu0 %v735
    %1002 = vmatmul.bf16.gmra.mxu0 %v836
    %v1003 = vpop.f32.mrf.mxu0
    %v1004 = vadd.f32 %v991, %v1003
    %v1005 = vpop.f32.mrf.mxu0
    %1006 = vdwg.mxu0
    %1007 = vst [vmem:[#allocation2] sm:$0x3] %v1004
    // Predicated region
    $region14: #{forward.5} parent=1 // pred_check
      _
    $region15: #{forward.5} parent=1 // pred_check_branch
      %1009 = sbr.rel (0) target = $region17
    $region16: #{forward.5} parent=1 // pred_region
      %1011 = vsyncadd [#allocation3], 0
      %s1013 = sshll.u32 [#allocation2], 4
      %s1014 = int_to_ptr.vmem [resolvable:$true] %s1013
      %s1015 = sshll.u32 %s3, 4
      %s1016 = int_to_ptr.hbm [resolvable:$true] %s1015
      %1018 = dma.vmem_to_hbm [thread:$0]  %s1014, 32, %s1016, [#allocation3]
    $region17: #{forward.5} parent=1 // pred_fallthru
      _
    // Predicated region
    $region18: #{forward.5} parent=1 // pred_check
      _
    $region19: #{forward.5} parent=1 // pred_check_branch
      %1020 = sbr.rel (0) target = $region21
    $region20: #{forward.5} parent=1 // pred_region
      %1022 = dma.done [#allocation3], 32
    $region21: #{forward.5} parent=1 // pred_fallthru
      _
    %1023 = vsyncpa [#allocation3], 1

</llo_original>
